<compile_context>
chip_gen: v7x
topology: tpu7x:2x2x1
jax: 0.10.0
libtpu: 0.0.40
codegen_flags: <defaults>
</compile_context>

<pallas_src>
from functools import partial

import jax
import jax.numpy as jnp
from jax import lax
from jax.experimental import pallas as pl
from jax.experimental.pallas import tpu as pltpu

EPS = 1e-5


# ------------------------------ small helpers --------------------------------
def _vmem_limit_bytes():
    """Scoped VMEM budget per generation: big on v5e/v6e (128 MiB physical),
    conservative (<= ~48 MiB) on v7x (64 MiB physical)."""
    try:
        info = pltpu.get_tpu_info()
        cap = int(getattr(info, "vmem_capacity_bytes", 0) or 0)
        if cap > 0:
            return int(min(cap * 3 // 4, 100 * 1024 * 1024))
    except Exception:
        pass
    return 64 * 1024 * 1024


def _compiler_params(grid_ndim):
    return pltpu.CompilerParams(
        dimension_semantics=("parallel",) * grid_ndim,
        vmem_limit_bytes=_vmem_limit_bytes(),
    )


def _full_spec(shape, grid_ndim):
    """Whole-array (non-tiled) block, constant across the grid."""
    zeros = (0,) * len(shape)
    if grid_ndim == 1:
        return pl.BlockSpec(shape, lambda n: zeros)
    return pl.BlockSpec(shape, lambda n, p: zeros)


def _choose_tp(P, cap=2048):
    """Largest spatial tile (divisor of P) within `cap`, preferring lane (128)
    alignment, then sublane (8) alignment; falls back to the whole image."""
    if P <= cap:
        return P
    for align in (512, 256, 128, 8):
        tp = cap - cap % align
        while tp >= align:
            if P % tp == 0:
                return tp
            tp -= align
    return P


def _bn_fold(s, sq, gamma, beta, count):
    """Fold training-mode BN (biased var) into per-channel scale/shift."""
    mean = s / count
    var = jnp.maximum(sq / count - mean * mean, 0.0)   # clamp: f32 cancellation
    scale = gamma * lax.rsqrt(var + EPS)
    shift = beta - mean * scale
    return scale, shift


# ------------------------------ kernel bodies --------------------------------
def _conv1_kernel(x_ref, w1_ref, h1_ref, ssum_ref, ssq_ref, *, mxu_dtype):
    """1x1 conv on one (Cin, TP) NCHW tile + BN1 partial stats.

    dot_general contracts the Cin axis of the NCHW operand directly (no
    explicit (TP, Cin) transpose copy)."""
    xm = x_ref[0].astype(mxu_dtype)                               # (Cin, TP)
    h = lax.dot_general(xm, w1_ref[...], (((0,), (0,)), ((), ())),
                        preferred_element_type=jnp.float32)       # (TP, width)
    h1_ref[0] = h.astype(h1_ref.dtype)
    ssum_ref[0, 0] = jnp.sum(h, axis=0, keepdims=True)            # (1, width)
    ssq_ref[0, 0] = jnp.sum(h * h, axis=0, keepdims=True)


def _tap(a, dy, dx):
    """tap[y, x, :] = a[y+dy, x+dx, :] (zero outside) — 3x3 conv, padding=1."""
    H, W, C = a.shape
    # TODO(synk): replace the slice+concat shifts with pltpu.roll + iota masks
    # so the shifts ride the otherwise-idle XLU slot at production tile sizes.
    if dy > 0:
        a = jnp.concatenate([a[dy:], jnp.zeros((dy, W, C), a.dtype)], axis=0)
    elif dy < 0:
        a = jnp.concatenate([jnp.zeros((-dy, W, C), a.dtype), a[:dy]], axis=0)
    if dx > 0:
        a = jnp.concatenate([a[:, dx:], jnp.zeros((H, dx, C), a.dtype)], axis=1)
    elif dx < 0:
        a = jnp.concatenate([jnp.zeros((H, -dx, C), a.dtype), a[:, :dx]], axis=1)
    return a


def _conv2_kernel(h1_ref, s1_ref, b1_ref, w2_ref, h2_ref, ssum_ref, ssq_ref,
                  *, H, W, mxu_dtype):
    """Folded BN1+ReLU -> 3x3 conv as ONE im2col MXU matmul -> BN2 stats.

    Activation is cast to the MXU dtype right after BN+ReLU so the 9 taps and
    the (H*W, 9C) im2col slab (the largest live VMEM object) are built in bf16."""
    a = h1_ref[0].astype(jnp.float32)                         # (P, width)
    a = jnp.maximum(a * s1_ref[...] + b1_ref[...], 0.0)
    a = a.astype(mxu_dtype)
    C = a.shape[-1]
    a = a.reshape(H, W, C)

    taps = [_tap(a, ky - 1, kx - 1) for ky in range(3) for kx in range(3)]
    col = jnp.concatenate(taps, axis=-1).reshape(H * W, 9 * C)   # bf16 slab
    h = jnp.dot(col, w2_ref[...],
                preferred_element_type=jnp.float32)              # (P, width) f32
    h2_ref[0] = h.astype(h2_ref.dtype)
    ssum_ref[0, 0] = jnp.sum(h, axis=0, keepdims=True)
    ssq_ref[0, 0] = jnp.sum(h * h, axis=0, keepdims=True)


def _conv3_kernel(h2_ref, s2_ref, b2_ref, w3t_ref, h3_ref, ssum_ref, ssq_ref,
                  *, mxu_dtype):
    """Folded BN2+ReLU -> 1x1 conv emitted channel-major -> BN3 partial stats.

    NT dot_general (w3t @ act^T) produces (Cout, TP) directly, so the residual
    pass needs no transpose and the store is lane-dense along P."""
    a = jnp.maximum(h2_ref[0].astype(jnp.float32) * s2_ref[...] + b2_ref[...],
                    0.0)                                          # (TP, width)
    a = a.astype(mxu_dtype)
    h = lax.dot_general(w3t_ref[...], a, (((1,), (1,)), ((), ())),
                        preferred_element_type=jnp.float32)       # (Cout, TP)
    h3_ref[0] = h.astype(h3_ref.dtype)
    ssum_ref[0, 0] = jnp.sum(h, axis=1, keepdims=True)            # (Cout, 1)
    ssq_ref[0, 0] = jnp.sum(h * h, axis=1, keepdims=True)


def _residual_kernel(h3_ref, s3_ref, b3_ref, x_ref, out_ref):
    """Folded BN3 + residual add + ReLU; everything is channel-major (NCHW),
    so this is a pure FMA — no transposes."""
    hn = h3_ref[0].astype(jnp.float32) * s3_ref[...] + b3_ref[...]  # (Cout, TP)
    out_ref[0] = jnp.maximum(hn + x_ref[0], 0.0)


# ------------------------------ host wrapper ---------------------------------
@partial(jax.jit, static_argnames=("mxu_dtype",))
def bottleneck_pallas(x_nchw, params, *, mxu_dtype=jnp.bfloat16):
    """Bottleneck forward (downsample=None). x_nchw: (N, Cin, H, W) float32."""
    (w1, g1, b1, w2, g2, b2, w3, g3, b3) = params
    N, Cin, H, W = x_nchw.shape
    P = H * W
    width = w1.shape[1]
    Cout = w3.shape[1]
    assert Cout == Cin, "downsample=None requires inplanes == planes * expansion"

    TP = _choose_tp(P)
    nP = P // TP
    act_dtype = mxu_dtype                      # HBM dtype of the intermediates
    ab = jnp.dtype(act_dtype).itemsize

    x2 = x_nchw.reshape(N, Cin, P)             # free reshape (NCHW contiguous)
    # Pre-cast / pre-shape weights once (no in-kernel weight casts).
    w1c = w1.astype(mxu_dtype)                               # (Cin, width)
    w2c = w2.reshape(9 * width, width).astype(mxu_dtype)     # im2col weight
    w3t = w3.T.astype(mxu_dtype)                             # (Cout, width)
    count = jnp.float32(N * P)

    # ---- pass 1: conv1 (1x1) + BN1 partial stats, P-tiled -------------------
    ce1 = pl.CostEstimate(
        flops=2 * N * P * Cin * width, transcendentals=0,
        bytes_accessed=N * P * (Cin * 4 + width * ab) + Cin * width * ab)
    h1, s1, q1 = pl.pallas_call(
        partial(_conv1_kernel, mxu_dtype=mxu_dtype),
        grid=(N, nP),
        in_specs=[pl.BlockSpec((1, Cin, TP), lambda n, p: (n, 0, p)),
                  _full_spec((Cin, width), 2)],
        out_specs=[pl.BlockSpec((1, TP, width), lambda n, p: (n, p, 0)),
                   pl.BlockSpec((1, 1, 1, width), lambda n, p: (n, p, 0, 0)),
                   pl.BlockSpec((1, 1, 1, width), lambda n, p: (n, p, 0, 0))],
        out_shape=[jax.ShapeDtypeStruct((N, P, width), act_dtype),
                   jax.ShapeDtypeStruct((N, nP, 1, width), jnp.float32),
                   jax.ShapeDtypeStruct((N, nP, 1, width), jnp.float32)],
        compiler_params=_compiler_params(2),
        cost_estimate=ce1,
    )(x2, w1c)
    scale1, shift1 = _bn_fold(jnp.sum(s1, axis=(0, 1, 2)),
                              jnp.sum(q1, axis=(0, 1, 2)), g1, b1, count)
    scale1 = scale1.reshape(1, -1)
    shift1 = shift1.reshape(1, -1)

    # ---- pass 2: BN1+ReLU -> conv2 (3x3 im2col) + BN2 partial stats ---------
    # TODO(synk): add an H-tile grid axis with a 1-row halo (manual DMA) for
    # very large feature maps on v7x; whole-image per batch is fine here.
    ce2 = pl.CostEstimate(
        flops=2 * N * P * 9 * width * width, transcendentals=0,
        bytes_accessed=N * P * width * 2 * ab + 9 * width * width * ab)
    h2, s2, q2 = pl.pallas_call(
        partial(_conv2_kernel, H=H, W=W, mxu_dtype=mxu_dtype),
        grid=(N,),
        in_specs=[pl.BlockSpec((1, P, width), lambda n: (n, 0, 0)),
                  _full_spec((1, width), 1), _full_spec((1, width), 1),
                  _full_spec((9 * width, width), 1)],
        out_specs=[pl.BlockSpec((1, P, width), lambda n: (n, 0, 0)),
                   pl.BlockSpec((1, 1, 1, width), lambda n: (n, 0, 0, 0)),
                   pl.BlockSpec((1, 1, 1, width), lambda n: (n, 0, 0, 0))],
        out_shape=[jax.ShapeDtypeStruct((N, P, width), act_dtype),
                   jax.ShapeDtypeStruct((N, 1, 1, width), jnp.float32),
                   jax.ShapeDtypeStruct((N, 1, 1, width), jnp.float32)],
        compiler_params=_compiler_params(1),
        cost_estimate=ce2,
    )(h1, scale1, shift1, w2c)
    scale2, shift2 = _bn_fold(jnp.sum(s2, axis=(0, 1, 2)),
                              jnp.sum(q2, axis=(0, 1, 2)), g2, b2, count)
    scale2 = scale2.reshape(1, -1)
    shift2 = shift2.reshape(1, -1)

    # ---- pass 3: BN2+ReLU -> conv3 (1x1, channel-major out) + BN3 stats -----
    ce3 = pl.CostEstimate(
        flops=2 * N * P * width * Cout, transcendentals=0,
        bytes_accessed=N * P * (width + Cout) * ab + width * Cout * ab)
    h3, s3, q3 = pl.pallas_call(
        partial(_conv3_kernel, mxu_dtype=mxu_dtype),
        grid=(N, nP),
        in_specs=[pl.BlockSpec((1, TP, width), lambda n, p: (n, p, 0)),
                  _full_spec((1, width), 2), _full_spec((1, width), 2),
                  _full_spec((Cout, width), 2)],
        out_specs=[pl.BlockSpec((1, Cout, TP), lambda n, p: (n, 0, p)),
                   pl.BlockSpec((1, 1, Cout, 1), lambda n, p: (n, p, 0, 0)),
                   pl.BlockSpec((1, 1, Cout, 1), lambda n, p: (n, p, 0, 0))],
        out_shape=[jax.ShapeDtypeStruct((N, Cout, P), act_dtype),
                   jax.ShapeDtypeStruct((N, nP, Cout, 1), jnp.float32),
                   jax.ShapeDtypeStruct((N, nP, Cout, 1), jnp.float32)],
        compiler_params=_compiler_params(2),
        cost_estimate=ce3,
    )(h2, scale2, shift2, w3t)
    scale3, shift3 = _bn_fold(jnp.sum(s3, axis=(0, 1, 3)),
                              jnp.sum(q3, axis=(0, 1, 3)), g3, b3, count)
    scale3 = scale3.reshape(-1, 1)
    shift3 = shift3.reshape(-1, 1)

    # ---- pass 4: BN3 + residual add + ReLU, NCHW (channel-major) ------------
    ce4 = pl.CostEstimate(
        flops=3 * N * P * Cout, transcendentals=0,
        bytes_accessed=N * P * (Cout * ab + Cin * 4 + Cout * 4))
    out2 = pl.pallas_call(
        _residual_kernel,
        grid=(N, nP),
        in_specs=[pl.BlockSpec((1, Cout, TP), lambda n, p: (n, 0, p)),
                  _full_spec((Cout, 1), 2), _full_spec((Cout, 1), 2),
                  pl.BlockSpec((1, Cin, TP), lambda n, p: (n, 0, p))],
        out_specs=pl.BlockSpec((1, Cout, TP), lambda n, p: (n, 0, p)),
        out_shape=jax.ShapeDtypeStruct((N, Cout, P), jnp.float32),
        compiler_params=_compiler_params(2),
        cost_estimate=ce4,
    )(h3, scale3, shift3, x2)

    return out2.reshape(N, Cout, H, W)


# --------------------------- pure-JAX reference ------------------------------
def bottleneck_ref(x_nchw, params):
    (w1, g1, b1, w2, g2, b2, w3, g3, b3) = params
    x = jnp.transpose(x_nchw, (0, 2, 3, 1))

    def bn(h, g, b):
        mean = jnp.mean(h, axis=(0, 1, 2), keepdims=True)
        var = jnp.mean((h - mean) ** 2, axis=(0, 1, 2), keepdims=True)
        return (h - mean) / jnp.sqrt(var + EPS) * g.reshape(1, 1, 1, -1) \
            + b.reshape(1, 1, 1, -1)

    h = jnp.einsum('nhwc,cd->nhwd', x, w1)
    h = jnp.maximum(bn(h, g1, b1), 0.0)
    h = lax.conv_general_dilated(h, w2, window_strides=(1, 1), padding='SAME',
                                 dimension_numbers=('NHWC', 'HWIO', 'NHWC'))
    h = jnp.maximum(bn(h, g2, b2), 0.0)
    h = jnp.einsum('nhwc,cd->nhwd', h, w3)
    h = bn(h, g3, b3)
    out = jnp.maximum(h + x, 0.0)
    return jnp.transpose(out, (0, 3, 1, 2))


if __name__ == "__main__":
    # Module config: Bottleneck(inplanes=16, planes=4) -> width=4, out=16.
    N, H, W = 2, 8, 8
    inplanes, planes = 16, 4
    width = planes                      # base_width=64, groups=1
    Cout = planes * 4                   # expansion=4 (== inplanes)

    key = jax.random.PRNGKey(0)
    ks = jax.random.split(key, 10)

    # matmul-friendly weights:
    #   conv1x1 (Cout,Cin,1,1) -> (Cin, Cout);  conv3x3 (Cout,Cin,3,3) -> HWIO
    w1 = (0.1 * jax.random.normal(ks[0], (inplanes, width))).astype(jnp.float32)
    w2 = (0.1 * jax.random.normal(ks[1], (3, 3, width, width))).astype(jnp.float32)
    w3 = (0.1 * jax.random.normal(ks[2], (width, Cout))).astype(jnp.float32)

    g1 = (1.0 + 0.1 * jax.random.normal(ks[3], (width,))).astype(jnp.float32)
    b1 = (0.1 * jax.random.normal(ks[4], (width,))).astype(jnp.float32)
    g2 = (1.0 + 0.1 * jax.random.normal(ks[5], (width,))).astype(jnp.float32)
    b2 = (0.1 * jax.random.normal(ks[6], (width,))).astype(jnp.float32)
    g3 = (1.0 + 0.1 * jax.random.normal(ks[7], (Cout,))).astype(jnp.float32)
    b3 = (0.1 * jax.random.normal(ks[8], (Cout,))).astype(jnp.float32)

    params = (w1, g1, b1, w2, g2, b2, w3, g3, b3)
    x = jax.random.normal(ks[9], (N, inplanes, H, W), dtype=jnp.float32)

    ref = jax.block_until_ready(bottleneck_ref(x, params))

    # f32 MXU path — strict correctness gate against the PyTorch-equivalent ref.
    out_f32 = jax.block_until_ready(
        bottleneck_pallas(x, params, mxu_dtype=jnp.float32))
    assert out_f32.shape == (N, Cout, H, W)
    assert jnp.allclose(out_f32, ref, rtol=1e-3, atol=1e-3), \
        f"f32 path max abs err {jnp.max(jnp.abs(out_f32 - ref))}"

    # Default bf16 MXU/HBM-activation path: f32 accumulation & BN statistics.
    out_bf16 = jax.block_until_ready(bottleneck_pallas(x, params))
    assert out_bf16.shape == (N, Cout, H, W)
    assert jnp.allclose(out_bf16, ref, rtol=1e-1, atol=1e-1), \
        f"bf16 path max abs err {jnp.max(jnp.abs(out_bf16 - ref))}"

    print("KERNEL_OK")
</pallas_src>

<mosaic_0001>
module attributes {stable_mosaic.version = 11 : i64} {
  func.func @_conv1_kernel(%arg0: i32, %arg1: i32, %arg2: memref<1x16x64xf32, #tpu.memory_space<vmem>>, %arg3: memref<16x4xf32, #tpu.memory_space<vmem>>, %arg4: memref<1x64x4xf32, #tpu.memory_space<vmem>>, %arg5: memref<1x1x1x4xf32, #tpu.memory_space<vmem>>, %arg6: memref<1x1x1x4xf32, #tpu.memory_space<vmem>>) attributes {dimension_semantics = [#tpu.dimension_semantics<parallel>, #tpu.dimension_semantics<parallel>], iteration_bounds = array<i64: 2, 1>, scalar_prefetch = 0 : i64, scratch_operands = 0 : i64, tpu.core_type = #tpu.core_type<tc>, window_params = [{transform_indices = @transform_0, window_bounds = array<i64: 1, 16, 64>}, {pipeline_mode = #tpu.pipeline_mode<synchronous>, transform_indices = @transform_1, window_bounds = array<i64: 16, 4>}, {transform_indices = @transform_2, window_bounds = array<i64: 1, 64, 4>}, {transform_indices = @transform_3, window_bounds = array<i64: 1, 1, 1, 4>}, {transform_indices = @transform_4, window_bounds = array<i64: 1, 1, 1, 4>}]} {
    %c0 = arith.constant 0 : index
    %c0_0 = arith.constant 0 : index
    %c0_1 = arith.constant 0 : index
    %0 = vector.load %arg2[%c0, %c0_0, %c0_1] : memref<1x16x64xf32, #tpu.memory_space<vmem>>, vector<1x16x64xf32>
    %1 = vector.shape_cast %0 : vector<1x16x64xf32> to vector<16x64xf32>
    %c0_2 = arith.constant 0 : index
    %c0_3 = arith.constant 0 : index
    %2 = vector.load %arg3[%c0_2, %c0_3] : memref<16x4xf32, #tpu.memory_space<vmem>>, vector<16x4xf32>
    %cst = arith.constant dense<0.000000e+00> : vector<64x4xf32>
    %3 = tpu.matmul %1, %2, %cst {dimension_numbers = #tpu.dot_dimension_numbers<[0], [0], [1], [1], [0, 1, 1, 1], [], []>} : vector<16x64xf32>, vector<16x4xf32>, vector<64x4xf32> -> vector<64x4xf32>
    %c0_4 = arith.constant 0 : index
    %c0_5 = arith.constant 0 : index
    %c0_6 = arith.constant 0 : index
    %4 = vector.load %arg4[%c0_4, %c0_5, %c0_6] : memref<1x64x4xf32, #tpu.memory_space<vmem>>, vector<1x64x4xf32>
    %5 = vector.shape_cast %4 : vector<1x64x4xf32> to vector<64x4xf32>
    %6 = vector.shape_cast %3 : vector<64x4xf32> to vector<1x64x4xf32>
    tpu.vector_store %arg4[%c0_4, %c0_5, %c0_6], %6 {strides = array<i32>} : memref<1x64x4xf32, #tpu.memory_space<vmem>>, vector<1x64x4xf32>,
    %cst_7 = arith.constant dense<0.000000e+00> : vector<4xf32>
    %7 = vector.multi_reduction <add>, %3, %cst_7 [0] : vector<64x4xf32> to vector<4xf32>
    %8 = vector.shape_cast %7 : vector<4xf32> to vector<1x4xf32>
    %c0_8 = arith.constant 0 : index
    %c0_9 = arith.constant 0 : index
    %c0_10 = arith.constant 0 : index
    %c0_11 = arith.constant 0 : index
    %9 = vector.load %arg5[%c0_8, %c0_9, %c0_10, %c0_11] : memref<1x1x1x4xf32, #tpu.memory_space<vmem>>, vector<1x1x1x4xf32>
    %10 = vector.shape_cast %9 : vector<1x1x1x4xf32> to vector<1x4xf32>
    %11 = vector.shape_cast %8 : vector<1x4xf32> to vector<1x1x1x4xf32>
    tpu.vector_store %arg5[%c0_8, %c0_9, %c0_10, %c0_11], %11 {strides = array<i32>} : memref<1x1x1x4xf32, #tpu.memory_space<vmem>>, vector<1x1x1x4xf32>,
    %12 = arith.mulf %3, %3 : vector<64x4xf32>
    %cst_12 = arith.constant dense<0.000000e+00> : vector<4xf32>
    %13 = vector.multi_reduction <add>, %12, %cst_12 [0] : vector<64x4xf32> to vector<4xf32>
    %14 = vector.shape_cast %13 : vector<4xf32> to vector<1x4xf32>
    %c0_13 = arith.constant 0 : index
    %c0_14 = arith.constant 0 : index
    %c0_15 = arith.constant 0 : index
    %c0_16 = arith.constant 0 : index
    %15 = vector.load %arg6[%c0_13, %c0_14, %c0_15, %c0_16] : memref<1x1x1x4xf32, #tpu.memory_space<vmem>>, vector<1x1x1x4xf32>
    %16 = vector.shape_cast %15 : vector<1x1x1x4xf32> to vector<1x4xf32>
    %17 = vector.shape_cast %14 : vector<1x4xf32> to vector<1x1x1x4xf32>
    tpu.vector_store %arg6[%c0_13, %c0_14, %c0_15, %c0_16], %17 {strides = array<i32>} : memref<1x1x1x4xf32, #tpu.memory_space<vmem>>, vector<1x1x1x4xf32>,
    return
  }
  func.func @transform_0(%arg0: i32, %arg1: i32) -> (i32, i32, i32) {
    %c0_i32 = arith.constant 0 : i32
    %c0_i32_0 = arith.constant 0 : i32
    return %arg0, %c0_i32, %arg1 : i32, i32, i32
  }
  func.func @transform_1(%arg0: i32, %arg1: i32) -> (i32, i32) {
    %c0_i32 = arith.constant 0 : i32
    %c0_i32_0 = arith.constant 0 : i32
    %c0_i32_1 = arith.constant 0 : i32
    return %c0_i32, %c0_i32_0 : i32, i32
  }
  func.func @transform_2(%arg0: i32, %arg1: i32) -> (i32, i32, i32) {
    %c0_i32 = arith.constant 0 : i32
    %c0_i32_0 = arith.constant 0 : i32
    return %arg0, %arg1, %c0_i32 : i32, i32, i32
  }
  func.func @transform_3(%arg0: i32, %arg1: i32) -> (i32, i32, i32, i32) {
    %c0_i32 = arith.constant 0 : i32
    %c0_i32_0 = arith.constant 0 : i32
    %c0_i32_1 = arith.constant 0 : i32
    return %arg0, %arg1, %c0_i32, %c0_i32_0 : i32, i32, i32, i32
  }
  func.func @transform_4(%arg0: i32, %arg1: i32) -> (i32, i32, i32, i32) {
    %c0_i32 = arith.constant 0 : i32
    %c0_i32_0 = arith.constant 0 : i32
    %c0_i32_1 = arith.constant 0 : i32
    return %arg0, %arg1, %c0_i32, %c0_i32_0 : i32, i32, i32, i32
  }
}

module attributes {stable_mosaic.version = 11 : i64} {
  func.func @_conv2_kernel(%arg0: i32, %arg1: memref<1x64x4xf32, #tpu.memory_space<vmem>>, %arg2: memref<1x4xf32, #tpu.memory_space<vmem>>, %arg3: memref<1x4xf32, #tpu.memory_space<vmem>>, %arg4: memref<36x4xf32, #tpu.memory_space<vmem>>, %arg5: memref<1x64x4xf32, #tpu.memory_space<vmem>>, %arg6: memref<1x1x1x4xf32, #tpu.memory_space<vmem>>, %arg7: memref<1x1x1x4xf32, #tpu.memory_space<vmem>>) attributes {dimension_semantics = [#tpu.dimension_semantics<parallel>], iteration_bounds = array<i64: 2>, scalar_prefetch = 0 : i64, scratch_operands = 0 : i64, tpu.core_type = #tpu.core_type<tc>, window_params = [{transform_indices = @transform_0, window_bounds = array<i64: 1, 64, 4>}, {pipeline_mode = #tpu.pipeline_mode<synchronous>, transform_indices = @transform_1, window_bounds = array<i64: 1, 4>}, {pipeline_mode = #tpu.pipeline_mode<synchronous>, transform_indices = @transform_2, window_bounds = array<i64: 1, 4>}, {pipeline_mode = #tpu.pipeline_mode<synchronous>, transform_indices = @transform_3, window_bounds = array<i64: 36, 4>}, {transform_indices = @transform_4, window_bounds = array<i64: 1, 64, 4>}, {transform_indices = @transform_5, window_bounds = array<i64: 1, 1, 1, 4>}, {transform_indices = @transform_6, window_bounds = array<i64: 1, 1, 1, 4>}]} {
    %c0 = arith.constant 0 : index
    %c0_0 = arith.constant 0 : index
    %c0_1 = arith.constant 0 : index
    %0 = vector.load %arg1[%c0, %c0_0, %c0_1] : memref<1x64x4xf32, #tpu.memory_space<vmem>>, vector<1x64x4xf32>
    %1 = vector.shape_cast %0 : vector<1x64x4xf32> to vector<64x4xf32>
    %c0_2 = arith.constant 0 : index
    %c0_3 = arith.constant 0 : index
    %2 = vector.load %arg2[%c0_2, %c0_3] : memref<1x4xf32, #tpu.memory_space<vmem>>, vector<1x4xf32>
    %3 = vector.broadcast %2 : vector<1x4xf32> to vector<64x4xf32>
    %4 = arith.mulf %1, %3 : vector<64x4xf32>
    %c0_4 = arith.constant 0 : index
    %c0_5 = arith.constant 0 : index
    %5 = vector.load %arg3[%c0_4, %c0_5] : memref<1x4xf32, #tpu.memory_space<vmem>>, vector<1x4xf32>
    %6 = vector.broadcast %5 : vector<1x4xf32> to vector<64x4xf32>
    %7 = arith.addf %4, %6 : vector<64x4xf32>
    %cst = arith.constant 0.000000e+00 : f32
    %8 = vector.broadcast %cst : f32 to vector<64x4xf32>
    %9 = arith.maximumf %7, %8 : vector<64x4xf32>
    %10 = vector.shape_cast %9 : vector<64x4xf32> to vector<8x8x4xf32>
    %cst_6 = arith.constant 0.000000e+00 : f32
    %11 = vector.broadcast %cst_6 : f32 to vector<1x8x4xf32>
    %12 = vector.extract_strided_slice %10 {offsets = [0, 0, 0], sizes = [7, 8, 4], strides = [1, 1, 1]} : vector<8x8x4xf32> to vector<7x8x4xf32>
    %13 = tpu.concatenate %11, %12 in 0 : vector<1x8x4xf32>, vector<7x8x4xf32> -> vector<8x8x4xf32>
    %cst_7 = arith.constant 0.000000e+00 : f32
    %14 = vector.broadcast %cst_7 : f32 to vector<8x1x4xf32>
    %15 = vector.extract_strided_slice %13 {offsets = [0, 0, 0], sizes = [8, 7, 4], strides = [1, 1, 1]} : vector<8x8x4xf32> to vector<8x7x4xf32>
    %16 = tpu.concatenate %14, %15 in 1 : vector<8x1x4xf32>, vector<8x7x4xf32> -> vector<8x8x4xf32>
    %cst_8 = arith.constant 0.000000e+00 : f32
    %17 = vector.broadcast %cst_8 : f32 to vector<1x8x4xf32>
    %18 = vector.extract_strided_slice %10 {offsets = [0, 0, 0], sizes = [7, 8, 4], strides = [1, 1, 1]} : vector<8x8x4xf32> to vector<7x8x4xf32>
    %19 = tpu.concatenate %17, %18 in 0 : vector<1x8x4xf32>, vector<7x8x4xf32> -> vector<8x8x4xf32>
    %cst_9 = arith.constant 0.000000e+00 : f32
    %20 = vector.broadcast %cst_9 : f32 to vector<1x8x4xf32>
    %21 = vector.extract_strided_slice %10 {offsets = [0, 0, 0], sizes = [7, 8, 4], strides = [1, 1, 1]} : vector<8x8x4xf32> to vector<7x8x4xf32>
    %22 = tpu.concatenate %20, %21 in 0 : vector<1x8x4xf32>, vector<7x8x4xf32> -> vector<8x8x4xf32>
    %23 = vector.extract_strided_slice %22 {offsets = [0, 1, 0], sizes = [8, 7, 4], strides = [1, 1, 1]} : vector<8x8x4xf32> to vector<8x7x4xf32>
    %cst_10 = arith.constant 0.000000e+00 : f32
    %24 = vector.broadcast %cst_10 : f32 to vector<8x1x4xf32>
    %25 = tpu.concatenate %23, %24 in 1 : vector<8x7x4xf32>, vector<8x1x4xf32> -> vector<8x8x4xf32>
    %cst_11 = arith.constant 0.000000e+00 : f32
    %26 = vector.broadcast %cst_11 : f32 to vector<8x1x4xf32>
    %27 = vector.extract_strided_slice %10 {offsets = [0, 0, 0], sizes = [8, 7, 4], strides = [1, 1, 1]} : vector<8x8x4xf32> to vector<8x7x4xf32>
    %28 = tpu.concatenate %26, %27 in 1 : vector<8x1x4xf32>, vector<8x7x4xf32> -> vector<8x8x4xf32>
    %29 = vector.extract_strided_slice %10 {offsets = [0, 1, 0], sizes = [8, 7, 4], strides = [1, 1, 1]} : vector<8x8x4xf32> to vector<8x7x4xf32>
    %cst_12 = arith.constant 0.000000e+00 : f32
    %30 = vector.broadcast %cst_12 : f32 to vector<8x1x4xf32>
    %31 = tpu.concatenate %29, %30 in 1 : vector<8x7x4xf32>, vector<8x1x4xf32> -> vector<8x8x4xf32>
    %32 = vector.extract_strided_slice %10 {offsets = [1, 0, 0], sizes = [7, 8, 4], strides = [1, 1, 1]} : vector<8x8x4xf32> to vector<7x8x4xf32>
    %cst_13 = arith.constant 0.000000e+00 : f32
    %33 = vector.broadcast %cst_13 : f32 to vector<1x8x4xf32>
    %34 = tpu.concatenate %32, %33 in 0 : vector<7x8x4xf32>, vector<1x8x4xf32> -> vector<8x8x4xf32>
    %cst_14 = arith.constant 0.000000e+00 : f32
    %35 = vector.broadcast %cst_14 : f32 to vector<8x1x4xf32>
    %36 = vector.extract_strided_slice %34 {offsets = [0, 0, 0], sizes = [8, 7, 4], strides = [1, 1, 1]} : vector<8x8x4xf32> to vector<8x7x4xf32>
    %37 = tpu.concatenate %35, %36 in 1 : vector<8x1x4xf32>, vector<8x7x4xf32> -> vector<8x8x4xf32>
    %38 = vector.extract_strided_slice %10 {offsets = [1, 0, 0], sizes = [7, 8, 4], strides = [1, 1, 1]} : vector<8x8x4xf32> to vector<7x8x4xf32>
    %cst_15 = arith.constant 0.000000e+00 : f32
    %39 = vector.broadcast %cst_15 : f32 to vector<1x8x4xf32>
    %40 = tpu.concatenate %38, %39 in 0 : vector<7x8x4xf32>, vector<1x8x4xf32> -> vector<8x8x4xf32>
    %41 = vector.extract_strided_slice %10 {offsets = [1, 0, 0], sizes = [7, 8, 4], strides = [1, 1, 1]} : vector<8x8x4xf32> to vector<7x8x4xf32>
    %cst_16 = arith.constant 0.000000e+00 : f32
    %42 = vector.broadcast %cst_16 : f32 to vector<1x8x4xf32>
    %43 = tpu.concatenate %41, %42 in 0 : vector<7x8x4xf32>, vector<1x8x4xf32> -> vector<8x8x4xf32>
    %44 = vector.extract_strided_slice %43 {offsets = [0, 1, 0], sizes = [8, 7, 4], strides = [1, 1, 1]} : vector<8x8x4xf32> to vector<8x7x4xf32>
    %cst_17 = arith.constant 0.000000e+00 : f32
    %45 = vector.broadcast %cst_17 : f32 to vector<8x1x4xf32>
    %46 = tpu.concatenate %44, %45 in 1 : vector<8x7x4xf32>, vector<8x1x4xf32> -> vector<8x8x4xf32>
    %47 = tpu.concatenate %16, %19, %25, %28, %10, %31, %37, %40, %46 in 2 : vector<8x8x4xf32>, vector<8x8x4xf32>, vector<8x8x4xf32>, vector<8x8x4xf32>, vector<8x8x4xf32>, vector<8x8x4xf32>, vector<8x8x4xf32>, vector<8x8x4xf32>, vector<8x8x4xf32> -> vector<8x8x36xf32>
    %48 = vector.shape_cast %47 : vector<8x8x36xf32> to vector<64x36xf32>
    %c0_18 = arith.constant 0 : index
    %c0_19 = arith.constant 0 : index
    %49 = vector.load %arg4[%c0_18, %c0_19] : memref<36x4xf32, #tpu.memory_space<vmem>>, vector<36x4xf32>
    %cst_20 = arith.constant dense<0.000000e+00> : vector<64x4xf32>
    %50 = tpu.matmul %48, %49, %cst_20 {dimension_numbers = #tpu.dot_dimension_numbers<[1], [0], [0], [1], [0, 0, 1, 1], [], []>} : vector<64x36xf32>, vector<36x4xf32>, vector<64x4xf32> -> vector<64x4xf32>
    %c0_21 = arith.constant 0 : index
    %c0_22 = arith.constant 0 : index
    %c0_23 = arith.constant 0 : index
    %51 = vector.load %arg5[%c0_21, %c0_22, %c0_23] : memref<1x64x4xf32, #tpu.memory_space<vmem>>, vector<1x64x4xf32>
    %52 = vector.shape_cast %51 : vector<1x64x4xf32> to vector<64x4xf32>
    %53 = vector.shape_cast %50 : vector<64x4xf32> to vector<1x64x4xf32>
    tpu.vector_store %arg5[%c0_21, %c0_22, %c0_23], %53 {strides = array<i32>} : memref<1x64x4xf32, #tpu.memory_space<vmem>>, vector<1x64x4xf32>,
    %cst_24 = arith.constant dense<0.000000e+00> : vector<4xf32>
    %54 = vector.multi_reduction <add>, %50, %cst_24 [0] : vector<64x4xf32> to vector<4xf32>
    %55 = vector.shape_cast %54 : vector<4xf32> to vector<1x4xf32>
    %c0_25 = arith.constant 0 : index
    %c0_26 = arith.constant 0 : index
    %c0_27 = arith.constant 0 : index
    %c0_28 = arith.constant 0 : index
    %56 = vector.load %arg6[%c0_25, %c0_26, %c0_27, %c0_28] : memref<1x1x1x4xf32, #tpu.memory_space<vmem>>, vector<1x1x1x4xf32>
    %57 = vector.shape_cast %56 : vector<1x1x1x4xf32> to vector<1x4xf32>
    %58 = vector.shape_cast %55 : vector<1x4xf32> to vector<1x1x1x4xf32>
    tpu.vector_store %arg6[%c0_25, %c0_26, %c0_27, %c0_28], %58 {strides = array<i32>} : memref<1x1x1x4xf32, #tpu.memory_space<vmem>>, vector<1x1x1x4xf32>,
    %59 = arith.mulf %50, %50 : vector<64x4xf32>
    %cst_29 = arith.constant dense<0.000000e+00> : vector<4xf32>
    %60 = vector.multi_reduction <add>, %59, %cst_29 [0] : vector<64x4xf32> to vector<4xf32>
    %61 = vector.shape_cast %60 : vector<4xf32> to vector<1x4xf32>
    %c0_30 = arith.constant 0 : index
    %c0_31 = arith.constant 0 : index
    %c0_32 = arith.constant 0 : index
    %c0_33 = arith.constant 0 : index
    %62 = vector.load %arg7[%c0_30, %c0_31, %c0_32, %c0_33] : memref<1x1x1x4xf32, #tpu.memory_space<vmem>>, vector<1x1x1x4xf32>
    %63 = vector.shape_cast %62 : vector<1x1x1x4xf32> to vector<1x4xf32>
    %64 = vector.shape_cast %61 : vector<1x4xf32> to vector<1x1x1x4xf32>
    tpu.vector_store %arg7[%c0_30, %c0_31, %c0_32, %c0_33], %64 {strides = array<i32>} : memref<1x1x1x4xf32, #tpu.memory_space<vmem>>, vector<1x1x1x4xf32>,
    return
  }
  func.func @transform_0(%arg0: i32) -> (i32, i32, i32) {
    %c0_i32 = arith.constant 0 : i32
    %c0_i32_0 = arith.constant 0 : i32
    %c0_i32_1 = arith.constant 0 : i32
    return %arg0, %c0_i32, %c0_i32_0 : i32, i32, i32
  }
  func.func @transform_1(%arg0: i32) -> (i32, i32) {
    %c0_i32 = arith.constant 0 : i32
    %c0_i32_0 = arith.constant 0 : i32
    %c0_i32_1 = arith.constant 0 : i32
    return %c0_i32, %c0_i32_0 : i32, i32
  }
  func.func @transform_2(%arg0: i32) -> (i32, i32) {
    %c0_i32 = arith.constant 0 : i32
    %c0_i32_0 = arith.constant 0 : i32
    %c0_i32_1 = arith.constant 0 : i32
    return %c0_i32, %c0_i32_0 : i32, i32
  }
  func.func @transform_3(%arg0: i32) -> (i32, i32) {
    %c0_i32 = arith.constant 0 : i32
    %c0_i32_0 = arith.constant 0 : i32
    %c0_i32_1 = arith.constant 0 : i32
    return %c0_i32, %c0_i32_0 : i32, i32
  }
  func.func @transform_4(%arg0: i32) -> (i32, i32, i32) {
    %c0_i32 = arith.constant 0 : i32
    %c0_i32_0 = arith.constant 0 : i32
    %c0_i32_1 = arith.constant 0 : i32
    return %arg0, %c0_i32, %c0_i32_0 : i32, i32, i32
  }
  func.func @transform_5(%arg0: i32) -> (i32, i32, i32, i32) {
    %c0_i32 = arith.constant 0 : i32
    %c0_i32_0 = arith.constant 0 : i32
    %c0_i32_1 = arith.constant 0 : i32
    %c0_i32_2 = arith.constant 0 : i32
    return %arg0, %c0_i32, %c0_i32_0, %c0_i32_1 : i32, i32, i32, i32
  }
  func.func @transform_6(%arg0: i32) -> (i32, i32, i32, i32) {
    %c0_i32 = arith.constant 0 : i32
    %c0_i32_0 = arith.constant 0 : i32
    %c0_i32_1 = arith.constant 0 : i32
    %c0_i32_2 = arith.constant 0 : i32
    return %arg0, %c0_i32, %c0_i32_0, %c0_i32_1 : i32, i32, i32, i32
  }
}

module attributes {stable_mosaic.version = 11 : i64} {
  func.func @_conv3_kernel(%arg0: i32, %arg1: i32, %arg2: memref<1x64x4xf32, #tpu.memory_space<vmem>>, %arg3: memref<1x4xf32, #tpu.memory_space<vmem>>, %arg4: memref<1x4xf32, #tpu.memory_space<vmem>>, %arg5: memref<16x4xf32, #tpu.memory_space<vmem>>, %arg6: memref<1x16x64xf32, #tpu.memory_space<vmem>>, %arg7: memref<1x1x16x1xf32, #tpu.memory_space<vmem>>, %arg8: memref<1x1x16x1xf32, #tpu.memory_space<vmem>>) attributes {dimension_semantics = [#tpu.dimension_semantics<parallel>, #tpu.dimension_semantics<parallel>], iteration_bounds = array<i64: 2, 1>, scalar_prefetch = 0 : i64, scratch_operands = 0 : i64, tpu.core_type = #tpu.core_type<tc>, window_params = [{transform_indices = @transform_0, window_bounds = array<i64: 1, 64, 4>}, {pipeline_mode = #tpu.pipeline_mode<synchronous>, transform_indices = @transform_1, window_bounds = array<i64: 1, 4>}, {pipeline_mode = #tpu.pipeline_mode<synchronous>, transform_indices = @transform_2, window_bounds = array<i64: 1, 4>}, {pipeline_mode = #tpu.pipeline_mode<synchronous>, transform_indices = @transform_3, window_bounds = array<i64: 16, 4>}, {transform_indices = @transform_4, window_bounds = array<i64: 1, 16, 64>}, {transform_indices = @transform_5, window_bounds = array<i64: 1, 1, 16, 1>}, {transform_indices = @transform_6, window_bounds = array<i64: 1, 1, 16, 1>}]} {
    %c0 = arith.constant 0 : index
    %c0_0 = arith.constant 0 : index
    %c0_1 = arith.constant 0 : index
    %0 = vector.load %arg2[%c0, %c0_0, %c0_1] : memref<1x64x4xf32, #tpu.memory_space<vmem>>, vector<1x64x4xf32>
    %1 = vector.shape_cast %0 : vector<1x64x4xf32> to vector<64x4xf32>
    %c0_2 = arith.constant 0 : index
    %c0_3 = arith.constant 0 : index
    %2 = vector.load %arg3[%c0_2, %c0_3] : memref<1x4xf32, #tpu.memory_space<vmem>>, vector<1x4xf32>
    %3 = vector.broadcast %2 : vector<1x4xf32> to vector<64x4xf32>
    %4 = arith.mulf %1, %3 : vector<64x4xf32>
    %c0_4 = arith.constant 0 : index
    %c0_5 = arith.constant 0 : index
    %5 = vector.load %arg4[%c0_4, %c0_5] : memref<1x4xf32, #tpu.memory_space<vmem>>, vector<1x4xf32>
    %6 = vector.broadcast %5 : vector<1x4xf32> to vector<64x4xf32>
    %7 = arith.addf %4, %6 : vector<64x4xf32>
    %cst = arith.constant 0.000000e+00 : f32
    %8 = vector.broadcast %cst : f32 to vector<64x4xf32>
    %9 = arith.maximumf %7, %8 : vector<64x4xf32>
    %c0_6 = arith.constant 0 : index
    %c0_7 = arith.constant 0 : index
    %10 = vector.load %arg5[%c0_6, %c0_7] : memref<16x4xf32, #tpu.memory_space<vmem>>, vector<16x4xf32>
    %cst_8 = arith.constant dense<0.000000e+00> : vector<16x64xf32>
    %11 = tpu.matmul %10, %9, %cst_8 {dimension_numbers = #tpu.dot_dimension_numbers<[1], [1], [0], [0], [0, 0, 1, 0], [], []>} : vector<16x4xf32>, vector<64x4xf32>, vector<16x64xf32> -> vector<16x64xf32>
    %c0_9 = arith.constant 0 : index
    %c0_10 = arith.constant 0 : index
    %c0_11 = arith.constant 0 : index
    %12 = vector.load %arg6[%c0_9, %c0_10, %c0_11] : memref<1x16x64xf32, #tpu.memory_space<vmem>>, vector<1x16x64xf32>
    %13 = vector.shape_cast %12 : vector<1x16x64xf32> to vector<16x64xf32>
    %14 = vector.shape_cast %11 : vector<16x64xf32> to vector<1x16x64xf32>
    tpu.vector_store %arg6[%c0_9, %c0_10, %c0_11], %14 {strides = array<i32>} : memref<1x16x64xf32, #tpu.memory_space<vmem>>, vector<1x16x64xf32>,
    %cst_12 = arith.constant dense<0.000000e+00> : vector<16xf32>
    %15 = vector.multi_reduction <add>, %11, %cst_12 [1] : vector<16x64xf32> to vector<16xf32>
    %16 = vector.shape_cast %15 : vector<16xf32> to vector<16x1xf32>
    %c0_13 = arith.constant 0 : index
    %c0_14 = arith.constant 0 : index
    %c0_15 = arith.constant 0 : index
    %c0_16 = arith.constant 0 : index
    %17 = vector.load %arg7[%c0_13, %c0_14, %c0_15, %c0_16] : memref<1x1x16x1xf32, #tpu.memory_space<vmem>>, vector<1x1x16x1xf32>
    %18 = vector.shape_cast %17 : vector<1x1x16x1xf32> to vector<16x1xf32>
    %19 = vector.shape_cast %16 : vector<16x1xf32> to vector<1x1x16x1xf32>
    tpu.vector_store %arg7[%c0_13, %c0_14, %c0_15, %c0_16], %19 {strides = array<i32>} : memref<1x1x16x1xf32, #tpu.memory_space<vmem>>, vector<1x1x16x1xf32>,
    %20 = arith.mulf %11, %11 : vector<16x64xf32>
    %cst_17 = arith.constant dense<0.000000e+00> : vector<16xf32>
    %21 = vector.multi_reduction <add>, %20, %cst_17 [1] : vector<16x64xf32> to vector<16xf32>
    %22 = vector.shape_cast %21 : vector<16xf32> to vector<16x1xf32>
    %c0_18 = arith.constant 0 : index
    %c0_19 = arith.constant 0 : index
    %c0_20 = arith.constant 0 : index
    %c0_21 = arith.constant 0 : index
    %23 = vector.load %arg8[%c0_18, %c0_19, %c0_20, %c0_21] : memref<1x1x16x1xf32, #tpu.memory_space<vmem>>, vector<1x1x16x1xf32>
    %24 = vector.shape_cast %23 : vector<1x1x16x1xf32> to vector<16x1xf32>
    %25 = vector.shape_cast %22 : vector<16x1xf32> to vector<1x1x16x1xf32>
    tpu.vector_store %arg8[%c0_18, %c0_19, %c0_20, %c0_21], %25 {strides = array<i32>} : memref<1x1x16x1xf32, #tpu.memory_space<vmem>>, vector<1x1x16x1xf32>,
    return
  }
  func.func @transform_0(%arg0: i32, %arg1: i32) -> (i32, i32, i32) {
    %c0_i32 = arith.constant 0 : i32
    %c0_i32_0 = arith.constant 0 : i32
    return %arg0, %arg1, %c0_i32 : i32, i32, i32
  }
  func.func @transform_1(%arg0: i32, %arg1: i32) -> (i32, i32) {
    %c0_i32 = arith.constant 0 : i32
    %c0_i32_0 = arith.constant 0 : i32
    %c0_i32_1 = arith.constant 0 : i32
    return %c0_i32, %c0_i32_0 : i32, i32
  }
  func.func @transform_2(%arg0: i32, %arg1: i32) -> (i32, i32) {
    %c0_i32 = arith.constant 0 : i32
    %c0_i32_0 = arith.constant 0 : i32
    %c0_i32_1 = arith.constant 0 : i32
    return %c0_i32, %c0_i32_0 : i32, i32
  }
  func.func @transform_3(%arg0: i32, %arg1: i32) -> (i32, i32) {
    %c0_i32 = arith.constant 0 : i32
    %c0_i32_0 = arith.constant 0 : i32
    %c0_i32_1 = arith.constant 0 : i32
    return %c0_i32, %c0_i32_0 : i32, i32
  }
  func.func @transform_4(%arg0: i32, %arg1: i32) -> (i32, i32, i32) {
    %c0_i32 = arith.constant 0 : i32
    %c0_i32_0 = arith.constant 0 : i32
    return %arg0, %c0_i32, %arg1 : i32, i32, i32
  }
  func.func @transform_5(%arg0: i32, %arg1: i32) -> (i32, i32, i32, i32) {
    %c0_i32 = arith.constant 0 : i32
    %c0_i32_0 = arith.constant 0 : i32
    %c0_i32_1 = arith.constant 0 : i32
    return %arg0, %arg1, %c0_i32, %c0_i32_0 : i32, i32, i32, i32
  }
  func.func @transform_6(%arg0: i32, %arg1: i32) -> (i32, i32, i32, i32) {
    %c0_i32 = arith.constant 0 : i32
    %c0_i32_0 = arith.constant 0 : i32
    %c0_i32_1 = arith.constant 0 : i32
    return %arg0, %arg1, %c0_i32, %c0_i32_0 : i32, i32, i32, i32
  }
}

module attributes {stable_mosaic.version = 11 : i64} {
  func.func @_residual_kernel(%arg0: i32, %arg1: i32, %arg2: memref<1x16x64xf32, #tpu.memory_space<vmem>>, %arg3: memref<16x1xf32, #tpu.memory_space<vmem>>, %arg4: memref<16x1xf32, #tpu.memory_space<vmem>>, %arg5: memref<1x16x64xf32, #tpu.memory_space<vmem>>, %arg6: memref<1x16x64xf32, #tpu.memory_space<vmem>>) attributes {dimension_semantics = [#tpu.dimension_semantics<parallel>, #tpu.dimension_semantics<parallel>], iteration_bounds = array<i64: 2, 1>, scalar_prefetch = 0 : i64, scratch_operands = 0 : i64, tpu.core_type = #tpu.core_type<tc>, window_params = [{transform_indices = @transform_0, window_bounds = array<i64: 1, 16, 64>}, {pipeline_mode = #tpu.pipeline_mode<synchronous>, transform_indices = @transform_1, window_bounds = array<i64: 16, 1>}, {pipeline_mode = #tpu.pipeline_mode<synchronous>, transform_indices = @transform_2, window_bounds = array<i64: 16, 1>}, {transform_indices = @transform_3, window_bounds = array<i64: 1, 16, 64>}, {transform_indices = @transform_4, window_bounds = array<i64: 1, 16, 64>}]} {
    %c0 = arith.constant 0 : index
    %c0_0 = arith.constant 0 : index
    %c0_1 = arith.constant 0 : index
    %0 = vector.load %arg2[%c0, %c0_0, %c0_1] : memref<1x16x64xf32, #tpu.memory_space<vmem>>, vector<1x16x64xf32>
    %1 = vector.shape_cast %0 : vector<1x16x64xf32> to vector<16x64xf32>
    %c0_2 = arith.constant 0 : index
    %c0_3 = arith.constant 0 : index
    %2 = vector.load %arg3[%c0_2, %c0_3] : memref<16x1xf32, #tpu.memory_space<vmem>>, vector<16x1xf32>
    %3 = vector.broadcast %2 : vector<16x1xf32> to vector<16x64xf32>
    %4 = arith.mulf %1, %3 : vector<16x64xf32>
    %c0_4 = arith.constant 0 : index
    %c0_5 = arith.constant 0 : index
    %5 = vector.load %arg4[%c0_4, %c0_5] : memref<16x1xf32, #tpu.memory_space<vmem>>, vector<16x1xf32>
    %6 = vector.broadcast %5 : vector<16x1xf32> to vector<16x64xf32>
    %7 = arith.addf %4, %6 : vector<16x64xf32>
    %c0_6 = arith.constant 0 : index
    %c0_7 = arith.constant 0 : index
    %c0_8 = arith.constant 0 : index
    %8 = vector.load %arg5[%c0_6, %c0_7, %c0_8] : memref<1x16x64xf32, #tpu.memory_space<vmem>>, vector<1x16x64xf32>
    %9 = vector.shape_cast %8 : vector<1x16x64xf32> to vector<16x64xf32>
    %10 = arith.addf %7, %9 : vector<16x64xf32>
    %cst = arith.constant 0.000000e+00 : f32
    %11 = vector.broadcast %cst : f32 to vector<16x64xf32>
    %12 = arith.maximumf %10, %11 : vector<16x64xf32>
    %c0_9 = arith.constant 0 : index
    %c0_10 = arith.constant 0 : index
    %c0_11 = arith.constant 0 : index
    %13 = vector.load %arg6[%c0_9, %c0_10, %c0_11] : memref<1x16x64xf32, #tpu.memory_space<vmem>>, vector<1x16x64xf32>
    %14 = vector.shape_cast %13 : vector<1x16x64xf32> to vector<16x64xf32>
    %15 = vector.shape_cast %12 : vector<16x64xf32> to vector<1x16x64xf32>
    tpu.vector_store %arg6[%c0_9, %c0_10, %c0_11], %15 {strides = array<i32>} : memref<1x16x64xf32, #tpu.memory_space<vmem>>, vector<1x16x64xf32>,
    return
  }
  func.func @transform_0(%arg0: i32, %arg1: i32) -> (i32, i32, i32) {
    %c0_i32 = arith.constant 0 : i32
    %c0_i32_0 = arith.constant 0 : i32
    return %arg0, %c0_i32, %arg1 : i32, i32, i32
  }
  func.func @transform_1(%arg0: i32, %arg1: i32) -> (i32, i32) {
    %c0_i32 = arith.constant 0 : i32
    %c0_i32_0 = arith.constant 0 : i32
    %c0_i32_1 = arith.constant 0 : i32
    return %c0_i32, %c0_i32_0 : i32, i32
  }
  func.func @transform_2(%arg0: i32, %arg1: i32) -> (i32, i32) {
    %c0_i32 = arith.constant 0 : i32
    %c0_i32_0 = arith.constant 0 : i32
    %c0_i32_1 = arith.constant 0 : i32
    return %c0_i32, %c0_i32_0 : i32, i32
  }
  func.func @transform_3(%arg0: i32, %arg1: i32) -> (i32, i32, i32) {
    %c0_i32 = arith.constant 0 : i32
    %c0_i32_0 = arith.constant 0 : i32
    return %arg0, %c0_i32, %arg1 : i32, i32, i32
  }
  func.func @transform_4(%arg0: i32, %arg1: i32) -> (i32, i32, i32) {
    %c0_i32 = arith.constant 0 : i32
    %c0_i32_0 = arith.constant 0 : i32
    return %arg0, %c0_i32, %arg1 : i32, i32, i32
  }
}

</mosaic_0001>

<llo_original>
// kernel: bottleneck_pallas.4
$region0: #{bottleneck_pallas.4}
  #allocation0 [shape = 'u32[]', space=smem, size = 0x4, offset = 0x4, fixed_abs, tag = 'smem constant byte address 0x4 - core index']
  #allocation1 [shape = 'u32[144,128]{1,0:T(1,128)}', space=vmem, size = 0x12000, scoped, tag = 'internal scratch']
  %s0 = inlined_call_operand.hbm [shape: f32[2,16,64], index: 0, kind: input, shape index: {}]
  %s1 = inlined_call_operand.hbm [shape: f32[16,4], index: 1, kind: input, shape index: {}]
  %s2 = inlined_call_operand.hbm [shape: f32[2,64,4], index: 2, kind: output, shape index: {0}]
  %s3 = inlined_call_operand.hbm [shape: f32[2,1,1,4], index: 3, kind: output, shape index: {1}]
  %s4 = inlined_call_operand.hbm [shape: f32[2,1,1,4], index: 4, kind: output, shape index: {2}]
  %5 = xla_tuple %s2, %s3, %s4
  %s6 = sld [smem:[#allocation0]]
  $region65: #{bottleneck_pallas.4} parent=0
    _
  %s8 = ssub.s32 1, %s6
  %s9 = scalar_select 0, %s8, %s6
  $region1: #{bottleneck_pallas.4} parent=0
    #allocation2 [shape = 'u8[16384]{0}', space=vmem, size = 0x4000, scoped, tag = 'input window, operand 0']
    #allocation3 [shape = 's32[2]{0}', space=sflag, size = 0x8, scoped, tag = 'scoped memory for bottleneck_pallas.4']
    #allocation4 [shape = 's32[2]{0}', space=sflag, size = 0x8, scoped, tag = 'scoped memory for bottleneck_pallas.4']
    #allocation5 [shape = 'u8[8192]{0}', space=vmem, size = 0x2000, scoped, tag = 'input window, operand 1, single buffered']
    #allocation6 [shape = 's32[1]{0}', space=sflag, size = 0x4, scoped, tag = 'scoped memory for bottleneck_pallas.4']
    #allocation7 [shape = 'u8[65536]{0}', space=vmem, size = 0x10000, scoped, tag = 'output window, operand 0']
    #allocation8 [shape = 'u8[1024]{0}', space=vmem, size = 0x400, scoped, tag = 'output window, operand 1']
    #allocation9 [shape = 's32[2]{0}', space=sflag, size = 0x8, scoped, tag = 'scoped memory for bottleneck_pallas.4']
    #allocation10 [shape = 'u8[1024]{0}', space=vmem, size = 0x400, scoped, tag = 'output window, operand 2']
    %10 = vsyncpa [#allocation3], 0
    %s11 = scalar_lea.sflag [#allocation3], 1
    %12 = vsyncpa %s11, 0
    %13 = vsyncpa [#allocation6], 0
    %14 = vsyncpa [#allocation4], 0
    %s15 = scalar_lea.sflag [#allocation4], 1
    %16 = vsyncpa %s15, 0
    %17 = vsyncpa [#allocation9], 0
    %s18 = scalar_lea.sflag [#allocation9], 1
    %19 = vsyncpa %s18, 0
    loop: start=0, step=1, limit=4
    $region2: #{bottleneck_pallas.4} parent=1 // loop_pre_header
      _
    $region3: #{bottleneck_pallas.4} parent=1 // loop_header
      %s21 = sphi 0, %s25
      %p22 = scmp.ge.s32.totalorder %s21, 4
      %s28 = sphi 0, %s40
      %s29 = sphi 0, %s36
      %s30 = sphi 0, %s28
      %s31 = sphi 0, %s29
      %s32 = sphi 0, %s30
      %s33 = sphi 0, %s31
      %s45 = sphi 0, %s47
      %s48 = sphi 0, %s45
      %s49 = sphi 0, %s48
      %s65 = sphi 0, %s49
      %s69 = sphi 0, %s69
      %s71 = sphi 0, %s69
      %s72 = sphi 0, %s71
      %s86 = sphi 0, %s72
      %s94 = sphi 0, %s96
      %s97 = sphi 0, %s94
      %s98 = sphi 0, %s97
      %s114 = sphi 0, %s98
      %s122 = sphi 0, %s124
      %s125 = sphi 0, %s122
      %s126 = sphi 0, %s125
      %s142 = sphi 0, %s126
      %s150 = sphi 0, %s152
      %s153 = sphi 0, %s150
      %s154 = sphi 0, %s153
      %s170 = sphi 0, %s154
    $region4: #{bottleneck_pallas.4} parent=1 // loop_header_branch
      %24 = sbr.rel (%p22) target = $region8
    $region5: #{bottleneck_pallas.4} parent=1 // loop_body
      %s26 = ssub.s32 %s21, 1
      %s27 = ssub.s32 %s21, 2
      %s34 = sadd.s32 1, %s29
      %p35 = scmp.ge.s32.totalorder %s34, 1
      %s36 = scalar_select %p35, 0, %s34
      %s37 = sadd.s32 1, %s28
      %s38 = scalar_select %p35, %s37, %s28
      %p39 = scmp.ge.s32.totalorder %s38, 2
      %s40 = scalar_select %p39, 0, %s38
      %s41 = ssub.s32 %s28, %s40
      %s42 = ssub.s32 %s29, %s36
      %s43 = sor.u32 %s41, %s42
      %p44 = scmp.eq.s32.totalorder %s43, 0
      %s46 = sadd.s32 %s45, 1
      %s47 = scalar_select %p44, %s45, %s46
      %p50 = pneg %p44
      %p51 = scmp.eq.s32.totalorder %s21, 1
      %p52 = por %p50, %p51
      %p53 = scmp.ne.s32.totalorder %s45, %s48
      %p54 = scmp.eq.s32.totalorder %s21, 0
      %p55 = por %p53, %p54
      %p56 = scmp.ne.s32.totalorder %s45, %s48
      %p57 = scmp.eq.s32.totalorder %s26, 1
      %p58 = por %p56, %p57
      %p59 = scmp.ne.s32.totalorder %s48, %s49
      %p60 = scmp.eq.s32.totalorder %s26, 0
      %p61 = por %p59, %p60
      %p62 = scmp.ne.s32.totalorder %s48, %s49
      %p63 = scmp.eq.s32.totalorder %s27, 1
      %p64 = por %p62, %p63
      %p66 = scmp.ne.s32.totalorder %s49, %s65
      %p67 = scmp.eq.s32.totalorder %s27, 0
      %p68 = por %p66, %p67
      %s70 = sadd.s32 %s69, 1
      %p73 = scmp.eq.s32.totalorder %s21, 1
      %p74 = scmp.ne.s32.totalorder %s69, %s71
      %p75 = scmp.eq.s32.totalorder %s21, 0
      %p76 = por %p74, %p75
      %p77 = scmp.ne.s32.totalorder %s69, %s71
      %p78 = scmp.eq.s32.totalorder %s26, 1
      %p79 = por %p77, %p78
      %p80 = scmp.ne.s32.totalorder %s71, %s72
      %p81 = scmp.eq.s32.totalorder %s26, 0
      %p82 = por %p80, %p81
      %p83 = scmp.ne.s32.totalorder %s71, %s72
      %p84 = scmp.eq.s32.totalorder %s27, 1
      %p85 = por %p83, %p84
      %p87 = scmp.ne.s32.totalorder %s72, %s86
      %p88 = scmp.eq.s32.totalorder %s27, 0
      %p89 = por %p87, %p88
      %s90 = ssub.s32 %s28, %s40
      %s91 = ssub.s32 %s29, %s36
      %s92 = sor.u32 %s90, %s91
      %p93 = scmp.eq.s32.totalorder %s92, 0
      %s95 = sadd.s32 %s94, 1
      %s96 = scalar_select %p93, %s94, %s95
      %p99 = pneg %p93
      %p100 = scmp.eq.s32.totalorder %s21, 1
      %p101 = por %p99, %p100
      %p102 = scmp.ne.s32.totalorder %s94, %s97
      %p103 = scmp.eq.s32.totalorder %s21, 0
      %p104 = por %p102, %p103
      %p105 = scmp.ne.s32.totalorder %s94, %s97
      %p106 = scmp.eq.s32.totalorder %s26, 1
      %p107 = por %p105, %p106
      %p108 = scmp.ne.s32.totalorder %s97, %s98
      %p109 = scmp.eq.s32.totalorder %s26, 0
      %p110 = por %p108, %p109
      %p111 = scmp.ne.s32.totalorder %s97, %s98
      %p112 = scmp.eq.s32.totalorder %s27, 1
      %p113 = por %p111, %p112
      %p115 = scmp.ne.s32.totalorder %s98, %s114
      %p116 = scmp.eq.s32.totalorder %s27, 0
      %p117 = por %p115, %p116
      %s118 = ssub.s32 %s28, %s40
      %s119 = ssub.s32 %s29, %s36
      %s120 = sor.u32 %s118, %s119
      %p121 = scmp.eq.s32.totalorder %s120, 0
      %s123 = sadd.s32 %s122, 1
      %s124 = scalar_select %p121, %s122, %s123
      %p127 = pneg %p121
      %p128 = scmp.eq.s32.totalorder %s21, 1
      %p129 = por %p127, %p128
      %p130 = scmp.ne.s32.totalorder %s122, %s125
      %p131 = scmp.eq.s32.totalorder %s21, 0
      %p132 = por %p130, %p131
      %p133 = scmp.ne.s32.totalorder %s122, %s125
      %p134 = scmp.eq.s32.totalorder %s26, 1
      %p135 = por %p133, %p134
      %p136 = scmp.ne.s32.totalorder %s125, %s126
      %p137 = scmp.eq.s32.totalorder %s26, 0
      %p138 = por %p136, %p137
      %p139 = scmp.ne.s32.totalorder %s125, %s126
      %p140 = scmp.eq.s32.totalorder %s27, 1
      %p141 = por %p139, %p140
      %p143 = scmp.ne.s32.totalorder %s126, %s142
      %p144 = scmp.eq.s32.totalorder %s27, 0
      %p145 = por %p143, %p144
      %s146 = ssub.s32 %s28, %s40
      %s147 = ssub.s32 %s29, %s36
      %s148 = sor.u32 %s146, %s147
      %p149 = scmp.eq.s32.totalorder %s148, 0
      %s151 = sadd.s32 %s150, 1
      %s152 = scalar_select %p149, %s150, %s151
      %p155 = pneg %p149
      %p156 = scmp.eq.s32.totalorder %s21, 1
      %p157 = por %p155, %p156
      %p158 = scmp.ne.s32.totalorder %s150, %s153
      %p159 = scmp.eq.s32.totalorder %s21, 0
      %p160 = por %p158, %p159
      %p161 = scmp.ne.s32.totalorder %s150, %s153
      %p162 = scmp.eq.s32.totalorder %s26, 1
      %p163 = por %p161, %p162
      %p164 = scmp.ne.s32.totalorder %s153, %s154
      %p165 = scmp.eq.s32.totalorder %s26, 0
      %p166 = por %p164, %p165
      %p167 = scmp.ne.s32.totalorder %s153, %s154
      %p168 = scmp.eq.s32.totalorder %s27, 1
      %p169 = por %p167, %p168
      %p171 = scmp.ne.s32.totalorder %s154, %s170
      %p172 = scmp.eq.s32.totalorder %s27, 0
      %p173 = por %p171, %p172
      %p174 = scmp.le.s32.totalorder 1, %s21
      %p175 = scmp.lt.s32.totalorder %s21, 3
      %p176 = pnand %p174, %p175
      %p177 = pneg %p176
      // Predicated region
      $region9: #{bottleneck_pallas.4} parent=5 // pred_check
        _
      $region10: #{bottleneck_pallas.4} parent=5 // pred_check_branch
        %179 = sbr.rel (%p176) target = $region12
      $region11: #{bottleneck_pallas.4} parent=5 // pred_region
        %s180 = ssub.s32 %s21, 1
        // Predicated region
        $region13: #{bottleneck_pallas.4} parent=11 // pred_check
          %p181 = pneg %p82
        $region14: #{bottleneck_pallas.4} parent=11 // pred_check_branch
          %183 = sbr.rel (%p181) target = $region16
        $region15: #{bottleneck_pallas.4} parent=11 // pred_region
          %s185 = ssub.s32 256, 256
          %186 = vsyncadd [#allocation6], %s185
          %s187 = sshll.u32 [#allocation5], 4
          %s188 = int_to_ptr.vmem [resolvable:$true] %s187
          %193 = dma.hbm_to_vmem [thread:$0]  %s1, 256, %s188, [#allocation6], 128, 128, 8
        $region16: #{bottleneck_pallas.4} parent=11 // pred_fallthru
          _
      $region12: #{bottleneck_pallas.4} parent=5 // pred_fallthru
        _
      %p194 = scmp.lt.s32.totalorder %s21, 2
      // Predicated region
      $region17: #{bottleneck_pallas.4} parent=5 // pred_check
        %p195 = pneg %p194
      $region18: #{bottleneck_pallas.4} parent=5 // pred_check_branch
        %197 = sbr.rel (%p195) target = $region20
      $region19: #{bottleneck_pallas.4} parent=5 // pred_region
        // Predicated region
        $region21: #{bottleneck_pallas.4} parent=19 // pred_check
          %p198 = pneg %p55
        $region22: #{bottleneck_pallas.4} parent=19 // pred_check_branch
          %200 = sbr.rel (%p198) target = $region24
        $region23: #{bottleneck_pallas.4} parent=19 // pred_region
          %s201 = sand.u32 %s45, 1
          %s202 = scalar_lea.sflag [#allocation3], %s201
          %s203 = sand.u32 %s45, 1
          %s204 = smul.addr %s203, 16
          %s205 = scalar_lea.vmem [#allocation2], %s204
          %s207 = ssub.s32 256, 256
          %208 = vsyncadd %s202, %s207
          %s209 = smul.addr %s28, 2
          %s210 = sadd.s32 %s29, %s209
          %s211 = smul.addr %s210, 128
          %s212 = scalar_lea.hbm %s0, %s211
          %s213 = sshll.u32 %s205, 4
          %s214 = int_to_ptr.vmem [resolvable:$true] %s213
          %219 = dma.hbm_to_vmem [thread:$0]  %s212, 256, %s214, %s202, 128, 128, 8
        $region24: #{bottleneck_pallas.4} parent=19 // pred_fallthru
          _
      $region20: #{bottleneck_pallas.4} parent=5 // pred_fallthru
        _
      %p220 = scmp.le.s32.totalorder 1, %s21
      %p221 = scmp.lt.s32.totalorder %s21, 3
      %p222 = pnand %p220, %p221
      %p223 = pneg %p222
      // Predicated region
      $region25: #{bottleneck_pallas.4} parent=5 // pred_check
        _
      $region26: #{bottleneck_pallas.4} parent=5 // pred_check_branch
        %225 = sbr.rel (%p222) target = $region28
      $region27: #{bottleneck_pallas.4} parent=5 // pred_region
        %s226 = ssub.s32 %s21, 1
        %s227 = sand.u32 %s48, 1
        %s228 = scalar_lea.sflag [#allocation3], %s227
        %s229 = sand.u32 %s48, 1
        %s230 = smul.addr %s229, 16
        %s231 = scalar_lea.vmem [#allocation2], %s230
        // Predicated region
        $region29: #{bottleneck_pallas.4} parent=27 // pred_check
          %p232 = pneg %p61
        $region30: #{bottleneck_pallas.4} parent=27 // pred_check_branch
          %234 = sbr.rel (%p232) target = $region32
        $region31: #{bottleneck_pallas.4} parent=27 // pred_region
          %235 = dma.done %s228, 256
        $region32: #{bottleneck_pallas.4} parent=27 // pred_fallthru
          _
        // Predicated region
        $region33: #{bottleneck_pallas.4} parent=27 // pred_check
          %p236 = pneg %p82
        $region34: #{bottleneck_pallas.4} parent=27 // pred_check_branch
          %238 = sbr.rel (%p236) target = $region36
        $region35: #{bottleneck_pallas.4} parent=27 // pred_region
          %239 = dma.done [#allocation6], 256
        $region36: #{bottleneck_pallas.4} parent=27 // pred_fallthru
          _
        %s240 = sand.u32 %s48, 1
        %s241 = scalar_lea.sflag [#allocation3], %s240
        %s242 = sand.u32 %s48, 1
        %s243 = smul.addr %s242, 16
        %s244 = scalar_lea.vmem [#allocation2], %s243
        %p245 = pneg %p61
        %p246 = pneg %p58
        %p247 = pneg %p82
        %p248 = pneg %p79
        %p249 = pneg %p110
        %p250 = pneg %p107
        %s251 = sand.u32 %s97, 1
        %s252 = scalar_lea.sflag [#allocation4], %s251
        %s253 = sand.u32 %s97, 1
        %s254 = smul.addr %s253, 64
        %s255 = scalar_lea.vmem [#allocation7], %s254
        %p256 = pneg %p138
        %p257 = pneg %p135
        %s258 = sand.u32 %s26, 1
        %s259 = scalar_lea.sflag [#allocation9], %s258
        %s260 = sand.u32 %s125, 1
        %s261 = scalar_lea.vmem [#allocation8], %s260
        %p262 = pneg %p166
        %p263 = pneg %p163
        %s264 = sand.u32 %s26, 1
        %s265 = scalar_lea.sflag [#allocation9], %s264
        %s266 = sand.u32 %s153, 1
        %s267 = scalar_lea.vmem [#allocation10], %s266
        %s268 = smul.u32 8, %s31
        %v269 = vld [vmem:[%s231] sm:$0xff]
        %v270 = vld [vmem:[%s231 + $0x8] sm:$0xff]
        %v271 = vld [vmem:[#allocation5] sm:$0xff]
        %v272 = vld [vmem:[#allocation5 + $0x8] sm:$0xff]
        %273 = vxpose.xlu0.b32.start [1/16] %v269, 128
        %274 = vxpose.xlu0.b32.cont [2/16] %v270, 128
        %275 = vxpose.xlu0.b32.cont [3/16] 0.0, 128
        %276 = vxpose.xlu0.b32.cont [4/16] 0.0, 128
        %277 = vxpose.xlu0.b32.cont [5/16] 0.0, 128
        %278 = vxpose.xlu0.b32.cont [6/16] 0.0, 128
        %279 = vxpose.xlu0.b32.cont [7/16] 0.0, 128
        %280 = vxpose.xlu0.b32.cont [8/16] 0.0, 128
        %281 = vxpose.xlu0.b32.cont [9/16] 0.0, 128
        %282 = vxpose.xlu0.b32.cont [10/16] 0.0, 128
        %283 = vxpose.xlu0.b32.cont [11/16] 0.0, 128
        %284 = vxpose.xlu0.b32.cont [12/16] 0.0, 128
        %285 = vxpose.xlu0.b32.cont [13/16] 0.0, 128
        %286 = vxpose.xlu0.b32.cont [14/16] 0.0, 128
        %287 = vxpose.xlu0.b32.cont [15/16] 0.0, 128
        %288 = vxpose.xlu0.b32.end [16/16] 0.0, 128
        %v289 = vpop.trf.xlu0
        %v290 = vpop.trf.xlu0
        %v291 = vpop.trf.xlu0
        %v292 = vpop.trf.xlu0
        %v293 = vpop.trf.xlu0
        %v294 = vpop.trf.xlu0
        %v295 = vpop.trf.xlu0
        %v296 = vpop.trf.xlu0
        %v297 = vpop.trf.xlu0
        %v298 = vpop.trf.xlu0
        %v299 = vpop.trf.xlu0
        %v300 = vpop.trf.xlu0
        %v301 = vpop.trf.xlu0
        %v302 = vpop.trf.xlu0
        %v303 = vpop.trf.xlu0
        %v304 = vpop.trf.xlu0
        %vm305 = vcmask 130048
        %v307 = vsel %vm305, %v289, 0
        %v310 = vsel %vm305, %v290, 0
        %v313 = vsel %vm305, %v291, 0
        %v316 = vsel %vm305, %v292, 0
        %v319 = vsel %vm305, %v293, 0
        %v322 = vsel %vm305, %v294, 0
        %v325 = vsel %vm305, %v295, 0
        %v328 = vsel %vm305, %v296, 0
        %330 = vmatprep.subr.mxu0 0.0
        %331 = vmatpush1.msra.mxu0 %v271
        %332 = vmatprep.subr.mxu0 0.0
        %333 = vmatpush1.msra.mxu0 %v272
        %334 = vmatprep.subr.mxu0 0.0
        %335 = vmatpush1.msra.mxu0 0.0
        %336 = vmatprep.subr.mxu0 0.0
        %337 = vmatpush1.msra.mxu0 0.0
        %338 = vmatprep.subr.mxu0 0.0
        %339 = vmatpush1.msra.mxu0 0.0
        %340 = vmatprep.subr.mxu0 0.0
        %341 = vmatpush1.msra.mxu0 0.0
        %342 = vmatprep.subr.mxu0 0.0
        %343 = vmatpush1.msra.mxu0 0.0
        %344 = vmatprep.subr.mxu0 0.0
        %345 = vmatpush1.msra.mxu0 0.0
        %346 = vmatprep.subr.mxu0 0.0
        %347 = vmatpush1.msra.mxu0 0.0
        %348 = vmatprep.subr.mxu0 0.0
        %349 = vmatpush1.msra.mxu0 0.0
        %350 = vmatprep.subr.mxu0 0.0
        %351 = vmatpush1.msra.mxu0 0.0
        %352 = vmatprep.subr.mxu0 0.0
        %353 = vmatpush1.msra.mxu0 0.0
        %354 = vmatprep.subr.mxu0 0.0
        %355 = vmatpush1.msra.mxu0 0.0
        %356 = vmatprep.subr.mxu0 0.0
        %357 = vmatpush1.msra.mxu0 0.0
        %358 = vmatprep.subr.mxu0 0.0
        %359 = vmatpush1.msra.mxu0 0.0
        %360 = vmatprep.subr.mxu0 0.0
        %361 = vmatpush1.msra.mxu0 0.0
        %362 = vmatprep.subr.mxu0 0.0
        %363 = vmatpush1.msra.mxu0 0.0
        %364 = vmatprep.subr.mxu0 0.0
        %365 = vmatpush1.msra.mxu0 0.0
        %366 = vmatprep.subr.mxu0 0.0
        %367 = vmatpush1.msra.mxu0 0.0
        %368 = vmatprep.subr.mxu0 0.0
        %369 = vmatpush1.msra.mxu0 0.0
        %370 = vmatprep.subr.mxu0 0.0
        %371 = vmatpush1.msra.mxu0 0.0
        %372 = vmatprep.subr.mxu0 0.0
        %373 = vmatpush1.msra.mxu0 0.0
        %374 = vmatprep.subr.mxu0 0.0
        %375 = vmatpush1.msra.mxu0 0.0
        %376 = vmatprep.subr.mxu0 0.0
        %377 = vmatpush1.msra.mxu0 0.0
        %378 = vmatprep.subr.mxu0 0.0
        %379 = vmatpush1.msra.mxu0 0.0
        %380 = vmatprep.subr.mxu0 0.0
        %381 = vmatpush1.msra.mxu0 0.0
        %382 = vmatprep.subr.mxu0 0.0
        %383 = vmatpush1.msra.mxu0 0.0
        %384 = vmatprep.subr.mxu0 0.0
        %385 = vmatpush1.msra.mxu0 0.0
        %386 = vmatprep.subr.mxu0 0.0
        %387 = vmatpush1.msra.mxu0 0.0
        %388 = vmatprep.subr.mxu0 0.0
        %389 = vmatpush1.msra.mxu0 0.0
        %390 = vmatprep.subr.mxu0 0.0
        %391 = vmatpush1.msra.mxu0 0.0
        %392 = vmatprep.subr.mxu0 0.0
        %393 = vmatpush1.msra.mxu0 0.0
        %394 = vmatprep.mubr.f32.mxu0 0.0
        %395 = vmatmul.mubr.f32.gmra.mrb[0].mxu0 %v307
        %v396 = vpop.f32.mrb[0].mxu0
        %v397 = vadd.f32 0.0, %v396
        %v398 = vpop.f32.mrb[0].mxu0
        %399 = vmatprep.mubr.f32.mxu0 0.0
        %400 = vmatmul.mubr.f32.gmra.mrb[0].mxu0 %v310
        %v401 = vpop.f32.mrb[0].mxu0
        %v402 = vadd.f32 0.0, %v401
        %v403 = vpop.f32.mrb[0].mxu0
        %404 = vmatprep.mubr.f32.mxu0 0.0
        %405 = vmatmul.mubr.f32.gmra.mrb[0].mxu0 %v313
        %v406 = vpop.f32.mrb[0].mxu0
        %v407 = vadd.f32 0.0, %v406
        %v408 = vpop.f32.mrb[0].mxu0
        %409 = vmatprep.mubr.f32.mxu0 0.0
        %410 = vmatmul.mubr.f32.gmra.mrb[0].mxu0 %v316
        %v411 = vpop.f32.mrb[0].mxu0
        %v412 = vadd.f32 0.0, %v411
        %v413 = vpop.f32.mrb[0].mxu0
        %414 = vmatprep.mubr.f32.mxu0 0.0
        %415 = vmatmul.mubr.f32.gmra.mrb[0].mxu0 %v319
        %v416 = vpop.f32.mrb[0].mxu0
        %v417 = vadd.f32 0.0, %v416
        %v418 = vpop.f32.mrb[0].mxu0
        %419 = vmatprep.mubr.f32.mxu0 0.0
        %420 = vmatmul.mubr.f32.gmra.mrb[0].mxu0 %v322
        %v421 = vpop.f32.mrb[0].mxu0
        %v422 = vadd.f32 0.0, %v421
        %v423 = vpop.f32.mrb[0].mxu0
        %424 = vmatprep.mubr.f32.mxu0 0.0
        %425 = vmatmul.mubr.f32.gmra.mrb[0].mxu0 %v325
        %v426 = vpop.f32.mrb[0].mxu0
        %v427 = vadd.f32 0.0, %v426
        %v428 = vpop.f32.mrb[0].mxu0
        %429 = vmatprep.mubr.f32.mxu0 0.0
        %430 = vmatmul.mubr.f32.gmra.mrb[0].mxu0 %v328
        %v431 = vpop.f32.mrb[0].mxu0
        %v432 = vadd.f32 0.0, %v431
        %v433 = vpop.f32.mrb[0].mxu0
        %434 = vdwg.mxu0
        %vm435 = vcmask 31744
        %436 = vst.msk [vmem:[%s255] sm:$0xff] %vm435, %v397
        %437 = vst.msk [vmem:[%s255 + $0x8] sm:$0xff] %vm435, %v402
        %438 = vst.msk [vmem:[%s255 + $0x10] sm:$0xff] %vm435, %v407
        %439 = vst.msk [vmem:[%s255 + $0x18] sm:$0xff] %vm435, %v412
        %440 = vst.msk [vmem:[%s255 + $0x20] sm:$0xff] %vm435, %v417
        %441 = vst.msk [vmem:[%s255 + $0x28] sm:$0xff] %vm435, %v422
        %442 = vst.msk [vmem:[%s255 + $0x30] sm:$0xff] %vm435, %v427
        %443 = vst.msk [vmem:[%s255 + $0x38] sm:$0xff] %vm435, %v432
        %v444 = vsel %vm435, %v397, 0.0
        %v445 = vsel %vm435, %v402, 0.0
        %v446 = vadd.f32 %v444, %v445
        %v447 = vsel %vm435, %v407, 0.0
        %v448 = vadd.f32 %v446, %v447
        %v449 = vsel %vm435, %v412, 0.0
        %v450 = vadd.f32 %v448, %v449
        %v451 = vsel %vm435, %v417, 0.0
        %v452 = vadd.f32 %v450, %v451
        %v453 = vsel %vm435, %v422, 0.0
        %v454 = vadd.f32 %v452, %v453
        %v455 = vsel %vm435, %v427, 0.0
        %v456 = vadd.f32 %v454, %v455
        %v457 = vsel %vm435, %v432, 0.0
        %v458 = vadd.f32 %v456, %v457
        %v459 = vrot.slane %v458, 4
        %v460 = vadd.f32 %v458, %v459
        %v461 = vrot.slane %v460, 2
        %v462 = vadd.f32 %v460, %v461
        %v463 = vrot.slane %v462, 1
        %v464 = vadd.f32 %v462, %v463
        %vm465 = vcmask 24576
        %466 = vst.msk [vmem:[%s261] sm:$0x1] %vm465, %v464
        %v467 = vmul.f32 %v397, %v397
        %v468 = vmul.f32 %v402, %v402
        %v469 = vmul.f32 %v407, %v407
        %v470 = vmul.f32 %v412, %v412
        %v471 = vmul.f32 %v417, %v417
        %v472 = vmul.f32 %v422, %v422
        %v473 = vmul.f32 %v427, %v427
        %v474 = vmul.f32 %v432, %v432
        %v475 = vsel %vm435, %v467, 0.0
        %v476 = vsel %vm435, %v468, 0.0
        %v477 = vadd.f32 %v475, %v476
        %v478 = vsel %vm435, %v469, 0.0
        %v479 = vadd.f32 %v477, %v478
        %v480 = vsel %vm435, %v470, 0.0
        %v481 = vadd.f32 %v479, %v480
        %v482 = vsel %vm435, %v471, 0.0
        %v483 = vadd.f32 %v481, %v482
        %v484 = vsel %vm435, %v472, 0.0
        %v485 = vadd.f32 %v483, %v484
        %v486 = vsel %vm435, %v473, 0.0
        %v487 = vadd.f32 %v485, %v486
        %v488 = vsel %vm435, %v474, 0.0
        %v489 = vadd.f32 %v487, %v488
        %v490 = vrot.slane %v489, 4
        %v491 = vadd.f32 %v489, %v490
        %v492 = vrot.slane %v491, 2
        %v493 = vadd.f32 %v491, %v492
        %v494 = vrot.slane %v493, 1
        %v495 = vadd.f32 %v493, %v494
        %496 = vst.msk [vmem:[%s267] sm:$0x1] %vm465, %v495
        %s497 = sand.u32 %s97, 1
        %s498 = scalar_lea.sflag [#allocation4], %s497
        %s499 = sand.u32 %s97, 1
        %s500 = smul.addr %s499, 64
        %s501 = scalar_lea.vmem [#allocation7], %s500
        %s502 = sand.u32 %s26, 1
        %s503 = scalar_lea.sflag [#allocation9], %s502
        %s504 = sand.u32 %s125, 1
        %s505 = scalar_lea.vmem [#allocation8], %s504
        %s506 = sand.u32 %s26, 1
        %s507 = scalar_lea.sflag [#allocation9], %s506
        %s508 = sand.u32 %s153, 1
        %s509 = scalar_lea.vmem [#allocation10], %s508
        // Predicated region
        $region37: #{bottleneck_pallas.4} parent=27 // pred_check
          %p510 = pneg %p107
        $region38: #{bottleneck_pallas.4} parent=27 // pred_check_branch
          %512 = sbr.rel (%p510) target = $region40
        $region39: #{bottleneck_pallas.4} parent=27 // pred_region
          %s513 = smul.u32 8, %s31
          %s515 = ssub.s32 1024, 1024
          %516 = vsyncadd %s498, %s515
          %s517 = smul.addr %s30, 8
          %s518 = sadd.s32 %s513, %s517
          %s519 = smul.addr %s518, 128
          %s520 = scalar_lea.hbm %s2, %s519
          %s521 = sshll.u32 %s501, 4
          %s522 = int_to_ptr.vmem [resolvable:$true] %s521
          %527 = dma.vmem_to_hbm [thread:$0]  %s522, 1024, %s520, %s498, 128, 128, 8
        $region40: #{bottleneck_pallas.4} parent=27 // pred_fallthru
          _
        // Predicated region
        $region41: #{bottleneck_pallas.4} parent=27 // pred_check
          %p528 = pneg %p135
        $region42: #{bottleneck_pallas.4} parent=27 // pred_check_branch
          %530 = sbr.rel (%p528) target = $region44
        $region43: #{bottleneck_pallas.4} parent=27 // pred_region
          %s532 = ssub.s32 16, 16
          %533 = vsyncadd %s503, %s532
          %s534 = sadd.s32 %s31, %s30
          %s535 = smul.addr %s534, 16
          %s536 = scalar_lea.hbm %s3, %s535
          %s538 = sshll.u32 %s505, 4
          %s539 = int_to_ptr.vmem [resolvable:$true] %s538
          %541 = dma.vmem_to_hbm [thread:$0]  %s539, 16, %s536, %s503
        $region44: #{bottleneck_pallas.4} parent=27 // pred_fallthru
          _
        // Predicated region
        $region45: #{bottleneck_pallas.4} parent=27 // pred_check
          %p542 = pneg %p163
        $region46: #{bottleneck_pallas.4} parent=27 // pred_check_branch
          %544 = sbr.rel (%p542) target = $region48
        $region47: #{bottleneck_pallas.4} parent=27 // pred_region
          %s546 = ssub.s32 16, 16
          %547 = vsyncadd %s507, %s546
          %s548 = sadd.s32 %s31, %s30
          %s549 = smul.addr %s548, 16
          %s550 = scalar_lea.hbm %s4, %s549
          %s552 = sshll.u32 %s509, 4
          %s553 = int_to_ptr.vmem [resolvable:$true] %s552
          %555 = dma.vmem_to_hbm [thread:$0]  %s553, 16, %s550, %s507
        $region48: #{bottleneck_pallas.4} parent=27 // pred_fallthru
          _
      $region28: #{bottleneck_pallas.4} parent=5 // pred_fallthru
        _
      %p556 = scmp.le.s32.totalorder 2, %s21
      // Predicated region
      $region49: #{bottleneck_pallas.4} parent=5 // pred_check
        %p557 = pneg %p556
      $region50: #{bottleneck_pallas.4} parent=5 // pred_check_branch
        %559 = sbr.rel (%p557) target = $region52
      $region51: #{bottleneck_pallas.4} parent=5 // pred_region
        %s560 = ssub.s32 %s21, 2
        // Predicated region
        $region53: #{bottleneck_pallas.4} parent=51 // pred_check
          %p561 = pneg %p113
        $region54: #{bottleneck_pallas.4} parent=51 // pred_check_branch
          %563 = sbr.rel (%p561) target = $region56
        $region55: #{bottleneck_pallas.4} parent=51 // pred_region
          %s564 = sand.u32 %s98, 1
          %s565 = scalar_lea.sflag [#allocation4], %s564
          %s566 = sand.u32 %s98, 1
          %s567 = smul.addr %s566, 64
          %s568 = scalar_lea.vmem [#allocation7], %s567
          %569 = dma.done %s565, 1024
        $region56: #{bottleneck_pallas.4} parent=51 // pred_fallthru
          _
        // Predicated region
        $region57: #{bottleneck_pallas.4} parent=51 // pred_check
          %p570 = pneg %p141
        $region58: #{bottleneck_pallas.4} parent=51 // pred_check_branch
          %572 = sbr.rel (%p570) target = $region60
        $region59: #{bottleneck_pallas.4} parent=51 // pred_region
          %s573 = sand.u32 %s27, 1
          %s574 = scalar_lea.sflag [#allocation9], %s573
          %s575 = sand.u32 %s126, 1
          %s576 = scalar_lea.vmem [#allocation8], %s575
          %577 = dma.done %s574, 16
        $region60: #{bottleneck_pallas.4} parent=51 // pred_fallthru
          _
        // Predicated region
        $region61: #{bottleneck_pallas.4} parent=51 // pred_check
          %p578 = pneg %p169
        $region62: #{bottleneck_pallas.4} parent=51 // pred_check_branch
          %580 = sbr.rel (%p578) target = $region64
        $region63: #{bottleneck_pallas.4} parent=51 // pred_region
          %s581 = sand.u32 %s27, 1
          %s582 = scalar_lea.sflag [#allocation9], %s581
          %s583 = sand.u32 %s154, 1
          %s584 = scalar_lea.vmem [#allocation10], %s583
          %585 = dma.done %s582, 16
        $region64: #{bottleneck_pallas.4} parent=51 // pred_fallthru
          _
      $region52: #{bottleneck_pallas.4} parent=5 // pred_fallthru
        _
    $region6: #{bottleneck_pallas.4} parent=1 // loop_footer
      %s25 = sadd.s32 1, %s21
    $region7: #{bottleneck_pallas.4} parent=1 // loop_footer_branch
      %20 = sbr.rel target = $region3
    $region8: #{bottleneck_pallas.4} parent=1 // loop_exit
      _
    %586 = vsyncpa [#allocation3], 1
    %s587 = scalar_lea.sflag [#allocation3], 1
    %588 = vsyncpa %s587, 1
    %589 = vsyncpa [#allocation6], 1
    %590 = vsyncpa [#allocation4], 1
    %s591 = scalar_lea.sflag [#allocation4], 1
    %592 = vsyncpa %s591, 1
    %593 = vsyncpa [#allocation9], 1
    %s594 = scalar_lea.sflag [#allocation9], 1
    %595 = vsyncpa %s594, 1

// kernel: bottleneck_pallas.6
$region0: #{bottleneck_pallas.6}
  #allocation0 [shape = 'u32[]', space=smem, size = 0x4, offset = 0x4, fixed_abs, tag = 'smem constant byte address 0x4 - core index']
  #allocation1 [shape = 'u32[144,128]{1,0:T(1,128)}', space=vmem, size = 0x12000, scoped, tag = 'internal scratch']
  %s0 = inlined_call_operand.hbm [shape: f32[2,64,4], index: 0, kind: input, shape index: {}]
  %s1 = inlined_call_operand.hbm [shape: f32[1,4], index: 1, kind: input, shape index: {}]
  %s2 = inlined_call_operand.hbm [shape: f32[1,4], index: 2, kind: input, shape index: {}]
  %s3 = inlined_call_operand.hbm [shape: f32[16,4], index: 3, kind: input, shape index: {}]
  %s4 = inlined_call_operand.hbm [shape: f32[2,16,64], index: 4, kind: output, shape index: {0}]
  %s5 = inlined_call_operand.hbm [shape: f32[2,1,16,1], index: 5, kind: output, shape index: {1}]
  %s6 = inlined_call_operand.hbm [shape: f32[2,1,16,1], index: 6, kind: output, shape index: {2}]
  %7 = xla_tuple %s4, %s5, %s6
  %s8 = sld [smem:[#allocation0]]
  $region81: #{bottleneck_pallas.6} parent=0
    _
  %s10 = ssub.s32 1, %s8
  %s11 = scalar_select 0, %s10, %s8
  $region1: #{bottleneck_pallas.6} parent=0
    #allocation2 [shape = 'u8[65536]{0}', space=vmem, size = 0x10000, scoped, tag = 'input window, operand 0']
    #allocation3 [shape = 's32[2]{0}', space=sflag, size = 0x8, scoped, tag = 'scoped memory for bottleneck_pallas.6']
    #allocation4 [shape = 's32[2]{0}', space=sflag, size = 0x8, scoped, tag = 'scoped memory for bottleneck_pallas.6']
    #allocation5 [shape = 'u8[512]{0}', space=vmem, size = 0x400, scoped, tag = 'input window, operand 1, single buffered']
    #allocation6 [shape = 's32[1]{0}', space=sflag, size = 0x4, scoped, tag = 'scoped memory for bottleneck_pallas.6']
    #allocation7 [shape = 'u8[512]{0}', space=vmem, size = 0x400, scoped, tag = 'input window, operand 2, single buffered']
    #allocation8 [shape = 'u8[8192]{0}', space=vmem, size = 0x2000, scoped, tag = 'input window, operand 3, single buffered']
    #allocation9 [shape = 's32[1]{0}', space=sflag, size = 0x4, scoped, tag = 'scoped memory for bottleneck_pallas.6']
    #allocation10 [shape = 'u8[16384]{0}', space=vmem, size = 0x4000, scoped, tag = 'output window, operand 0']
    #allocation11 [shape = 'u8[16384]{0}', space=vmem, size = 0x4000, scoped, tag = 'output window, operand 1']
    #allocation12 [shape = 's32[2]{0}', space=sflag, size = 0x8, scoped, tag = 'scoped memory for bottleneck_pallas.6']
    #allocation13 [shape = 'u8[16384]{0}', space=vmem, size = 0x4000, scoped, tag = 'output window, operand 2']
    %12 = vsyncpa [#allocation3], 0
    %s13 = scalar_lea.sflag [#allocation3], 1
    %14 = vsyncpa %s13, 0
    %15 = vsyncpa [#allocation6], 0
    %16 = vsyncpa [#allocation9], 0
    %17 = vsyncpa [#allocation4], 0
    %s18 = scalar_lea.sflag [#allocation4], 1
    %19 = vsyncpa %s18, 0
    %20 = vsyncpa [#allocation12], 0
    %s21 = scalar_lea.sflag [#allocation12], 1
    %22 = vsyncpa %s21, 0
    loop: start=0, step=1, limit=4
    $region2: #{bottleneck_pallas.6} parent=1 // loop_pre_header
      _
    $region3: #{bottleneck_pallas.6} parent=1 // loop_header
      %s24 = sphi 0, %s28
      %p25 = scmp.ge.s32.totalorder %s24, 4
      %s31 = sphi 0, %s43
      %s32 = sphi 0, %s39
      %s33 = sphi 0, %s31
      %s34 = sphi 0, %s32
      %s35 = sphi 0, %s33
      %s36 = sphi 0, %s34
      %s48 = sphi 0, %s50
      %s51 = sphi 0, %s48
      %s52 = sphi 0, %s51
      %s68 = sphi 0, %s52
      %s72 = sphi 0, %s72
      %s74 = sphi 0, %s72
      %s75 = sphi 0, %s74
      %s89 = sphi 0, %s75
      %s93 = sphi 0, %s93
      %s95 = sphi 0, %s93
      %s96 = sphi 0, %s95
      %s110 = sphi 0, %s96
      %s114 = sphi 0, %s114
      %s116 = sphi 0, %s114
      %s117 = sphi 0, %s116
      %s131 = sphi 0, %s117
      %s139 = sphi 0, %s141
      %s142 = sphi 0, %s139
      %s143 = sphi 0, %s142
      %s159 = sphi 0, %s143
      %s167 = sphi 0, %s169
      %s170 = sphi 0, %s167
      %s171 = sphi 0, %s170
      %s187 = sphi 0, %s171
      %s195 = sphi 0, %s197
      %s198 = sphi 0, %s195
      %s199 = sphi 0, %s198
      %s215 = sphi 0, %s199
    $region4: #{bottleneck_pallas.6} parent=1 // loop_header_branch
      %27 = sbr.rel (%p25) target = $region8
    $region5: #{bottleneck_pallas.6} parent=1 // loop_body
      %s29 = ssub.s32 %s24, 1
      %s30 = ssub.s32 %s24, 2
      %s37 = sadd.s32 1, %s32
      %p38 = scmp.ge.s32.totalorder %s37, 1
      %s39 = scalar_select %p38, 0, %s37
      %s40 = sadd.s32 1, %s31
      %s41 = scalar_select %p38, %s40, %s31
      %p42 = scmp.ge.s32.totalorder %s41, 2
      %s43 = scalar_select %p42, 0, %s41
      %s44 = ssub.s32 %s31, %s43
      %s45 = ssub.s32 %s32, %s39
      %s46 = sor.u32 %s44, %s45
      %p47 = scmp.eq.s32.totalorder %s46, 0
      %s49 = sadd.s32 %s48, 1
      %s50 = scalar_select %p47, %s48, %s49
      %p53 = pneg %p47
      %p54 = scmp.eq.s32.totalorder %s24, 1
      %p55 = por %p53, %p54
      %p56 = scmp.ne.s32.totalorder %s48, %s51
      %p57 = scmp.eq.s32.totalorder %s24, 0
      %p58 = por %p56, %p57
      %p59 = scmp.ne.s32.totalorder %s48, %s51
      %p60 = scmp.eq.s32.totalorder %s29, 1
      %p61 = por %p59, %p60
      %p62 = scmp.ne.s32.totalorder %s51, %s52
      %p63 = scmp.eq.s32.totalorder %s29, 0
      %p64 = por %p62, %p63
      %p65 = scmp.ne.s32.totalorder %s51, %s52
      %p66 = scmp.eq.s32.totalorder %s30, 1
      %p67 = por %p65, %p66
      %p69 = scmp.ne.s32.totalorder %s52, %s68
      %p70 = scmp.eq.s32.totalorder %s30, 0
      %p71 = por %p69, %p70
      %s73 = sadd.s32 %s72, 1
      %p76 = scmp.eq.s32.totalorder %s24, 1
      %p77 = scmp.ne.s32.totalorder %s72, %s74
      %p78 = scmp.eq.s32.totalorder %s24, 0
      %p79 = por %p77, %p78
      %p80 = scmp.ne.s32.totalorder %s72, %s74
      %p81 = scmp.eq.s32.totalorder %s29, 1
      %p82 = por %p80, %p81
      %p83 = scmp.ne.s32.totalorder %s74, %s75
      %p84 = scmp.eq.s32.totalorder %s29, 0
      %p85 = por %p83, %p84
      %p86 = scmp.ne.s32.totalorder %s74, %s75
      %p87 = scmp.eq.s32.totalorder %s30, 1
      %p88 = por %p86, %p87
      %p90 = scmp.ne.s32.totalorder %s75, %s89
      %p91 = scmp.eq.s32.totalorder %s30, 0
      %p92 = por %p90, %p91
      %s94 = sadd.s32 %s93, 1
      %p97 = scmp.eq.s32.totalorder %s24, 1
      %p98 = scmp.ne.s32.totalorder %s93, %s95
      %p99 = scmp.eq.s32.totalorder %s24, 0
      %p100 = por %p98, %p99
      %p101 = scmp.ne.s32.totalorder %s93, %s95
      %p102 = scmp.eq.s32.totalorder %s29, 1
      %p103 = por %p101, %p102
      %p104 = scmp.ne.s32.totalorder %s95, %s96
      %p105 = scmp.eq.s32.totalorder %s29, 0
      %p106 = por %p104, %p105
      %p107 = scmp.ne.s32.totalorder %s95, %s96
      %p108 = scmp.eq.s32.totalorder %s30, 1
      %p109 = por %p107, %p108
      %p111 = scmp.ne.s32.totalorder %s96, %s110
      %p112 = scmp.eq.s32.totalorder %s30, 0
      %p113 = por %p111, %p112
      %s115 = sadd.s32 %s114, 1
      %p118 = scmp.eq.s32.totalorder %s24, 1
      %p119 = scmp.ne.s32.totalorder %s114, %s116
      %p120 = scmp.eq.s32.totalorder %s24, 0
      %p121 = por %p119, %p120
      %p122 = scmp.ne.s32.totalorder %s114, %s116
      %p123 = scmp.eq.s32.totalorder %s29, 1
      %p124 = por %p122, %p123
      %p125 = scmp.ne.s32.totalorder %s116, %s117
      %p126 = scmp.eq.s32.totalorder %s29, 0
      %p127 = por %p125, %p126
      %p128 = scmp.ne.s32.totalorder %s116, %s117
      %p129 = scmp.eq.s32.totalorder %s30, 1
      %p130 = por %p128, %p129
      %p132 = scmp.ne.s32.totalorder %s117, %s131
      %p133 = scmp.eq.s32.totalorder %s30, 0
      %p134 = por %p132, %p133
      %s135 = ssub.s32 %s31, %s43
      %s136 = ssub.s32 %s32, %s39
      %s137 = sor.u32 %s135, %s136
      %p138 = scmp.eq.s32.totalorder %s137, 0
      %s140 = sadd.s32 %s139, 1
      %s141 = scalar_select %p138, %s139, %s140
      %p144 = pneg %p138
      %p145 = scmp.eq.s32.totalorder %s24, 1
      %p146 = por %p144, %p145
      %p147 = scmp.ne.s32.totalorder %s139, %s142
      %p148 = scmp.eq.s32.totalorder %s24, 0
      %p149 = por %p147, %p148
      %p150 = scmp.ne.s32.totalorder %s139, %s142
      %p151 = scmp.eq.s32.totalorder %s29, 1
      %p152 = por %p150, %p151
      %p153 = scmp.ne.s32.totalorder %s142, %s143
      %p154 = scmp.eq.s32.totalorder %s29, 0
      %p155 = por %p153, %p154
      %p156 = scmp.ne.s32.totalorder %s142, %s143
      %p157 = scmp.eq.s32.totalorder %s30, 1
      %p158 = por %p156, %p157
      %p160 = scmp.ne.s32.totalorder %s143, %s159
      %p161 = scmp.eq.s32.totalorder %s30, 0
      %p162 = por %p160, %p161
      %s163 = ssub.s32 %s31, %s43
      %s164 = ssub.s32 %s32, %s39
      %s165 = sor.u32 %s163, %s164
      %p166 = scmp.eq.s32.totalorder %s165, 0
      %s168 = sadd.s32 %s167, 1
      %s169 = scalar_select %p166, %s167, %s168
      %p172 = pneg %p166
      %p173 = scmp.eq.s32.totalorder %s24, 1
      %p174 = por %p172, %p173
      %p175 = scmp.ne.s32.totalorder %s167, %s170
      %p176 = scmp.eq.s32.totalorder %s24, 0
      %p177 = por %p175, %p176
      %p178 = scmp.ne.s32.totalorder %s167, %s170
      %p179 = scmp.eq.s32.totalorder %s29, 1
      %p180 = por %p178, %p179
      %p181 = scmp.ne.s32.totalorder %s170, %s171
      %p182 = scmp.eq.s32.totalorder %s29, 0
      %p183 = por %p181, %p182
      %p184 = scmp.ne.s32.totalorder %s170, %s171
      %p185 = scmp.eq.s32.totalorder %s30, 1
      %p186 = por %p184, %p185
      %p188 = scmp.ne.s32.totalorder %s171, %s187
      %p189 = scmp.eq.s32.totalorder %s30, 0
      %p190 = por %p188, %p189
      %s191 = ssub.s32 %s31, %s43
      %s192 = ssub.s32 %s32, %s39
      %s193 = sor.u32 %s191, %s192
      %p194 = scmp.eq.s32.totalorder %s193, 0
      %s196 = sadd.s32 %s195, 1
      %s197 = scalar_select %p194, %s195, %s196
      %p200 = pneg %p194
      %p201 = scmp.eq.s32.totalorder %s24, 1
      %p202 = por %p200, %p201
      %p203 = scmp.ne.s32.totalorder %s195, %s198
      %p204 = scmp.eq.s32.totalorder %s24, 0
      %p205 = por %p203, %p204
      %p206 = scmp.ne.s32.totalorder %s195, %s198
      %p207 = scmp.eq.s32.totalorder %s29, 1
      %p208 = por %p206, %p207
      %p209 = scmp.ne.s32.totalorder %s198, %s199
      %p210 = scmp.eq.s32.totalorder %s29, 0
      %p211 = por %p209, %p210
      %p212 = scmp.ne.s32.totalorder %s198, %s199
      %p213 = scmp.eq.s32.totalorder %s30, 1
      %p214 = por %p212, %p213
      %p216 = scmp.ne.s32.totalorder %s199, %s215
      %p217 = scmp.eq.s32.totalorder %s30, 0
      %p218 = por %p216, %p217
      %p219 = scmp.le.s32.totalorder 1, %s24
      %p220 = scmp.lt.s32.totalorder %s24, 3
      %p221 = pnand %p219, %p220
      %p222 = pneg %p221
      // Predicated region
      $region9: #{bottleneck_pallas.6} parent=5 // pred_check
        _
      $region10: #{bottleneck_pallas.6} parent=5 // pred_check_branch
        %224 = sbr.rel (%p221) target = $region12
      $region11: #{bottleneck_pallas.6} parent=5 // pred_region
        %s225 = ssub.s32 %s24, 1
        // Predicated region
        $region13: #{bottleneck_pallas.6} parent=11 // pred_check
          %p226 = pneg %p85
        $region14: #{bottleneck_pallas.6} parent=11 // pred_check_branch
          %228 = sbr.rel (%p226) target = $region16
        $region15: #{bottleneck_pallas.6} parent=11 // pred_region
          %s230 = ssub.s32 16, 16
          %231 = vsyncadd [#allocation6], %s230
          %s233 = sshll.u32 [#allocation5], 4
          %s234 = int_to_ptr.vmem [resolvable:$true] %s233
          %236 = dma.hbm_to_vmem [thread:$0]  %s1, 16, %s234, [#allocation6]
        $region16: #{bottleneck_pallas.6} parent=11 // pred_fallthru
          _
        // Predicated region
        $region17: #{bottleneck_pallas.6} parent=11 // pred_check
          %p237 = pneg %p106
        $region18: #{bottleneck_pallas.6} parent=11 // pred_check_branch
          %239 = sbr.rel (%p237) target = $region20
        $region19: #{bottleneck_pallas.6} parent=11 // pred_region
          %s241 = ssub.s32 16, 16
          %242 = vsyncadd [#allocation6], %s241
          %s244 = sshll.u32 [#allocation7], 4
          %s245 = int_to_ptr.vmem [resolvable:$true] %s244
          %247 = dma.hbm_to_vmem [thread:$0]  %s2, 16, %s245, [#allocation6]
        $region20: #{bottleneck_pallas.6} parent=11 // pred_fallthru
          _
        // Predicated region
        $region21: #{bottleneck_pallas.6} parent=11 // pred_check
          %p248 = pneg %p127
        $region22: #{bottleneck_pallas.6} parent=11 // pred_check_branch
          %250 = sbr.rel (%p248) target = $region24
        $region23: #{bottleneck_pallas.6} parent=11 // pred_region
          %s252 = ssub.s32 256, 256
          %253 = vsyncadd [#allocation9], %s252
          %s254 = sshll.u32 [#allocation8], 4
          %s255 = int_to_ptr.vmem [resolvable:$true] %s254
          %260 = dma.hbm_to_vmem [thread:$0]  %s3, 256, %s255, [#allocation9], 128, 128, 8
        $region24: #{bottleneck_pallas.6} parent=11 // pred_fallthru
          _
      $region12: #{bottleneck_pallas.6} parent=5 // pred_fallthru
        _
      %p261 = scmp.lt.s32.totalorder %s24, 2
      // Predicated region
      $region25: #{bottleneck_pallas.6} parent=5 // pred_check
        %p262 = pneg %p261
      $region26: #{bottleneck_pallas.6} parent=5 // pred_check_branch
        %264 = sbr.rel (%p262) target = $region28
      $region27: #{bottleneck_pallas.6} parent=5 // pred_region
        // Predicated region
        $region29: #{bottleneck_pallas.6} parent=27 // pred_check
          %p265 = pneg %p58
        $region30: #{bottleneck_pallas.6} parent=27 // pred_check_branch
          %267 = sbr.rel (%p265) target = $region32
        $region31: #{bottleneck_pallas.6} parent=27 // pred_region
          %s268 = sand.u32 %s48, 1
          %s269 = scalar_lea.sflag [#allocation3], %s268
          %s270 = sand.u32 %s48, 1
          %s271 = smul.addr %s270, 64
          %s272 = scalar_lea.vmem [#allocation2], %s271
          %s273 = smul.u32 8, %s32
          %s275 = ssub.s32 1024, 1024
          %276 = vsyncadd %s269, %s275
          %s277 = smul.addr %s31, 8
          %s278 = sadd.s32 %s273, %s277
          %s279 = smul.addr %s278, 128
          %s280 = scalar_lea.hbm %s0, %s279
          %s281 = sshll.u32 %s272, 4
          %s282 = int_to_ptr.vmem [resolvable:$true] %s281
          %287 = dma.hbm_to_vmem [thread:$0]  %s280, 1024, %s282, %s269, 128, 128, 8
        $region32: #{bottleneck_pallas.6} parent=27 // pred_fallthru
          _
      $region28: #{bottleneck_pallas.6} parent=5 // pred_fallthru
        _
      %p288 = scmp.le.s32.totalorder 1, %s24
      %p289 = scmp.lt.s32.totalorder %s24, 3
      %p290 = pnand %p288, %p289
      %p291 = pneg %p290
      // Predicated region
      $region33: #{bottleneck_pallas.6} parent=5 // pred_check
        _
      $region34: #{bottleneck_pallas.6} parent=5 // pred_check_branch
        %293 = sbr.rel (%p290) target = $region36
      $region35: #{bottleneck_pallas.6} parent=5 // pred_region
        %s294 = ssub.s32 %s24, 1
        %s295 = sand.u32 %s51, 1
        %s296 = scalar_lea.sflag [#allocation3], %s295
        %s297 = sand.u32 %s51, 1
        %s298 = smul.addr %s297, 64
        %s299 = scalar_lea.vmem [#allocation2], %s298
        // Predicated region
        $region37: #{bottleneck_pallas.6} parent=35 // pred_check
          %p300 = pneg %p64
        $region38: #{bottleneck_pallas.6} parent=35 // pred_check_branch
          %302 = sbr.rel (%p300) target = $region40
        $region39: #{bottleneck_pallas.6} parent=35 // pred_region
          %303 = dma.done %s296, 1024
        $region40: #{bottleneck_pallas.6} parent=35 // pred_fallthru
          _
        // Predicated region
        $region41: #{bottleneck_pallas.6} parent=35 // pred_check
          %p304 = pneg %p85
        $region42: #{bottleneck_pallas.6} parent=35 // pred_check_branch
          %306 = sbr.rel (%p304) target = $region44
        $region43: #{bottleneck_pallas.6} parent=35 // pred_region
          %307 = dma.done [#allocation6], 16
        $region44: #{bottleneck_pallas.6} parent=35 // pred_fallthru
          _
        // Predicated region
        $region45: #{bottleneck_pallas.6} parent=35 // pred_check
          %p308 = pneg %p106
        $region46: #{bottleneck_pallas.6} parent=35 // pred_check_branch
          %310 = sbr.rel (%p308) target = $region48
        $region47: #{bottleneck_pallas.6} parent=35 // pred_region
          %311 = dma.done [#allocation6], 16
        $region48: #{bottleneck_pallas.6} parent=35 // pred_fallthru
          _
        // Predicated region
        $region49: #{bottleneck_pallas.6} parent=35 // pred_check
          %p312 = pneg %p127
        $region50: #{bottleneck_pallas.6} parent=35 // pred_check_branch
          %314 = sbr.rel (%p312) target = $region52
        $region51: #{bottleneck_pallas.6} parent=35 // pred_region
          %315 = dma.done [#allocation9], 256
        $region52: #{bottleneck_pallas.6} parent=35 // pred_fallthru
          _
        %s316 = sand.u32 %s51, 1
        %s317 = scalar_lea.sflag [#allocation3], %s316
        %s318 = sand.u32 %s51, 1
        %s319 = smul.addr %s318, 64
        %s320 = scalar_lea.vmem [#allocation2], %s319
        %p321 = pneg %p64
        %p322 = pneg %p61
        %p323 = pneg %p85
        %p324 = pneg %p82
        %p325 = pneg %p106
        %p326 = pneg %p103
        %p327 = pneg %p127
        %p328 = pneg %p124
        %p329 = pneg %p155
        %p330 = pneg %p152
        %s331 = sand.u32 %s142, 1
        %s332 = scalar_lea.sflag [#allocation4], %s331
        %s333 = sand.u32 %s142, 1
        %s334 = smul.addr %s333, 16
        %s335 = scalar_lea.vmem [#allocation10], %s334
        %p336 = pneg %p183
        %p337 = pneg %p180
        %s338 = sand.u32 %s29, 1
        %s339 = scalar_lea.sflag [#allocation12], %s338
        %s340 = sand.u32 %s170, 1
        %s341 = smul.addr %s340, 16
        %s342 = scalar_lea.vmem [#allocation11], %s341
        %p343 = pneg %p211
        %p344 = pneg %p208
        %s345 = sand.u32 %s29, 1
        %s346 = scalar_lea.sflag [#allocation12], %s345
        %s347 = sand.u32 %s198, 1
        %s348 = smul.addr %s347, 16
        %s349 = scalar_lea.vmem [#allocation13], %s348
        %s350 = smul.u32 8, %s34
        %v351 = vld [vmem:[%s299] sm:$0xff]
        %v352 = vld [vmem:[%s299 + $0x8] sm:$0xff]
        %v353 = vld [vmem:[%s299 + $0x10] sm:$0xff]
        %v354 = vld [vmem:[%s299 + $0x18] sm:$0xff]
        %v355 = vld [vmem:[%s299 + $0x20] sm:$0xff]
        %v356 = vld [vmem:[%s299 + $0x28] sm:$0xff]
        %v357 = vld [vmem:[%s299 + $0x30] sm:$0xff]
        %v358 = vld [vmem:[%s299 + $0x38] sm:$0xff]
        %v359 = vld [vmem:[#allocation5] sm:$0x1]
        %v361 = vlaneseq
        %v362 = vshrl.u32 %v361, 7
        %v363 = vsub.s32 0, %v362
        %v364 = vrot.slane %v359, %v363
        %v366 = vmul.f32 %v351, %v364
        %v367 = vmul.f32 %v352, %v364
        %v368 = vmul.f32 %v353, %v364
        %v369 = vmul.f32 %v354, %v364
        %v370 = vmul.f32 %v355, %v364
        %v371 = vmul.f32 %v356, %v364
        %v372 = vmul.f32 %v357, %v364
        %v373 = vmul.f32 %v358, %v364
        %v374 = vld [vmem:[#allocation7] sm:$0x1]
        %v376 = vlaneseq
        %v377 = vshrl.u32 %v376, 7
        %v378 = vsub.s32 0, %v377
        %v379 = vrot.slane %v374, %v378
        %v381 = vadd.f32 %v366, %v379
        %v382 = vadd.f32 %v367, %v379
        %v383 = vadd.f32 %v368, %v379
        %v384 = vadd.f32 %v369, %v379
        %v385 = vadd.f32 %v370, %v379
        %v386 = vadd.f32 %v371, %v379
        %v387 = vadd.f32 %v372, %v379
        %v388 = vadd.f32 %v373, %v379
        %v389 = vmax.f32 %v381, 0.0
        %v390 = vmax.f32 %v382, 0.0
        %v391 = vmax.f32 %v383, 0.0
        %v392 = vmax.f32 %v384, 0.0
        %v393 = vmax.f32 %v385, 0.0
        %v394 = vmax.f32 %v386, 0.0
        %v395 = vmax.f32 %v387, 0.0
        %v396 = vmax.f32 %v388, 0.0
        %v397 = vld [vmem:[#allocation8] sm:$0xff]
        %v398 = vld [vmem:[#allocation8 + $0x8] sm:$0xff]
        %vm399 = vcmask 31744
        %v401 = vsel %vm399, %v397, 0
        %v404 = vsel %vm399, %v398, 0
        %v407 = vsel %vm399, %v389, 0
        %v410 = vsel %vm399, %v390, 0
        %v413 = vsel %vm399, %v391, 0
        %v416 = vsel %vm399, %v392, 0
        %v419 = vsel %vm399, %v393, 0
        %v422 = vsel %vm399, %v394, 0
        %v425 = vsel %vm399, %v395, 0
        %v428 = vsel %vm399, %v396, 0
        %430 = vmatprep.subr.mxu0 0.0
        %431 = vmatpush1.xpose.msra.mxu0 %v407
        %432 = vmatprep.subr.mxu0 0.0
        %433 = vmatpush1.xpose.msra.mxu0 %v410
        %434 = vmatprep.subr.mxu0 0.0
        %435 = vmatpush1.xpose.msra.mxu0 %v413
        %436 = vmatprep.subr.mxu0 0.0
        %437 = vmatpush1.xpose.msra.mxu0 %v416
        %438 = vmatprep.subr.mxu0 0.0
        %439 = vmatpush1.xpose.msra.mxu0 %v419
        %440 = vmatprep.subr.mxu0 0.0
        %441 = vmatpush1.xpose.msra.mxu0 %v422
        %442 = vmatprep.subr.mxu0 0.0
        %443 = vmatpush1.xpose.msra.mxu0 %v425
        %444 = vmatprep.subr.mxu0 0.0
        %445 = vmatpush1.xpose.msra.mxu0 %v428
        %446 = vmatprep.subr.mxu0 0.0
        %447 = vmatpush1.xpose.msra.mxu0 0.0
        %448 = vmatprep.subr.mxu0 0.0
        %449 = vmatpush1.xpose.msra.mxu0 0.0
        %450 = vmatprep.subr.mxu0 0.0
        %451 = vmatpush1.xpose.msra.mxu0 0.0
        %452 = vmatprep.subr.mxu0 0.0
        %453 = vmatpush1.xpose.msra.mxu0 0.0
        %454 = vmatprep.subr.mxu0 0.0
        %455 = vmatpush1.xpose.msra.mxu0 0.0
        %456 = vmatprep.subr.mxu0 0.0
        %457 = vmatpush1.xpose.msra.mxu0 0.0
        %458 = vmatprep.subr.mxu0 0.0
        %459 = vmatpush1.xpose.msra.mxu0 0.0
        %460 = vmatprep.subr.mxu0 0.0
        %461 = vmatpush1.xpose.msra.mxu0 0.0
        %462 = vmatprep.subr.mxu0 0.0
        %463 = vmatpush1.xpose.msra.mxu0 0.0
        %464 = vmatprep.subr.mxu0 0.0
        %465 = vmatpush1.xpose.msra.mxu0 0.0
        %466 = vmatprep.subr.mxu0 0.0
        %467 = vmatpush1.xpose.msra.mxu0 0.0
        %468 = vmatprep.subr.mxu0 0.0
        %469 = vmatpush1.xpose.msra.mxu0 0.0
        %470 = vmatprep.subr.mxu0 0.0
        %471 = vmatpush1.xpose.msra.mxu0 0.0
        %472 = vmatprep.subr.mxu0 0.0
        %473 = vmatpush1.xpose.msra.mxu0 0.0
        %474 = vmatprep.subr.mxu0 0.0
        %475 = vmatpush1.xpose.msra.mxu0 0.0
        %476 = vmatprep.subr.mxu0 0.0
        %477 = vmatpush1.xpose.msra.mxu0 0.0
        %478 = vmatprep.subr.mxu0 0.0
        %479 = vmatpush1.xpose.msra.mxu0 0.0
        %480 = vmatprep.subr.mxu0 0.0
        %481 = vmatpush1.xpose.msra.mxu0 0.0
        %482 = vmatprep.subr.mxu0 0.0
        %483 = vmatpush1.xpose.msra.mxu0 0.0
        %484 = vmatprep.subr.mxu0 0.0
        %485 = vmatpush1.xpose.msra.mxu0 0.0
        %486 = vmatprep.subr.mxu0 0.0
        %487 = vmatpush1.xpose.msra.mxu0 0.0
        %488 = vmatprep.subr.mxu0 0.0
        %489 = vmatpush1.xpose.msra.mxu0 0.0
        %490 = vmatprep.subr.mxu0 0.0
        %491 = vmatpush1.xpose.msra.mxu0 0.0
        %492 = vmatprep.subr.mxu0 0.0
        %493 = vmatpush1.xpose.msra.mxu0 0.0
        %494 = vmatprep.mubr.f32.mxu0 0.0
        %495 = vmatmul.mubr.f32.gmra.mrb[0].mxu0 %v401
        %v496 = vpop.f32.mrb[0].mxu0
        %v497 = vadd.f32 0.0, %v496
        %v498 = vpop.f32.mrb[0].mxu0
        %499 = vmatprep.mubr.f32.mxu0 0.0
        %500 = vmatmul.mubr.f32.gmra.mrb[0].mxu0 %v404
        %v501 = vpop.f32.mrb[0].mxu0
        %v502 = vadd.f32 0.0, %v501
        %v503 = vpop.f32.mrb[0].mxu0
        %504 = vdwg.mxu0
        %vm505 = vcmask 523264
        %506 = vst.msk [vmem:[%s335] sm:$0xff] %vm505, %v497
        %507 = vst.msk [vmem:[%s335 + $0x8] sm:$0xff] %vm505, %v502
        %v508 = vsel %vm505, %v497, 0.0
        %509 = vadd.xlane.f32.xlu0 %v508
        %v510 = vpop.xlane.xlu0 %509
        %v511 = vsel %vm505, %v502, 0.0
        %512 = vadd.xlane.f32.xlu0 %v511
        %v513 = vpop.xlane.xlu0 %512
        %vm514 = vcmask 7168
        %515 = vst.msk [vmem:[%s342] sm:$0xff] %vm514, %v510
        %516 = vst.msk [vmem:[%s342 + $0x8] sm:$0xff] %vm514, %v513
        %v517 = vmul.f32 %v497, %v497
        %v518 = vmul.f32 %v502, %v502
        %v519 = vsel %vm505, %v517, 0.0
        %520 = vadd.xlane.f32.xlu0 %v519
        %v521 = vpop.xlane.xlu0 %520
        %v522 = vsel %vm505, %v518, 0.0
        %523 = vadd.xlane.f32.xlu0 %v522
        %v524 = vpop.xlane.xlu0 %523
        %525 = vst.msk [vmem:[%s349] sm:$0xff] %vm514, %v521
        %526 = vst.msk [vmem:[%s349 + $0x8] sm:$0xff] %vm514, %v524
        %s527 = sand.u32 %s142, 1
        %s528 = scalar_lea.sflag [#allocation4], %s527
        %s529 = sand.u32 %s142, 1
        %s530 = smul.addr %s529, 16
        %s531 = scalar_lea.vmem [#allocation10], %s530
        %s532 = sand.u32 %s29, 1
        %s533 = scalar_lea.sflag [#allocation12], %s532
        %s534 = sand.u32 %s170, 1
        %s535 = smul.addr %s534, 16
        %s536 = scalar_lea.vmem [#allocation11], %s535
        %s537 = sand.u32 %s29, 1
        %s538 = scalar_lea.sflag [#allocation12], %s537
        %s539 = sand.u32 %s198, 1
        %s540 = smul.addr %s539, 16
        %s541 = scalar_lea.vmem [#allocation13], %s540
        // Predicated region
        $region53: #{bottleneck_pallas.6} parent=35 // pred_check
          %p542 = pneg %p152
        $region54: #{bottleneck_pallas.6} parent=35 // pred_check_branch
          %544 = sbr.rel (%p542) target = $region56
        $region55: #{bottleneck_pallas.6} parent=35 // pred_region
          %s546 = ssub.s32 256, 256
          %547 = vsyncadd %s528, %s546
          %s548 = smul.addr %s33, 2
          %s549 = sadd.s32 %s34, %s548
          %s550 = smul.addr %s549, 128
          %s551 = scalar_lea.hbm %s4, %s550
          %s552 = sshll.u32 %s531, 4
          %s553 = int_to_ptr.vmem [resolvable:$true] %s552
          %558 = dma.vmem_to_hbm [thread:$0]  %s553, 256, %s551, %s528, 128, 128, 8
        $region56: #{bottleneck_pallas.6} parent=35 // pred_fallthru
          _
        // Predicated region
        $region57: #{bottleneck_pallas.6} parent=35 // pred_check
          %p559 = pneg %p180
        $region58: #{bottleneck_pallas.6} parent=35 // pred_check_branch
          %561 = sbr.rel (%p559) target = $region60
        $region59: #{bottleneck_pallas.6} parent=35 // pred_region
          %s563 = ssub.s32 256, 256
          %564 = vsyncadd %s533, %s563
          %s565 = smul.addr %s34, 2
          %s566 = smul.addr %s33, 2
          %s567 = sadd.s32 %s565, %s566
          %s568 = smul.addr %s567, 128
          %s569 = scalar_lea.hbm %s5, %s568
          %s570 = sshll.u32 %s536, 4
          %s571 = int_to_ptr.vmem [resolvable:$true] %s570
          %576 = dma.vmem_to_hbm [thread:$0]  %s571, 256, %s569, %s533, 128, 128, 8
        $region60: #{bottleneck_pallas.6} parent=35 // pred_fallthru
          _
        // Predicated region
        $region61: #{bottleneck_pallas.6} parent=35 // pred_check
          %p577 = pneg %p208
        $region62: #{bottleneck_pallas.6} parent=35 // pred_check_branch
          %579 = sbr.rel (%p577) target = $region64
        $region63: #{bottleneck_pallas.6} parent=35 // pred_region
          %s581 = ssub.s32 256, 256
          %582 = vsyncadd %s538, %s581
          %s583 = smul.addr %s34, 2
          %s584 = smul.addr %s33, 2
          %s585 = sadd.s32 %s583, %s584
          %s586 = smul.addr %s585, 128
          %s587 = scalar_lea.hbm %s6, %s586
          %s588 = sshll.u32 %s541, 4
          %s589 = int_to_ptr.vmem [resolvable:$true] %s588
          %594 = dma.vmem_to_hbm [thread:$0]  %s589, 256, %s587, %s538, 128, 128, 8
        $region64: #{bottleneck_pallas.6} parent=35 // pred_fallthru
          _
      $region36: #{bottleneck_pallas.6} parent=5 // pred_fallthru
        _
      %p595 = scmp.le.s32.totalorder 2, %s24
      // Predicated region
      $region65: #{bottleneck_pallas.6} parent=5 // pred_check
        %p596 = pneg %p595
      $region66: #{bottleneck_pallas.6} parent=5 // pred_check_branch
        %598 = sbr.rel (%p596) target = $region68
      $region67: #{bottleneck_pallas.6} parent=5 // pred_region
        %s599 = ssub.s32 %s24, 2
        // Predicated region
        $region69: #{bottleneck_pallas.6} parent=67 // pred_check
          %p600 = pneg %p158
        $region70: #{bottleneck_pallas.6} parent=67 // pred_check_branch
          %602 = sbr.rel (%p600) target = $region72
        $region71: #{bottleneck_pallas.6} parent=67 // pred_region
          %s603 = sand.u32 %s143, 1
          %s604 = scalar_lea.sflag [#allocation4], %s603
          %s605 = sand.u32 %s143, 1
          %s606 = smul.addr %s605, 16
          %s607 = scalar_lea.vmem [#allocation10], %s606
          %608 = dma.done %s604, 256
        $region72: #{bottleneck_pallas.6} parent=67 // pred_fallthru
          _
        // Predicated region
        $region73: #{bottleneck_pallas.6} parent=67 // pred_check
          %p609 = pneg %p186
        $region74: #{bottleneck_pallas.6} parent=67 // pred_check_branch
          %611 = sbr.rel (%p609) target = $region76
        $region75: #{bottleneck_pallas.6} parent=67 // pred_region
          %s612 = sand.u32 %s30, 1
          %s613 = scalar_lea.sflag [#allocation12], %s612
          %s614 = sand.u32 %s171, 1
          %s615 = smul.addr %s614, 16
          %s616 = scalar_lea.vmem [#allocation11], %s615
          %617 = dma.done %s613, 256
        $region76: #{bottleneck_pallas.6} parent=67 // pred_fallthru
          _
        // Predicated region
        $region77: #{bottleneck_pallas.6} parent=67 // pred_check
          %p618 = pneg %p214
        $region78: #{bottleneck_pallas.6} parent=67 // pred_check_branch
          %620 = sbr.rel (%p618) target = $region80
        $region79: #{bottleneck_pallas.6} parent=67 // pred_region
          %s621 = sand.u32 %s30, 1
          %s622 = scalar_lea.sflag [#allocation12], %s621
          %s623 = sand.u32 %s199, 1
          %s624 = smul.addr %s623, 16
          %s625 = scalar_lea.vmem [#allocation13], %s624
          %626 = dma.done %s622, 256
        $region80: #{bottleneck_pallas.6} parent=67 // pred_fallthru
          _
      $region68: #{bottleneck_pallas.6} parent=5 // pred_fallthru
        _
    $region6: #{bottleneck_pallas.6} parent=1 // loop_footer
      %s28 = sadd.s32 1, %s24
    $region7: #{bottleneck_pallas.6} parent=1 // loop_footer_branch
      %23 = sbr.rel target = $region3
    $region8: #{bottleneck_pallas.6} parent=1 // loop_exit
      _
    %627 = vsyncpa [#allocation3], 1
    %s628 = scalar_lea.sflag [#allocation3], 1
    %629 = vsyncpa %s628, 1
    %630 = vsyncpa [#allocation6], 1
    %631 = vsyncpa [#allocation9], 1
    %632 = vsyncpa [#allocation4], 1
    %s633 = scalar_lea.sflag [#allocation4], 1
    %634 = vsyncpa %s633, 1
    %635 = vsyncpa [#allocation12], 1
    %s636 = scalar_lea.sflag [#allocation12], 1
    %637 = vsyncpa %s636, 1

// kernel: bottleneck_pallas.5
$region0: #{bottleneck_pallas.5}
  #allocation0 [shape = 'u32[]', space=smem, size = 0x4, offset = 0x4, fixed_abs, tag = 'smem constant byte address 0x4 - core index']
  #allocation1 [shape = 'u32[144,128]{1,0:T(1,128)}', space=vmem, size = 0x12000, scoped, tag = 'internal scratch']
  %s0 = inlined_call_operand.hbm [shape: f32[2,64,4], index: 0, kind: input, shape index: {}]
  %s1 = inlined_call_operand.hbm [shape: f32[1,4], index: 1, kind: input, shape index: {}]
  %s2 = inlined_call_operand.hbm [shape: f32[1,4], index: 2, kind: input, shape index: {}]
  %s3 = inlined_call_operand.hbm [shape: f32[36,4], index: 3, kind: input, shape index: {}]
  %s4 = inlined_call_operand.hbm [shape: f32[2,64,4], index: 4, kind: output, shape index: {0}]
  %s5 = inlined_call_operand.hbm [shape: f32[2,1,1,4], index: 5, kind: output, shape index: {1}]
  %s6 = inlined_call_operand.hbm [shape: f32[2,1,1,4], index: 6, kind: output, shape index: {2}]
  %7 = xla_tuple %s4, %s5, %s6
  %s8 = sld [smem:[#allocation0]]
  $region81: #{bottleneck_pallas.5} parent=0
    _
  %s10 = ssub.s32 1, %s8
  %s11 = scalar_select 0, %s10, %s8
  $region1: #{bottleneck_pallas.5} parent=0
    #allocation2 [shape = 'u8[65536]{0}', space=vmem, size = 0x10000, scoped, tag = 'input window, operand 0']
    #allocation3 [shape = 's32[2]{0}', space=sflag, size = 0x8, scoped, tag = 'scoped memory for bottleneck_pallas.5']
    #allocation4 [shape = 's32[2]{0}', space=sflag, size = 0x8, scoped, tag = 'scoped memory for bottleneck_pallas.5']
    #allocation5 [shape = 'u8[512]{0}', space=vmem, size = 0x400, scoped, tag = 'input window, operand 1, single buffered']
    #allocation6 [shape = 's32[1]{0}', space=sflag, size = 0x4, scoped, tag = 'scoped memory for bottleneck_pallas.5']
    #allocation7 [shape = 'u8[512]{0}', space=vmem, size = 0x400, scoped, tag = 'input window, operand 2, single buffered']
    #allocation8 [shape = 'u8[20480]{0}', space=vmem, size = 0x5000, scoped, tag = 'input window, operand 3, single buffered']
    #allocation9 [shape = 's32[1]{0}', space=sflag, size = 0x4, scoped, tag = 'scoped memory for bottleneck_pallas.5']
    #allocation10 [shape = 'u8[65536]{0}', space=vmem, size = 0x10000, scoped, tag = 'output window, operand 0']
    #allocation11 [shape = 'u8[1024]{0}', space=vmem, size = 0x400, scoped, tag = 'output window, operand 1']
    #allocation12 [shape = 's32[2]{0}', space=sflag, size = 0x8, scoped, tag = 'scoped memory for bottleneck_pallas.5']
    #allocation13 [shape = 'u8[1024]{0}', space=vmem, size = 0x400, scoped, tag = 'output window, operand 2']
    %12 = vsyncpa [#allocation3], 0
    %s13 = scalar_lea.sflag [#allocation3], 1
    %14 = vsyncpa %s13, 0
    %15 = vsyncpa [#allocation6], 0
    %16 = vsyncpa [#allocation9], 0
    %17 = vsyncpa [#allocation4], 0
    %s18 = scalar_lea.sflag [#allocation4], 1
    %19 = vsyncpa %s18, 0
    %20 = vsyncpa [#allocation12], 0
    %s21 = scalar_lea.sflag [#allocation12], 1
    %22 = vsyncpa %s21, 0
    loop: start=0, step=1, limit=4
    $region2: #{bottleneck_pallas.5} parent=1 // loop_pre_header
      _
    $region3: #{bottleneck_pallas.5} parent=1 // loop_header
      %s24 = sphi 0, %s28
      %p25 = scmp.ge.s32.totalorder %s24, 4
      %s34 = sphi 0, %s36
      %s37 = sphi 0, %s34
      %s38 = sphi 0, %s37
      %s54 = sphi 0, %s38
      %s58 = sphi 0, %s58
      %s60 = sphi 0, %s58
      %s61 = sphi 0, %s60
      %s75 = sphi 0, %s61
      %s79 = sphi 0, %s79
      %s81 = sphi 0, %s79
      %s82 = sphi 0, %s81
      %s96 = sphi 0, %s82
      %s100 = sphi 0, %s100
      %s102 = sphi 0, %s100
      %s103 = sphi 0, %s102
      %s117 = sphi 0, %s103
      %s123 = sphi 0, %s125
      %s126 = sphi 0, %s123
      %s127 = sphi 0, %s126
      %s143 = sphi 0, %s127
      %s149 = sphi 0, %s151
      %s152 = sphi 0, %s149
      %s153 = sphi 0, %s152
      %s169 = sphi 0, %s153
      %s175 = sphi 0, %s177
      %s178 = sphi 0, %s175
      %s179 = sphi 0, %s178
      %s195 = sphi 0, %s179
    $region4: #{bottleneck_pallas.5} parent=1 // loop_header_branch
      %27 = sbr.rel (%p25) target = $region8
    $region5: #{bottleneck_pallas.5} parent=1 // loop_body
      %s29 = ssub.s32 %s24, 1
      %s30 = ssub.s32 %s24, 2
      %s31 = sadd.s32 %s24, 1
      %s32 = ssub.s32 %s24, %s31
      %p33 = scmp.eq.s32.totalorder %s32, 0
      %s35 = sadd.s32 %s34, 1
      %s36 = scalar_select %p33, %s34, %s35
      %p39 = pneg %p33
      %p40 = scmp.eq.s32.totalorder %s24, 1
      %p41 = por %p39, %p40
      %p42 = scmp.ne.s32.totalorder %s34, %s37
      %p43 = scmp.eq.s32.totalorder %s24, 0
      %p44 = por %p42, %p43
      %p45 = scmp.ne.s32.totalorder %s34, %s37
      %p46 = scmp.eq.s32.totalorder %s29, 1
      %p47 = por %p45, %p46
      %p48 = scmp.ne.s32.totalorder %s37, %s38
      %p49 = scmp.eq.s32.totalorder %s29, 0
      %p50 = por %p48, %p49
      %p51 = scmp.ne.s32.totalorder %s37, %s38
      %p52 = scmp.eq.s32.totalorder %s30, 1
      %p53 = por %p51, %p52
      %p55 = scmp.ne.s32.totalorder %s38, %s54
      %p56 = scmp.eq.s32.totalorder %s30, 0
      %p57 = por %p55, %p56
      %s59 = sadd.s32 %s58, 1
      %p62 = scmp.eq.s32.totalorder %s24, 1
      %p63 = scmp.ne.s32.totalorder %s58, %s60
      %p64 = scmp.eq.s32.totalorder %s24, 0
      %p65 = por %p63, %p64
      %p66 = scmp.ne.s32.totalorder %s58, %s60
      %p67 = scmp.eq.s32.totalorder %s29, 1
      %p68 = por %p66, %p67
      %p69 = scmp.ne.s32.totalorder %s60, %s61
      %p70 = scmp.eq.s32.totalorder %s29, 0
      %p71 = por %p69, %p70
      %p72 = scmp.ne.s32.totalorder %s60, %s61
      %p73 = scmp.eq.s32.totalorder %s30, 1
      %p74 = por %p72, %p73
      %p76 = scmp.ne.s32.totalorder %s61, %s75
      %p77 = scmp.eq.s32.totalorder %s30, 0
      %p78 = por %p76, %p77
      %s80 = sadd.s32 %s79, 1
      %p83 = scmp.eq.s32.totalorder %s24, 1
      %p84 = scmp.ne.s32.totalorder %s79, %s81
      %p85 = scmp.eq.s32.totalorder %s24, 0
      %p86 = por %p84, %p85
      %p87 = scmp.ne.s32.totalorder %s79, %s81
      %p88 = scmp.eq.s32.totalorder %s29, 1
      %p89 = por %p87, %p88
      %p90 = scmp.ne.s32.totalorder %s81, %s82
      %p91 = scmp.eq.s32.totalorder %s29, 0
      %p92 = por %p90, %p91
      %p93 = scmp.ne.s32.totalorder %s81, %s82
      %p94 = scmp.eq.s32.totalorder %s30, 1
      %p95 = por %p93, %p94
      %p97 = scmp.ne.s32.totalorder %s82, %s96
      %p98 = scmp.eq.s32.totalorder %s30, 0
      %p99 = por %p97, %p98
      %s101 = sadd.s32 %s100, 1
      %p104 = scmp.eq.s32.totalorder %s24, 1
      %p105 = scmp.ne.s32.totalorder %s100, %s102
      %p106 = scmp.eq.s32.totalorder %s24, 0
      %p107 = por %p105, %p106
      %p108 = scmp.ne.s32.totalorder %s100, %s102
      %p109 = scmp.eq.s32.totalorder %s29, 1
      %p110 = por %p108, %p109
      %p111 = scmp.ne.s32.totalorder %s102, %s103
      %p112 = scmp.eq.s32.totalorder %s29, 0
      %p113 = por %p111, %p112
      %p114 = scmp.ne.s32.totalorder %s102, %s103
      %p115 = scmp.eq.s32.totalorder %s30, 1
      %p116 = por %p114, %p115
      %p118 = scmp.ne.s32.totalorder %s103, %s117
      %p119 = scmp.eq.s32.totalorder %s30, 0
      %p120 = por %p118, %p119
      %s121 = ssub.s32 %s24, %s31
      %p122 = scmp.eq.s32.totalorder %s121, 0
      %s124 = sadd.s32 %s123, 1
      %s125 = scalar_select %p122, %s123, %s124
      %p128 = pneg %p122
      %p129 = scmp.eq.s32.totalorder %s24, 1
      %p130 = por %p128, %p129
      %p131 = scmp.ne.s32.totalorder %s123, %s126
      %p132 = scmp.eq.s32.totalorder %s24, 0
      %p133 = por %p131, %p132
      %p134 = scmp.ne.s32.totalorder %s123, %s126
      %p135 = scmp.eq.s32.totalorder %s29, 1
      %p136 = por %p134, %p135
      %p137 = scmp.ne.s32.totalorder %s126, %s127
      %p138 = scmp.eq.s32.totalorder %s29, 0
      %p139 = por %p137, %p138
      %p140 = scmp.ne.s32.totalorder %s126, %s127
      %p141 = scmp.eq.s32.totalorder %s30, 1
      %p142 = por %p140, %p141
      %p144 = scmp.ne.s32.totalorder %s127, %s143
      %p145 = scmp.eq.s32.totalorder %s30, 0
      %p146 = por %p144, %p145
      %s147 = ssub.s32 %s24, %s31
      %p148 = scmp.eq.s32.totalorder %s147, 0
      %s150 = sadd.s32 %s149, 1
      %s151 = scalar_select %p148, %s149, %s150
      %p154 = pneg %p148
      %p155 = scmp.eq.s32.totalorder %s24, 1
      %p156 = por %p154, %p155
      %p157 = scmp.ne.s32.totalorder %s149, %s152
      %p158 = scmp.eq.s32.totalorder %s24, 0
      %p159 = por %p157, %p158
      %p160 = scmp.ne.s32.totalorder %s149, %s152
      %p161 = scmp.eq.s32.totalorder %s29, 1
      %p162 = por %p160, %p161
      %p163 = scmp.ne.s32.totalorder %s152, %s153
      %p164 = scmp.eq.s32.totalorder %s29, 0
      %p165 = por %p163, %p164
      %p166 = scmp.ne.s32.totalorder %s152, %s153
      %p167 = scmp.eq.s32.totalorder %s30, 1
      %p168 = por %p166, %p167
      %p170 = scmp.ne.s32.totalorder %s153, %s169
      %p171 = scmp.eq.s32.totalorder %s30, 0
      %p172 = por %p170, %p171
      %s173 = ssub.s32 %s24, %s31
      %p174 = scmp.eq.s32.totalorder %s173, 0
      %s176 = sadd.s32 %s175, 1
      %s177 = scalar_select %p174, %s175, %s176
      %p180 = pneg %p174
      %p181 = scmp.eq.s32.totalorder %s24, 1
      %p182 = por %p180, %p181
      %p183 = scmp.ne.s32.totalorder %s175, %s178
      %p184 = scmp.eq.s32.totalorder %s24, 0
      %p185 = por %p183, %p184
      %p186 = scmp.ne.s32.totalorder %s175, %s178
      %p187 = scmp.eq.s32.totalorder %s29, 1
      %p188 = por %p186, %p187
      %p189 = scmp.ne.s32.totalorder %s178, %s179
      %p190 = scmp.eq.s32.totalorder %s29, 0
      %p191 = por %p189, %p190
      %p192 = scmp.ne.s32.totalorder %s178, %s179
      %p193 = scmp.eq.s32.totalorder %s30, 1
      %p194 = por %p192, %p193
      %p196 = scmp.ne.s32.totalorder %s179, %s195
      %p197 = scmp.eq.s32.totalorder %s30, 0
      %p198 = por %p196, %p197
      %p199 = scmp.le.s32.totalorder 1, %s24
      %p200 = scmp.lt.s32.totalorder %s24, 3
      %p201 = pnand %p199, %p200
      %p202 = pneg %p201
      // Predicated region
      $region9: #{bottleneck_pallas.5} parent=5 // pred_check
        _
      $region10: #{bottleneck_pallas.5} parent=5 // pred_check_branch
        %204 = sbr.rel (%p201) target = $region12
      $region11: #{bottleneck_pallas.5} parent=5 // pred_region
        %s205 = ssub.s32 %s24, 1
        // Predicated region
        $region13: #{bottleneck_pallas.5} parent=11 // pred_check
          %p206 = pneg %p71
        $region14: #{bottleneck_pallas.5} parent=11 // pred_check_branch
          %208 = sbr.rel (%p206) target = $region16
        $region15: #{bottleneck_pallas.5} parent=11 // pred_region
          %s210 = ssub.s32 16, 16
          %211 = vsyncadd [#allocation6], %s210
          %s213 = sshll.u32 [#allocation5], 4
          %s214 = int_to_ptr.vmem [resolvable:$true] %s213
          %216 = dma.hbm_to_vmem [thread:$0]  %s1, 16, %s214, [#allocation6]
        $region16: #{bottleneck_pallas.5} parent=11 // pred_fallthru
          _
        // Predicated region
        $region17: #{bottleneck_pallas.5} parent=11 // pred_check
          %p217 = pneg %p92
        $region18: #{bottleneck_pallas.5} parent=11 // pred_check_branch
          %219 = sbr.rel (%p217) target = $region20
        $region19: #{bottleneck_pallas.5} parent=11 // pred_region
          %s221 = ssub.s32 16, 16
          %222 = vsyncadd [#allocation6], %s221
          %s224 = sshll.u32 [#allocation7], 4
          %s225 = int_to_ptr.vmem [resolvable:$true] %s224
          %227 = dma.hbm_to_vmem [thread:$0]  %s2, 16, %s225, [#allocation6]
        $region20: #{bottleneck_pallas.5} parent=11 // pred_fallthru
          _
        // Predicated region
        $region21: #{bottleneck_pallas.5} parent=11 // pred_check
          %p228 = pneg %p113
        $region22: #{bottleneck_pallas.5} parent=11 // pred_check_branch
          %230 = sbr.rel (%p228) target = $region24
        $region23: #{bottleneck_pallas.5} parent=11 // pred_region
          %s232 = ssub.s32 640, 640
          %233 = vsyncadd [#allocation9], %s232
          %s234 = sshll.u32 [#allocation8], 4
          %s235 = int_to_ptr.vmem [resolvable:$true] %s234
          %240 = dma.hbm_to_vmem [thread:$0]  %s3, 640, %s235, [#allocation9], 128, 128, 8
        $region24: #{bottleneck_pallas.5} parent=11 // pred_fallthru
          _
      $region12: #{bottleneck_pallas.5} parent=5 // pred_fallthru
        _
      %p241 = scmp.lt.s32.totalorder %s24, 2
      // Predicated region
      $region25: #{bottleneck_pallas.5} parent=5 // pred_check
        %p242 = pneg %p241
      $region26: #{bottleneck_pallas.5} parent=5 // pred_check_branch
        %244 = sbr.rel (%p242) target = $region28
      $region27: #{bottleneck_pallas.5} parent=5 // pred_region
        // Predicated region
        $region29: #{bottleneck_pallas.5} parent=27 // pred_check
          %p245 = pneg %p44
        $region30: #{bottleneck_pallas.5} parent=27 // pred_check_branch
          %247 = sbr.rel (%p245) target = $region32
        $region31: #{bottleneck_pallas.5} parent=27 // pred_region
          %s248 = sand.u32 %s34, 1
          %s249 = scalar_lea.sflag [#allocation3], %s248
          %s250 = sand.u32 %s34, 1
          %s251 = smul.addr %s250, 64
          %s252 = scalar_lea.vmem [#allocation2], %s251
          %s254 = ssub.s32 1024, 1024
          %255 = vsyncadd %s249, %s254
          %s256 = smul.addr %s24, 8
          %s257 = smul.addr %s256, 128
          %s258 = scalar_lea.hbm %s0, %s257
          %s259 = sshll.u32 %s252, 4
          %s260 = int_to_ptr.vmem [resolvable:$true] %s259
          %265 = dma.hbm_to_vmem [thread:$0]  %s258, 1024, %s260, %s249, 128, 128, 8
        $region32: #{bottleneck_pallas.5} parent=27 // pred_fallthru
          _
      $region28: #{bottleneck_pallas.5} parent=5 // pred_fallthru
        _
      %p266 = scmp.le.s32.totalorder 1, %s24
      %p267 = scmp.lt.s32.totalorder %s24, 3
      %p268 = pnand %p266, %p267
      %p269 = pneg %p268
      // Predicated region
      $region33: #{bottleneck_pallas.5} parent=5 // pred_check
        _
      $region34: #{bottleneck_pallas.5} parent=5 // pred_check_branch
        %271 = sbr.rel (%p268) target = $region36
      $region35: #{bottleneck_pallas.5} parent=5 // pred_region
        %s272 = ssub.s32 %s24, 1
        %s273 = sand.u32 %s37, 1
        %s274 = scalar_lea.sflag [#allocation3], %s273
        %s275 = sand.u32 %s37, 1
        %s276 = smul.addr %s275, 64
        %s277 = scalar_lea.vmem [#allocation2], %s276
        // Predicated region
        $region37: #{bottleneck_pallas.5} parent=35 // pred_check
          %p278 = pneg %p50
        $region38: #{bottleneck_pallas.5} parent=35 // pred_check_branch
          %280 = sbr.rel (%p278) target = $region40
        $region39: #{bottleneck_pallas.5} parent=35 // pred_region
          %281 = dma.done %s274, 1024
        $region40: #{bottleneck_pallas.5} parent=35 // pred_fallthru
          _
        // Predicated region
        $region41: #{bottleneck_pallas.5} parent=35 // pred_check
          %p282 = pneg %p71
        $region42: #{bottleneck_pallas.5} parent=35 // pred_check_branch
          %284 = sbr.rel (%p282) target = $region44
        $region43: #{bottleneck_pallas.5} parent=35 // pred_region
          %285 = dma.done [#allocation6], 16
        $region44: #{bottleneck_pallas.5} parent=35 // pred_fallthru
          _
        // Predicated region
        $region45: #{bottleneck_pallas.5} parent=35 // pred_check
          %p286 = pneg %p92
        $region46: #{bottleneck_pallas.5} parent=35 // pred_check_branch
          %288 = sbr.rel (%p286) target = $region48
        $region47: #{bottleneck_pallas.5} parent=35 // pred_region
          %289 = dma.done [#allocation6], 16
        $region48: #{bottleneck_pallas.5} parent=35 // pred_fallthru
          _
        // Predicated region
        $region49: #{bottleneck_pallas.5} parent=35 // pred_check
          %p290 = pneg %p113
        $region50: #{bottleneck_pallas.5} parent=35 // pred_check_branch
          %292 = sbr.rel (%p290) target = $region52
        $region51: #{bottleneck_pallas.5} parent=35 // pred_region
          %293 = dma.done [#allocation9], 640
        $region52: #{bottleneck_pallas.5} parent=35 // pred_fallthru
          _
        %s294 = sand.u32 %s37, 1
        %s295 = scalar_lea.sflag [#allocation3], %s294
        %s296 = sand.u32 %s37, 1
        %s297 = smul.addr %s296, 64
        %s298 = scalar_lea.vmem [#allocation2], %s297
        %p299 = pneg %p50
        %p300 = pneg %p47
        %p301 = pneg %p71
        %p302 = pneg %p68
        %p303 = pneg %p92
        %p304 = pneg %p89
        %p305 = pneg %p113
        %p306 = pneg %p110
        %p307 = pneg %p139
        %p308 = pneg %p136
        %s309 = sand.u32 %s126, 1
        %s310 = scalar_lea.sflag [#allocation4], %s309
        %s311 = sand.u32 %s126, 1
        %s312 = smul.addr %s311, 64
        %s313 = scalar_lea.vmem [#allocation10], %s312
        %p314 = pneg %p165
        %p315 = pneg %p162
        %s316 = sand.u32 %s29, 1
        %s317 = scalar_lea.sflag [#allocation12], %s316
        %s318 = sand.u32 %s152, 1
        %s319 = scalar_lea.vmem [#allocation11], %s318
        %p320 = pneg %p191
        %p321 = pneg %p188
        %s322 = sand.u32 %s29, 1
        %s323 = scalar_lea.sflag [#allocation12], %s322
        %s324 = sand.u32 %s178, 1
        %s325 = scalar_lea.vmem [#allocation13], %s324
        %v326 = vld [vmem:[%s277] sm:$0xff]
        %v327 = vld [vmem:[%s277 + $0x8] sm:$0xff]
        %v328 = vld [vmem:[%s277 + $0x10] sm:$0xff]
        %v329 = vld [vmem:[%s277 + $0x18] sm:$0xff]
        %v330 = vld [vmem:[%s277 + $0x20] sm:$0xff]
        %v331 = vld [vmem:[%s277 + $0x28] sm:$0xff]
        %v332 = vld [vmem:[%s277 + $0x30] sm:$0xff]
        %v333 = vld [vmem:[%s277 + $0x38] sm:$0xff]
        %v334 = vld [vmem:[#allocation5] sm:$0x1]
        %v336 = vlaneseq
        %v337 = vshrl.u32 %v336, 7
        %v338 = vsub.s32 0, %v337
        %v339 = vrot.slane %v334, %v338
        %v341 = vmul.f32 %v326, %v339
        %v342 = vmul.f32 %v327, %v339
        %v343 = vmul.f32 %v328, %v339
        %v344 = vmul.f32 %v329, %v339
        %v345 = vmul.f32 %v330, %v339
        %v346 = vmul.f32 %v331, %v339
        %v347 = vmul.f32 %v332, %v339
        %v348 = vmul.f32 %v333, %v339
        %v349 = vld [vmem:[#allocation7] sm:$0x1]
        %v351 = vlaneseq
        %v352 = vshrl.u32 %v351, 7
        %v353 = vsub.s32 0, %v352
        %v354 = vrot.slane %v349, %v353
        %v356 = vadd.f32 %v341, %v354
        %v357 = vadd.f32 %v342, %v354
        %v358 = vadd.f32 %v343, %v354
        %v359 = vadd.f32 %v344, %v354
        %v360 = vadd.f32 %v345, %v354
        %v361 = vadd.f32 %v346, %v354
        %v362 = vadd.f32 %v347, %v354
        %v363 = vadd.f32 %v348, %v354
        %v364 = vmax.f32 %v356, 0.0
        %v365 = vmax.f32 %v357, 0.0
        %v366 = vmax.f32 %v358, 0.0
        %v367 = vmax.f32 %v359, 0.0
        %v368 = vmax.f32 %v360, 0.0
        %v369 = vmax.f32 %v361, 0.0
        %v370 = vmax.f32 %v362, 0.0
        %v371 = vmax.f32 %v363, 0.0
        %v380 = vrot.slane 0.0, 7
        %v381 = vrot.slane %v364, 7
        %v382 = vrot.slane %v365, 7
        %v383 = vrot.slane %v366, 7
        %v384 = vrot.slane %v367, 7
        %v385 = vrot.slane %v368, 7
        %v386 = vrot.slane %v369, 7
        %v387 = vrot.slane %v370, 7
        %vm396 = vcmask 1040384
        %v397 = vsel %vm396, 0.0, %v380
        %v398 = vsel %vm396, 0.0, %v381
        %v399 = vsel %vm396, 0.0, %v382
        %v400 = vsel %vm396, 0.0, %v383
        %v401 = vsel %vm396, 0.0, %v384
        %v402 = vsel %vm396, 0.0, %v385
        %v403 = vsel %vm396, 0.0, %v386
        %v404 = vsel %vm396, 0.0, %v387
        %v405 = vrot.slane 0.0, 1
        %v406 = vrot.slane %v364, 1
        %v407 = vrot.slane %v365, 1
        %v408 = vrot.slane %v366, 1
        %v409 = vrot.slane %v367, 1
        %v410 = vrot.slane %v368, 1
        %v411 = vrot.slane %v369, 1
        %v412 = vrot.slane %v370, 1
        %vm421 = vcmask 1046528
        %v422 = vsel %vm421, %v405, 0.0
        %v423 = vsel %vm421, %v406, 0.0
        %v424 = vsel %vm421, %v407, 0.0
        %v425 = vsel %vm421, %v408, 0.0
        %v426 = vsel %vm421, %v409, 0.0
        %v427 = vsel %vm421, %v410, 0.0
        %v428 = vsel %vm421, %v411, 0.0
        %v429 = vsel %vm421, %v412, 0.0
        %v431 = vrot.slane %v371, 7
        %v433 = vsel %vm396, 0.0, %v431
        %v434 = vrot.slane %v371, 1
        %v436 = vsel %vm421, %v434, 0.0
        %437 = vrot.lane.b32.xlu0 0.0, 4
        %v438 = vpop.permute.xlu0 %437
        %439 = vrot.lane.b32.xlu0 %v364, 4
        %v440 = vpop.permute.xlu0 %439
        %441 = vrot.lane.b32.xlu0 %v365, 4
        %v442 = vpop.permute.xlu0 %441
        %443 = vrot.lane.b32.xlu0 %v366, 4
        %v444 = vpop.permute.xlu0 %443
        %445 = vrot.lane.b32.xlu0 %v367, 4
        %v446 = vpop.permute.xlu0 %445
        %447 = vrot.lane.b32.xlu0 %v368, 4
        %v448 = vpop.permute.xlu0 %447
        %449 = vrot.lane.b32.xlu0 %v369, 4
        %v450 = vpop.permute.xlu0 %449
        %451 = vrot.lane.b32.xlu0 %v370, 4
        %v452 = vpop.permute.xlu0 %451
        %469 = vrot.lane.b32.xlu0 %v422, 8
        %v470 = vpop.permute.xlu0 %469
        %471 = vrot.lane.b32.xlu0 %v423, 8
        %v472 = vpop.permute.xlu0 %471
        %473 = vrot.lane.b32.xlu0 %v424, 8
        %v474 = vpop.permute.xlu0 %473
        %475 = vrot.lane.b32.xlu0 %v425, 8
        %v476 = vpop.permute.xlu0 %475
        %477 = vrot.lane.b32.xlu0 %v426, 8
        %v478 = vpop.permute.xlu0 %477
        %479 = vrot.lane.b32.xlu0 %v427, 8
        %v480 = vpop.permute.xlu0 %479
        %481 = vrot.lane.b32.xlu0 %v428, 8
        %v482 = vpop.permute.xlu0 %481
        %483 = vrot.lane.b32.xlu0 %v429, 8
        %v484 = vpop.permute.xlu0 %483
        %501 = vrot.lane.b32.xlu0 %v398, 12
        %v502 = vpop.permute.xlu0 %501
        %503 = vrot.lane.b32.xlu0 %v399, 12
        %v504 = vpop.permute.xlu0 %503
        %505 = vrot.lane.b32.xlu0 %v400, 12
        %v506 = vpop.permute.xlu0 %505
        %507 = vrot.lane.b32.xlu0 %v401, 12
        %v508 = vpop.permute.xlu0 %507
        %509 = vrot.lane.b32.xlu0 %v402, 12
        %v510 = vpop.permute.xlu0 %509
        %511 = vrot.lane.b32.xlu0 %v403, 12
        %v512 = vpop.permute.xlu0 %511
        %513 = vrot.lane.b32.xlu0 %v404, 12
        %v514 = vpop.permute.xlu0 %513
        %515 = vrot.lane.b32.xlu0 %v433, 12
        %v516 = vpop.permute.xlu0 %515
        %525 = vrot.lane.b32.xlu0 %v364, 16
        %v526 = vpop.permute.xlu0 %525
        %527 = vrot.lane.b32.xlu0 %v365, 16
        %v528 = vpop.permute.xlu0 %527
        %529 = vrot.lane.b32.xlu0 %v366, 16
        %v530 = vpop.permute.xlu0 %529
        %531 = vrot.lane.b32.xlu0 %v367, 16
        %v532 = vpop.permute.xlu0 %531
        %533 = vrot.lane.b32.xlu0 %v368, 16
        %v534 = vpop.permute.xlu0 %533
        %535 = vrot.lane.b32.xlu0 %v369, 16
        %v536 = vpop.permute.xlu0 %535
        %537 = vrot.lane.b32.xlu0 %v370, 16
        %v538 = vpop.permute.xlu0 %537
        %539 = vrot.lane.b32.xlu0 %v371, 16
        %v540 = vpop.permute.xlu0 %539
        %550 = vrot.lane.b32.xlu0 %v423, 20
        %v551 = vpop.permute.xlu0 %550
        %552 = vrot.lane.b32.xlu0 %v424, 20
        %v553 = vpop.permute.xlu0 %552
        %554 = vrot.lane.b32.xlu0 %v425, 20
        %v555 = vpop.permute.xlu0 %554
        %556 = vrot.lane.b32.xlu0 %v426, 20
        %v557 = vpop.permute.xlu0 %556
        %558 = vrot.lane.b32.xlu0 %v427, 20
        %v559 = vpop.permute.xlu0 %558
        %560 = vrot.lane.b32.xlu0 %v428, 20
        %v561 = vpop.permute.xlu0 %560
        %562 = vrot.lane.b32.xlu0 %v429, 20
        %v563 = vpop.permute.xlu0 %562
        %564 = vrot.lane.b32.xlu0 %v436, 20
        %v565 = vpop.permute.xlu0 %564
        %575 = vrot.lane.b32.xlu0 %v399, 24
        %v576 = vpop.permute.xlu0 %575
        %577 = vrot.lane.b32.xlu0 %v400, 24
        %v578 = vpop.permute.xlu0 %577
        %579 = vrot.lane.b32.xlu0 %v401, 24
        %v580 = vpop.permute.xlu0 %579
        %581 = vrot.lane.b32.xlu0 %v402, 24
        %v582 = vpop.permute.xlu0 %581
        %583 = vrot.lane.b32.xlu0 %v403, 24
        %v584 = vpop.permute.xlu0 %583
        %585 = vrot.lane.b32.xlu0 %v404, 24
        %v586 = vpop.permute.xlu0 %585
        %587 = vrot.lane.b32.xlu0 %v433, 24
        %v588 = vpop.permute.xlu0 %587
        %589 = vrot.lane.b32.xlu0 %v397, 24
        %v590 = vpop.permute.xlu0 %589
        %599 = vrot.lane.b32.xlu0 %v365, 28
        %v600 = vpop.permute.xlu0 %599
        %601 = vrot.lane.b32.xlu0 %v366, 28
        %v602 = vpop.permute.xlu0 %601
        %603 = vrot.lane.b32.xlu0 %v367, 28
        %v604 = vpop.permute.xlu0 %603
        %605 = vrot.lane.b32.xlu0 %v368, 28
        %v606 = vpop.permute.xlu0 %605
        %607 = vrot.lane.b32.xlu0 %v369, 28
        %v608 = vpop.permute.xlu0 %607
        %609 = vrot.lane.b32.xlu0 %v370, 28
        %v610 = vpop.permute.xlu0 %609
        %611 = vrot.lane.b32.xlu0 %v371, 28
        %v612 = vpop.permute.xlu0 %611
        %613 = vrot.lane.b32.xlu0 0.0, 28
        %v614 = vpop.permute.xlu0 %613
        %623 = vrot.lane.b32.xlu0 %v424, 32
        %v624 = vpop.permute.xlu0 %623
        %625 = vrot.lane.b32.xlu0 %v425, 32
        %v626 = vpop.permute.xlu0 %625
        %627 = vrot.lane.b32.xlu0 %v426, 32
        %v628 = vpop.permute.xlu0 %627
        %629 = vrot.lane.b32.xlu0 %v427, 32
        %v630 = vpop.permute.xlu0 %629
        %631 = vrot.lane.b32.xlu0 %v428, 32
        %v632 = vpop.permute.xlu0 %631
        %633 = vrot.lane.b32.xlu0 %v429, 32
        %v634 = vpop.permute.xlu0 %633
        %635 = vrot.lane.b32.xlu0 %v436, 32
        %v636 = vpop.permute.xlu0 %635
        %637 = vrot.lane.b32.xlu0 %v422, 32
        %v638 = vpop.permute.xlu0 %637
        %vm647 = vcmask 31744
        %v648 = vsel %vm647, %v397, %v438
        %v649 = vsel %vm647, %v398, %v440
        %v650 = vsel %vm647, %v399, %v442
        %v651 = vsel %vm647, %v400, %v444
        %v652 = vsel %vm647, %v401, %v446
        %v653 = vsel %vm647, %v402, %v448
        %v654 = vsel %vm647, %v403, %v450
        %v655 = vsel %vm647, %v404, %v452
        %vm656 = vcmask 64512
        %v657 = vsel %vm656, %v648, %v470
        %v658 = vsel %vm656, %v649, %v472
        %v659 = vsel %vm656, %v650, %v474
        %v660 = vsel %vm656, %v651, %v476
        %v661 = vsel %vm656, %v652, %v478
        %v662 = vsel %vm656, %v653, %v480
        %v663 = vsel %vm656, %v654, %v482
        %v664 = vsel %vm656, %v655, %v484
        %vm665 = vcmask 97280
        %v666 = vsel %vm665, %v657, %v502
        %v667 = vsel %vm665, %v658, %v504
        %v668 = vsel %vm665, %v659, %v506
        %v669 = vsel %vm665, %v660, %v508
        %v670 = vsel %vm665, %v661, %v510
        %v671 = vsel %vm665, %v662, %v512
        %v672 = vsel %vm665, %v663, %v514
        %v673 = vsel %vm665, %v664, %v516
        %vm674 = vcmask 130048
        %v675 = vsel %vm674, %v666, %v526
        %v676 = vsel %vm674, %v667, %v528
        %v677 = vsel %vm674, %v668, %v530
        %v678 = vsel %vm674, %v669, %v532
        %v679 = vsel %vm674, %v670, %v534
        %v680 = vsel %vm674, %v671, %v536
        %v681 = vsel %vm674, %v672, %v538
        %v682 = vsel %vm674, %v673, %v540
        %vm683 = vcmask 162816
        %v684 = vsel %vm683, %v675, %v551
        %v685 = vsel %vm683, %v676, %v553
        %v686 = vsel %vm683, %v677, %v555
        %v687 = vsel %vm683, %v678, %v557
        %v688 = vsel %vm683, %v679, %v559
        %v689 = vsel %vm683, %v680, %v561
        %v690 = vsel %vm683, %v681, %v563
        %v691 = vsel %vm683, %v682, %v565
        %vm692 = vcmask 195584
        %v693 = vsel %vm692, %v684, %v576
        %v694 = vsel %vm692, %v685, %v578
        %v695 = vsel %vm692, %v686, %v580
        %v696 = vsel %vm692, %v687, %v582
        %v697 = vsel %vm692, %v688, %v584
        %v698 = vsel %vm692, %v689, %v586
        %v699 = vsel %vm692, %v690, %v588
        %v700 = vsel %vm692, %v691, %v590
        %vm701 = vcmask 228352
        %v702 = vsel %vm701, %v693, %v600
        %v703 = vsel %vm701, %v694, %v602
        %v704 = vsel %vm701, %v695, %v604
        %v705 = vsel %vm701, %v696, %v606
        %v706 = vsel %vm701, %v697, %v608
        %v707 = vsel %vm701, %v698, %v610
        %v708 = vsel %vm701, %v699, %v612
        %v709 = vsel %vm701, %v700, %v614
        %vm710 = vcmask 261120
        %v711 = vsel %vm710, %v702, %v624
        %v712 = vsel %vm710, %v703, %v626
        %v713 = vsel %vm710, %v704, %v628
        %v714 = vsel %vm710, %v705, %v630
        %v715 = vsel %vm710, %v706, %v632
        %v716 = vsel %vm710, %v707, %v634
        %v717 = vsel %vm710, %v708, %v636
        %v718 = vsel %vm710, %v709, %v638
        %v719 = vld [vmem:[#allocation8] sm:$0xff]
        %v720 = vld [vmem:[#allocation8 + $0x8] sm:$0xff]
        %v721 = vld [vmem:[#allocation8 + $0x10] sm:$0xff]
        %v722 = vld [vmem:[#allocation8 + $0x18] sm:$0xff]
        %v723 = vld [vmem:[#allocation8 + $0x20] sm:$0xf]
        %vm724 = vcmask 293888
        %v726 = vsel %vm724, %v711, 0
        %v729 = vsel %vm724, %v712, 0
        %v732 = vsel %vm724, %v713, 0
        %v735 = vsel %vm724, %v714, 0
        %v738 = vsel %vm724, %v715, 0
        %v741 = vsel %vm724, %v716, 0
        %v744 = vsel %vm724, %v717, 0
        %v747 = vsel %vm724, %v718, 0
        %vm749 = vcmask 1043456
        %v751 = vsel %vm749, %v723, 0
        %753 = vmatprep.subr.mxu0 0.0
        %754 = vmatpush1.msra.mxu0 %v719
        %755 = vmatprep.subr.mxu0 0.0
        %756 = vmatpush1.msra.mxu0 %v720
        %757 = vmatprep.subr.mxu0 0.0
        %758 = vmatpush1.msra.mxu0 %v721
        %759 = vmatprep.subr.mxu0 0.0
        %760 = vmatpush1.msra.mxu0 %v722
        %761 = vmatprep.subr.mxu0 0.0
        %762 = vmatpush1.msra.mxu0 %v751
        %763 = vmatprep.subr.mxu0 0.0
        %764 = vmatpush1.msra.mxu0 0.0
        %765 = vmatprep.subr.mxu0 0.0
        %766 = vmatpush1.msra.mxu0 0.0
        %767 = vmatprep.subr.mxu0 0.0
        %768 = vmatpush1.msra.mxu0 0.0
        %769 = vmatprep.subr.mxu0 0.0
        %770 = vmatpush1.msra.mxu0 0.0
        %771 = vmatprep.subr.mxu0 0.0
        %772 = vmatpush1.msra.mxu0 0.0
        %773 = vmatprep.subr.mxu0 0.0
        %774 = vmatpush1.msra.mxu0 0.0
        %775 = vmatprep.subr.mxu0 0.0
        %776 = vmatpush1.msra.mxu0 0.0
        %777 = vmatprep.subr.mxu0 0.0
        %778 = vmatpush1.msra.mxu0 0.0
        %779 = vmatprep.subr.mxu0 0.0
        %780 = vmatpush1.msra.mxu0 0.0
        %781 = vmatprep.subr.mxu0 0.0
        %782 = vmatpush1.msra.mxu0 0.0
        %783 = vmatprep.subr.mxu0 0.0
        %784 = vmatpush1.msra.mxu0 0.0
        %785 = vmatprep.subr.mxu0 0.0
        %786 = vmatpush1.msra.mxu0 0.0
        %787 = vmatprep.subr.mxu0 0.0
        %788 = vmatpush1.msra.mxu0 0.0
        %789 = vmatprep.subr.mxu0 0.0
        %790 = vmatpush1.msra.mxu0 0.0
        %791 = vmatprep.subr.mxu0 0.0
        %792 = vmatpush1.msra.mxu0 0.0
        %793 = vmatprep.subr.mxu0 0.0
        %794 = vmatpush1.msra.mxu0 0.0
        %795 = vmatprep.subr.mxu0 0.0
        %796 = vmatpush1.msra.mxu0 0.0
        %797 = vmatprep.subr.mxu0 0.0
        %798 = vmatpush1.msra.mxu0 0.0
        %799 = vmatprep.subr.mxu0 0.0
        %800 = vmatpush1.msra.mxu0 0.0
        %801 = vmatprep.subr.mxu0 0.0
        %802 = vmatpush1.msra.mxu0 0.0
        %803 = vmatprep.subr.mxu0 0.0
        %804 = vmatpush1.msra.mxu0 0.0
        %805 = vmatprep.subr.mxu0 0.0
        %806 = vmatpush1.msra.mxu0 0.0
        %807 = vmatprep.subr.mxu0 0.0
        %808 = vmatpush1.msra.mxu0 0.0
        %809 = vmatprep.subr.mxu0 0.0
        %810 = vmatpush1.msra.mxu0 0.0
        %811 = vmatprep.subr.mxu0 0.0
        %812 = vmatpush1.msra.mxu0 0.0
        %813 = vmatprep.subr.mxu0 0.0
        %814 = vmatpush1.msra.mxu0 0.0
        %815 = vmatprep.subr.mxu0 0.0
        %816 = vmatpush1.msra.mxu0 0.0
        %817 = vmatprep.mubr.f32.mxu0 0.0
        %818 = vmatmul.mubr.f32.gmra.mrb[0].mxu0 %v726
        %v819 = vpop.f32.mrb[0].mxu0
        %v820 = vadd.f32 0.0, %v819
        %v821 = vpop.f32.mrb[0].mxu0
        %822 = vmatprep.mubr.f32.mxu0 0.0
        %823 = vmatmul.mubr.f32.gmra.mrb[0].mxu0 %v729
        %v824 = vpop.f32.mrb[0].mxu0
        %v825 = vadd.f32 0.0, %v824
        %v826 = vpop.f32.mrb[0].mxu0
        %827 = vmatprep.mubr.f32.mxu0 0.0
        %828 = vmatmul.mubr.f32.gmra.mrb[0].mxu0 %v732
        %v829 = vpop.f32.mrb[0].mxu0
        %v830 = vadd.f32 0.0, %v829
        %v831 = vpop.f32.mrb[0].mxu0
        %832 = vmatprep.mubr.f32.mxu0 0.0
        %833 = vmatmul.mubr.f32.gmra.mrb[0].mxu0 %v735
        %v834 = vpop.f32.mrb[0].mxu0
        %v835 = vadd.f32 0.0, %v834
        %v836 = vpop.f32.mrb[0].mxu0
        %837 = vmatprep.mubr.f32.mxu0 0.0
        %838 = vmatmul.mubr.f32.gmra.mrb[0].mxu0 %v738
        %v839 = vpop.f32.mrb[0].mxu0
        %v840 = vadd.f32 0.0, %v839
        %v841 = vpop.f32.mrb[0].mxu0
        %842 = vmatprep.mubr.f32.mxu0 0.0
        %843 = vmatmul.mubr.f32.gmra.mrb[0].mxu0 %v741
        %v844 = vpop.f32.mrb[0].mxu0
        %v845 = vadd.f32 0.0, %v844
        %v846 = vpop.f32.mrb[0].mxu0
        %847 = vmatprep.mubr.f32.mxu0 0.0
        %848 = vmatmul.mubr.f32.gmra.mrb[0].mxu0 %v744
        %v849 = vpop.f32.mrb[0].mxu0
        %v850 = vadd.f32 0.0, %v849
        %v851 = vpop.f32.mrb[0].mxu0
        %852 = vmatprep.mubr.f32.mxu0 0.0
        %853 = vmatmul.mubr.f32.gmra.mrb[0].mxu0 %v747
        %v854 = vpop.f32.mrb[0].mxu0
        %v855 = vadd.f32 0.0, %v854
        %v856 = vpop.f32.mrb[0].mxu0
        %857 = vdwg.mxu0
        %858 = vst.msk [vmem:[%s313] sm:$0xff] %vm647, %v820
        %859 = vst.msk [vmem:[%s313 + $0x8] sm:$0xff] %vm647, %v825
        %860 = vst.msk [vmem:[%s313 + $0x10] sm:$0xff] %vm647, %v830
        %861 = vst.msk [vmem:[%s313 + $0x18] sm:$0xff] %vm647, %v835
        %862 = vst.msk [vmem:[%s313 + $0x20] sm:$0xff] %vm647, %v840
        %863 = vst.msk [vmem:[%s313 + $0x28] sm:$0xff] %vm647, %v845
        %864 = vst.msk [vmem:[%s313 + $0x30] sm:$0xff] %vm647, %v850
        %865 = vst.msk [vmem:[%s313 + $0x38] sm:$0xff] %vm647, %v855
        %v866 = vsel %vm647, %v820, 0.0
        %v867 = vsel %vm647, %v825, 0.0
        %v868 = vadd.f32 %v866, %v867
        %v869 = vsel %vm647, %v830, 0.0
        %v870 = vadd.f32 %v868, %v869
        %v871 = vsel %vm647, %v835, 0.0
        %v872 = vadd.f32 %v870, %v871
        %v873 = vsel %vm647, %v840, 0.0
        %v874 = vadd.f32 %v872, %v873
        %v875 = vsel %vm647, %v845, 0.0
        %v876 = vadd.f32 %v874, %v875
        %v877 = vsel %vm647, %v850, 0.0
        %v878 = vadd.f32 %v876, %v877
        %v879 = vsel %vm647, %v855, 0.0
        %v880 = vadd.f32 %v878, %v879
        %v881 = vrot.slane %v880, 4
        %v882 = vadd.f32 %v880, %v881
        %v883 = vrot.slane %v882, 2
        %v884 = vadd.f32 %v882, %v883
        %v885 = vrot.slane %v884, 1
        %v886 = vadd.f32 %v884, %v885
        %vm887 = vcmask 24576
        %888 = vst.msk [vmem:[%s319] sm:$0x1] %vm887, %v886
        %v889 = vmul.f32 %v820, %v820
        %v890 = vmul.f32 %v825, %v825
        %v891 = vmul.f32 %v830, %v830
        %v892 = vmul.f32 %v835, %v835
        %v893 = vmul.f32 %v840, %v840
        %v894 = vmul.f32 %v845, %v845
        %v895 = vmul.f32 %v850, %v850
        %v896 = vmul.f32 %v855, %v855
        %v897 = vsel %vm647, %v889, 0.0
        %v898 = vsel %vm647, %v890, 0.0
        %v899 = vadd.f32 %v897, %v898
        %v900 = vsel %vm647, %v891, 0.0
        %v901 = vadd.f32 %v899, %v900
        %v902 = vsel %vm647, %v892, 0.0
        %v903 = vadd.f32 %v901, %v902
        %v904 = vsel %vm647, %v893, 0.0
        %v905 = vadd.f32 %v903, %v904
        %v906 = vsel %vm647, %v894, 0.0
        %v907 = vadd.f32 %v905, %v906
        %v908 = vsel %vm647, %v895, 0.0
        %v909 = vadd.f32 %v907, %v908
        %v910 = vsel %vm647, %v896, 0.0
        %v911 = vadd.f32 %v909, %v910
        %v912 = vrot.slane %v911, 4
        %v913 = vadd.f32 %v911, %v912
        %v914 = vrot.slane %v913, 2
        %v915 = vadd.f32 %v913, %v914
        %v916 = vrot.slane %v915, 1
        %v917 = vadd.f32 %v915, %v916
        %918 = vst.msk [vmem:[%s325] sm:$0x1] %vm887, %v917
        %s919 = sand.u32 %s126, 1
        %s920 = scalar_lea.sflag [#allocation4], %s919
        %s921 = sand.u32 %s126, 1
        %s922 = smul.addr %s921, 64
        %s923 = scalar_lea.vmem [#allocation10], %s922
        %s924 = sand.u32 %s29, 1
        %s925 = scalar_lea.sflag [#allocation12], %s924
        %s926 = sand.u32 %s152, 1
        %s927 = scalar_lea.vmem [#allocation11], %s926
        %s928 = sand.u32 %s29, 1
        %s929 = scalar_lea.sflag [#allocation12], %s928
        %s930 = sand.u32 %s178, 1
        %s931 = scalar_lea.vmem [#allocation13], %s930
        // Predicated region
        $region53: #{bottleneck_pallas.5} parent=35 // pred_check
          %p932 = pneg %p136
        $region54: #{bottleneck_pallas.5} parent=35 // pred_check_branch
          %934 = sbr.rel (%p932) target = $region56
        $region55: #{bottleneck_pallas.5} parent=35 // pred_region
          %s936 = ssub.s32 1024, 1024
          %937 = vsyncadd %s920, %s936
          %s938 = smul.addr %s29, 8
          %s939 = smul.addr %s938, 128
          %s940 = scalar_lea.hbm %s4, %s939
          %s941 = sshll.u32 %s923, 4
          %s942 = int_to_ptr.vmem [resolvable:$true] %s941
          %947 = dma.vmem_to_hbm [thread:$0]  %s942, 1024, %s940, %s920, 128, 128, 8
        $region56: #{bottleneck_pallas.5} parent=35 // pred_fallthru
          _
        // Predicated region
        $region57: #{bottleneck_pallas.5} parent=35 // pred_check
          %p948 = pneg %p162
        $region58: #{bottleneck_pallas.5} parent=35 // pred_check_branch
          %950 = sbr.rel (%p948) target = $region60
        $region59: #{bottleneck_pallas.5} parent=35 // pred_region
          %s952 = ssub.s32 16, 16
          %953 = vsyncadd %s925, %s952
          %s954 = smul.addr %s29, 16
          %s955 = scalar_lea.hbm %s5, %s954
          %s957 = sshll.u32 %s927, 4
          %s958 = int_to_ptr.vmem [resolvable:$true] %s957
          %960 = dma.vmem_to_hbm [thread:$0]  %s958, 16, %s955, %s925
        $region60: #{bottleneck_pallas.5} parent=35 // pred_fallthru
          _
        // Predicated region
        $region61: #{bottleneck_pallas.5} parent=35 // pred_check
          %p961 = pneg %p188
        $region62: #{bottleneck_pallas.5} parent=35 // pred_check_branch
          %963 = sbr.rel (%p961) target = $region64
        $region63: #{bottleneck_pallas.5} parent=35 // pred_region
          %s965 = ssub.s32 16, 16
          %966 = vsyncadd %s929, %s965
          %s967 = smul.addr %s29, 16
          %s968 = scalar_lea.hbm %s6, %s967
          %s970 = sshll.u32 %s931, 4
          %s971 = int_to_ptr.vmem [resolvable:$true] %s970
          %973 = dma.vmem_to_hbm [thread:$0]  %s971, 16, %s968, %s929
        $region64: #{bottleneck_pallas.5} parent=35 // pred_fallthru
          _
      $region36: #{bottleneck_pallas.5} parent=5 // pred_fallthru
        _
      %p974 = scmp.le.s32.totalorder 2, %s24
      // Predicated region
      $region65: #{bottleneck_pallas.5} parent=5 // pred_check
        %p975 = pneg %p974
      $region66: #{bottleneck_pallas.5} parent=5 // pred_check_branch
        %977 = sbr.rel (%p975) target = $region68
      $region67: #{bottleneck_pallas.5} parent=5 // pred_region
        %s978 = ssub.s32 %s24, 2
        // Predicated region
        $region69: #{bottleneck_pallas.5} parent=67 // pred_check
          %p979 = pneg %p142
        $region70: #{bottleneck_pallas.5} parent=67 // pred_check_branch
          %981 = sbr.rel (%p979) target = $region72
        $region71: #{bottleneck_pallas.5} parent=67 // pred_region
          %s982 = sand.u32 %s127, 1
          %s983 = scalar_lea.sflag [#allocation4], %s982
          %s984 = sand.u32 %s127, 1
          %s985 = smul.addr %s984, 64
          %s986 = scalar_lea.vmem [#allocation10], %s985
          %987 = dma.done %s983, 1024
        $region72: #{bottleneck_pallas.5} parent=67 // pred_fallthru
          _
        // Predicated region
        $region73: #{bottleneck_pallas.5} parent=67 // pred_check
          %p988 = pneg %p168
        $region74: #{bottleneck_pallas.5} parent=67 // pred_check_branch
          %990 = sbr.rel (%p988) target = $region76
        $region75: #{bottleneck_pallas.5} parent=67 // pred_region
          %s991 = sand.u32 %s30, 1
          %s992 = scalar_lea.sflag [#allocation12], %s991
          %s993 = sand.u32 %s153, 1
          %s994 = scalar_lea.vmem [#allocation11], %s993
          %995 = dma.done %s992, 16
        $region76: #{bottleneck_pallas.5} parent=67 // pred_fallthru
          _
        // Predicated region
        $region77: #{bottleneck_pallas.5} parent=67 // pred_check
          %p996 = pneg %p194
        $region78: #{bottleneck_pallas.5} parent=67 // pred_check_branch
          %998 = sbr.rel (%p996) target = $region80
        $region79: #{bottleneck_pallas.5} parent=67 // pred_region
          %s999 = sand.u32 %s30, 1
          %s1000 = scalar_lea.sflag [#allocation12], %s999
          %s1001 = sand.u32 %s179, 1
          %s1002 = scalar_lea.vmem [#allocation13], %s1001
          %1003 = dma.done %s1000, 16
        $region80: #{bottleneck_pallas.5} parent=67 // pred_fallthru
          _
      $region68: #{bottleneck_pallas.5} parent=5 // pred_fallthru
        _
    $region6: #{bottleneck_pallas.5} parent=1 // loop_footer
      %s28 = sadd.s32 1, %s24
    $region7: #{bottleneck_pallas.5} parent=1 // loop_footer_branch
      %23 = sbr.rel target = $region3
    $region8: #{bottleneck_pallas.5} parent=1 // loop_exit
      _
    %1004 = vsyncpa [#allocation3], 1
    %s1005 = scalar_lea.sflag [#allocation3], 1
    %1006 = vsyncpa %s1005, 1
    %1007 = vsyncpa [#allocation6], 1
    %1008 = vsyncpa [#allocation9], 1
    %1009 = vsyncpa [#allocation4], 1
    %s1010 = scalar_lea.sflag [#allocation4], 1
    %1011 = vsyncpa %s1010, 1
    %1012 = vsyncpa [#allocation12], 1
    %s1013 = scalar_lea.sflag [#allocation12], 1
    %1014 = vsyncpa %s1013, 1

// kernel: bottleneck_pallas.7
$region0: #{bottleneck_pallas.7}
  #allocation0 [shape = 'u32[]', space=smem, size = 0x4, offset = 0x4, fixed_abs, tag = 'smem constant byte address 0x4 - core index']
  #allocation1 [shape = 'u32[144,128]{1,0:T(1,128)}', space=vmem, size = 0x12000, scoped, tag = 'internal scratch']
  %s0 = inlined_call_operand.hbm [shape: f32[2,16,64], index: 0, kind: input, shape index: {}]
  %s1 = inlined_call_operand.hbm [shape: f32[16,1], index: 1, kind: input, shape index: {}]
  %s2 = inlined_call_operand.hbm [shape: f32[16,1], index: 2, kind: input, shape index: {}]
  %s3 = inlined_call_operand.hbm [shape: f32[2,16,64], index: 3, kind: input, shape index: {}]
  %s4 = inlined_call_operand.hbm [shape: f32[2,16,64], index: 4, kind: output, shape index: {}]
  %s5 = sld [smem:[#allocation0]]
  $region65: #{bottleneck_pallas.7} parent=0
    _
  %s7 = ssub.s32 1, %s5
  %s8 = scalar_select 0, %s7, %s5
  $region1: #{bottleneck_pallas.7} parent=0
    #allocation2 [shape = 'u8[16384]{0}', space=vmem, size = 0x4000, scoped, tag = 'input window, operand 0']
    #allocation3 [shape = 's32[2]{0}', space=sflag, size = 0x8, scoped, tag = 'scoped memory for bottleneck_pallas.7']
    #allocation4 [shape = 's32[2]{0}', space=sflag, size = 0x8, scoped, tag = 'scoped memory for bottleneck_pallas.7']
    #allocation5 [shape = 'u8[8192]{0}', space=vmem, size = 0x2000, scoped, tag = 'input window, operand 1, single buffered']
    #allocation6 [shape = 's32[1]{0}', space=sflag, size = 0x4, scoped, tag = 'scoped memory for bottleneck_pallas.7']
    #allocation7 [shape = 'u8[8192]{0}', space=vmem, size = 0x2000, scoped, tag = 'input window, operand 2, single buffered']
    #allocation8 [shape = 'u8[16384]{0}', space=vmem, size = 0x4000, scoped, tag = 'input window, operand 3']
    #allocation9 [shape = 's32[2]{0}', space=sflag, size = 0x8, scoped, tag = 'scoped memory for bottleneck_pallas.7']
    #allocation10 [shape = 'u8[16384]{0}', space=vmem, size = 0x4000, scoped, tag = 'output window, operand 0']
    %9 = vsyncpa [#allocation3], 0
    %s10 = scalar_lea.sflag [#allocation3], 1
    %11 = vsyncpa %s10, 0
    %12 = vsyncpa [#allocation6], 0
    %13 = vsyncpa [#allocation9], 0
    %s14 = scalar_lea.sflag [#allocation9], 1
    %15 = vsyncpa %s14, 0
    %16 = vsyncpa [#allocation4], 0
    %s17 = scalar_lea.sflag [#allocation4], 1
    %18 = vsyncpa %s17, 0
    loop: start=0, step=1, limit=4
    $region2: #{bottleneck_pallas.7} parent=1 // loop_pre_header
      _
    $region3: #{bottleneck_pallas.7} parent=1 // loop_header
      %s20 = sphi 0, %s24
      %p21 = scmp.ge.s32.totalorder %s20, 4
      %s27 = sphi 0, %s39
      %s28 = sphi 0, %s35
      %s29 = sphi 0, %s27
      %s30 = sphi 0, %s28
      %s31 = sphi 0, %s29
      %s32 = sphi 0, %s30
      %s44 = sphi 0, %s46
      %s47 = sphi 0, %s44
      %s48 = sphi 0, %s47
      %s64 = sphi 0, %s48
      %s68 = sphi 0, %s68
      %s70 = sphi 0, %s68
      %s71 = sphi 0, %s70
      %s85 = sphi 0, %s71
      %s89 = sphi 0, %s89
      %s91 = sphi 0, %s89
      %s92 = sphi 0, %s91
      %s106 = sphi 0, %s92
      %s114 = sphi 0, %s116
      %s117 = sphi 0, %s114
      %s118 = sphi 0, %s117
      %s134 = sphi 0, %s118
      %s142 = sphi 0, %s144
      %s145 = sphi 0, %s142
      %s146 = sphi 0, %s145
      %s162 = sphi 0, %s146
    $region4: #{bottleneck_pallas.7} parent=1 // loop_header_branch
      %23 = sbr.rel (%p21) target = $region8
    $region5: #{bottleneck_pallas.7} parent=1 // loop_body
      %s25 = ssub.s32 %s20, 1
      %s26 = ssub.s32 %s20, 2
      %s33 = sadd.s32 1, %s28
      %p34 = scmp.ge.s32.totalorder %s33, 1
      %s35 = scalar_select %p34, 0, %s33
      %s36 = sadd.s32 1, %s27
      %s37 = scalar_select %p34, %s36, %s27
      %p38 = scmp.ge.s32.totalorder %s37, 2
      %s39 = scalar_select %p38, 0, %s37
      %s40 = ssub.s32 %s27, %s39
      %s41 = ssub.s32 %s28, %s35
      %s42 = sor.u32 %s40, %s41
      %p43 = scmp.eq.s32.totalorder %s42, 0
      %s45 = sadd.s32 %s44, 1
      %s46 = scalar_select %p43, %s44, %s45
      %p49 = pneg %p43
      %p50 = scmp.eq.s32.totalorder %s20, 1
      %p51 = por %p49, %p50
      %p52 = scmp.ne.s32.totalorder %s44, %s47
      %p53 = scmp.eq.s32.totalorder %s20, 0
      %p54 = por %p52, %p53
      %p55 = scmp.ne.s32.totalorder %s44, %s47
      %p56 = scmp.eq.s32.totalorder %s25, 1
      %p57 = por %p55, %p56
      %p58 = scmp.ne.s32.totalorder %s47, %s48
      %p59 = scmp.eq.s32.totalorder %s25, 0
      %p60 = por %p58, %p59
      %p61 = scmp.ne.s32.totalorder %s47, %s48
      %p62 = scmp.eq.s32.totalorder %s26, 1
      %p63 = por %p61, %p62
      %p65 = scmp.ne.s32.totalorder %s48, %s64
      %p66 = scmp.eq.s32.totalorder %s26, 0
      %p67 = por %p65, %p66
      %s69 = sadd.s32 %s68, 1
      %p72 = scmp.eq.s32.totalorder %s20, 1
      %p73 = scmp.ne.s32.totalorder %s68, %s70
      %p74 = scmp.eq.s32.totalorder %s20, 0
      %p75 = por %p73, %p74
      %p76 = scmp.ne.s32.totalorder %s68, %s70
      %p77 = scmp.eq.s32.totalorder %s25, 1
      %p78 = por %p76, %p77
      %p79 = scmp.ne.s32.totalorder %s70, %s71
      %p80 = scmp.eq.s32.totalorder %s25, 0
      %p81 = por %p79, %p80
      %p82 = scmp.ne.s32.totalorder %s70, %s71
      %p83 = scmp.eq.s32.totalorder %s26, 1
      %p84 = por %p82, %p83
      %p86 = scmp.ne.s32.totalorder %s71, %s85
      %p87 = scmp.eq.s32.totalorder %s26, 0
      %p88 = por %p86, %p87
      %s90 = sadd.s32 %s89, 1
      %p93 = scmp.eq.s32.totalorder %s20, 1
      %p94 = scmp.ne.s32.totalorder %s89, %s91
      %p95 = scmp.eq.s32.totalorder %s20, 0
      %p96 = por %p94, %p95
      %p97 = scmp.ne.s32.totalorder %s89, %s91
      %p98 = scmp.eq.s32.totalorder %s25, 1
      %p99 = por %p97, %p98
      %p100 = scmp.ne.s32.totalorder %s91, %s92
      %p101 = scmp.eq.s32.totalorder %s25, 0
      %p102 = por %p100, %p101
      %p103 = scmp.ne.s32.totalorder %s91, %s92
      %p104 = scmp.eq.s32.totalorder %s26, 1
      %p105 = por %p103, %p104
      %p107 = scmp.ne.s32.totalorder %s92, %s106
      %p108 = scmp.eq.s32.totalorder %s26, 0
      %p109 = por %p107, %p108
      %s110 = ssub.s32 %s27, %s39
      %s111 = ssub.s32 %s28, %s35
      %s112 = sor.u32 %s110, %s111
      %p113 = scmp.eq.s32.totalorder %s112, 0
      %s115 = sadd.s32 %s114, 1
      %s116 = scalar_select %p113, %s114, %s115
      %p119 = pneg %p113
      %p120 = scmp.eq.s32.totalorder %s20, 1
      %p121 = por %p119, %p120
      %p122 = scmp.ne.s32.totalorder %s114, %s117
      %p123 = scmp.eq.s32.totalorder %s20, 0
      %p124 = por %p122, %p123
      %p125 = scmp.ne.s32.totalorder %s114, %s117
      %p126 = scmp.eq.s32.totalorder %s25, 1
      %p127 = por %p125, %p126
      %p128 = scmp.ne.s32.totalorder %s117, %s118
      %p129 = scmp.eq.s32.totalorder %s25, 0
      %p130 = por %p128, %p129
      %p131 = scmp.ne.s32.totalorder %s117, %s118
      %p132 = scmp.eq.s32.totalorder %s26, 1
      %p133 = por %p131, %p132
      %p135 = scmp.ne.s32.totalorder %s118, %s134
      %p136 = scmp.eq.s32.totalorder %s26, 0
      %p137 = por %p135, %p136
      %s138 = ssub.s32 %s27, %s39
      %s139 = ssub.s32 %s28, %s35
      %s140 = sor.u32 %s138, %s139
      %p141 = scmp.eq.s32.totalorder %s140, 0
      %s143 = sadd.s32 %s142, 1
      %s144 = scalar_select %p141, %s142, %s143
      %p147 = pneg %p141
      %p148 = scmp.eq.s32.totalorder %s20, 1
      %p149 = por %p147, %p148
      %p150 = scmp.ne.s32.totalorder %s142, %s145
      %p151 = scmp.eq.s32.totalorder %s20, 0
      %p152 = por %p150, %p151
      %p153 = scmp.ne.s32.totalorder %s142, %s145
      %p154 = scmp.eq.s32.totalorder %s25, 1
      %p155 = por %p153, %p154
      %p156 = scmp.ne.s32.totalorder %s145, %s146
      %p157 = scmp.eq.s32.totalorder %s25, 0
      %p158 = por %p156, %p157
      %p159 = scmp.ne.s32.totalorder %s145, %s146
      %p160 = scmp.eq.s32.totalorder %s26, 1
      %p161 = por %p159, %p160
      %p163 = scmp.ne.s32.totalorder %s146, %s162
      %p164 = scmp.eq.s32.totalorder %s26, 0
      %p165 = por %p163, %p164
      %p166 = scmp.le.s32.totalorder 1, %s20
      %p167 = scmp.lt.s32.totalorder %s20, 3
      %p168 = pnand %p166, %p167
      %p169 = pneg %p168
      // Predicated region
      $region9: #{bottleneck_pallas.7} parent=5 // pred_check
        _
      $region10: #{bottleneck_pallas.7} parent=5 // pred_check_branch
        %171 = sbr.rel (%p168) target = $region12
      $region11: #{bottleneck_pallas.7} parent=5 // pred_region
        %s172 = ssub.s32 %s20, 1
        // Predicated region
        $region13: #{bottleneck_pallas.7} parent=11 // pred_check
          %p173 = pneg %p81
        $region14: #{bottleneck_pallas.7} parent=11 // pred_check_branch
          %175 = sbr.rel (%p173) target = $region16
        $region15: #{bottleneck_pallas.7} parent=11 // pred_region
          %s177 = ssub.s32 256, 256
          %178 = vsyncadd [#allocation6], %s177
          %s179 = sshll.u32 [#allocation5], 4
          %s180 = int_to_ptr.vmem [resolvable:$true] %s179
          %185 = dma.hbm_to_vmem [thread:$0]  %s1, 256, %s180, [#allocation6], 128, 128, 8
        $region16: #{bottleneck_pallas.7} parent=11 // pred_fallthru
          _
        // Predicated region
        $region17: #{bottleneck_pallas.7} parent=11 // pred_check
          %p186 = pneg %p102
        $region18: #{bottleneck_pallas.7} parent=11 // pred_check_branch
          %188 = sbr.rel (%p186) target = $region20
        $region19: #{bottleneck_pallas.7} parent=11 // pred_region
          %s190 = ssub.s32 256, 256
          %191 = vsyncadd [#allocation6], %s190
          %s192 = sshll.u32 [#allocation7], 4
          %s193 = int_to_ptr.vmem [resolvable:$true] %s192
          %198 = dma.hbm_to_vmem [thread:$0]  %s2, 256, %s193, [#allocation6], 128, 128, 8
        $region20: #{bottleneck_pallas.7} parent=11 // pred_fallthru
          _
      $region12: #{bottleneck_pallas.7} parent=5 // pred_fallthru
        _
      %p199 = scmp.lt.s32.totalorder %s20, 2
      // Predicated region
      $region21: #{bottleneck_pallas.7} parent=5 // pred_check
        %p200 = pneg %p199
      $region22: #{bottleneck_pallas.7} parent=5 // pred_check_branch
        %202 = sbr.rel (%p200) target = $region24
      $region23: #{bottleneck_pallas.7} parent=5 // pred_region
        // Predicated region
        $region25: #{bottleneck_pallas.7} parent=23 // pred_check
          %p203 = pneg %p54
        $region26: #{bottleneck_pallas.7} parent=23 // pred_check_branch
          %205 = sbr.rel (%p203) target = $region28
        $region27: #{bottleneck_pallas.7} parent=23 // pred_region
          %s206 = sand.u32 %s44, 1
          %s207 = scalar_lea.sflag [#allocation3], %s206
          %s208 = sand.u32 %s44, 1
          %s209 = smul.addr %s208, 16
          %s210 = scalar_lea.vmem [#allocation2], %s209
          %s212 = ssub.s32 256, 256
          %213 = vsyncadd %s207, %s212
          %s214 = smul.addr %s27, 2
          %s215 = sadd.s32 %s28, %s214
          %s216 = smul.addr %s215, 128
          %s217 = scalar_lea.hbm %s0, %s216
          %s218 = sshll.u32 %s210, 4
          %s219 = int_to_ptr.vmem [resolvable:$true] %s218
          %224 = dma.hbm_to_vmem [thread:$0]  %s217, 256, %s219, %s207, 128, 128, 8
        $region28: #{bottleneck_pallas.7} parent=23 // pred_fallthru
          _
        // Predicated region
        $region29: #{bottleneck_pallas.7} parent=23 // pred_check
          %p225 = pneg %p124
        $region30: #{bottleneck_pallas.7} parent=23 // pred_check_branch
          %227 = sbr.rel (%p225) target = $region32
        $region31: #{bottleneck_pallas.7} parent=23 // pred_region
          %s228 = sand.u32 %s114, 1
          %s229 = scalar_lea.sflag [#allocation9], %s228
          %s230 = sand.u32 %s114, 1
          %s231 = smul.addr %s230, 16
          %s232 = scalar_lea.vmem [#allocation8], %s231
          %s234 = ssub.s32 256, 256
          %235 = vsyncadd %s229, %s234
          %s236 = smul.addr %s27, 2
          %s237 = sadd.s32 %s28, %s236
          %s238 = smul.addr %s237, 128
          %s239 = scalar_lea.hbm %s3, %s238
          %s240 = sshll.u32 %s232, 4
          %s241 = int_to_ptr.vmem [resolvable:$true] %s240
          %246 = dma.hbm_to_vmem [thread:$0]  %s239, 256, %s241, %s229, 128, 128, 8
        $region32: #{bottleneck_pallas.7} parent=23 // pred_fallthru
          _
      $region24: #{bottleneck_pallas.7} parent=5 // pred_fallthru
        _
      %p247 = scmp.le.s32.totalorder 1, %s20
      %p248 = scmp.lt.s32.totalorder %s20, 3
      %p249 = pnand %p247, %p248
      %p250 = pneg %p249
      // Predicated region
      $region33: #{bottleneck_pallas.7} parent=5 // pred_check
        _
      $region34: #{bottleneck_pallas.7} parent=5 // pred_check_branch
        %252 = sbr.rel (%p249) target = $region36
      $region35: #{bottleneck_pallas.7} parent=5 // pred_region
        %s253 = ssub.s32 %s20, 1
        %s254 = sand.u32 %s47, 1
        %s255 = scalar_lea.sflag [#allocation3], %s254
        %s256 = sand.u32 %s47, 1
        %s257 = smul.addr %s256, 16
        %s258 = scalar_lea.vmem [#allocation2], %s257
        // Predicated region
        $region37: #{bottleneck_pallas.7} parent=35 // pred_check
          %p259 = pneg %p60
        $region38: #{bottleneck_pallas.7} parent=35 // pred_check_branch
          %261 = sbr.rel (%p259) target = $region40
        $region39: #{bottleneck_pallas.7} parent=35 // pred_region
          %262 = dma.done %s255, 256
        $region40: #{bottleneck_pallas.7} parent=35 // pred_fallthru
          _
        // Predicated region
        $region41: #{bottleneck_pallas.7} parent=35 // pred_check
          %p263 = pneg %p81
        $region42: #{bottleneck_pallas.7} parent=35 // pred_check_branch
          %265 = sbr.rel (%p263) target = $region44
        $region43: #{bottleneck_pallas.7} parent=35 // pred_region
          %266 = dma.done [#allocation6], 256
        $region44: #{bottleneck_pallas.7} parent=35 // pred_fallthru
          _
        // Predicated region
        $region45: #{bottleneck_pallas.7} parent=35 // pred_check
          %p267 = pneg %p102
        $region46: #{bottleneck_pallas.7} parent=35 // pred_check_branch
          %269 = sbr.rel (%p267) target = $region48
        $region47: #{bottleneck_pallas.7} parent=35 // pred_region
          %270 = dma.done [#allocation6], 256
        $region48: #{bottleneck_pallas.7} parent=35 // pred_fallthru
          _
        %s271 = sand.u32 %s117, 1
        %s272 = scalar_lea.sflag [#allocation9], %s271
        %s273 = sand.u32 %s117, 1
        %s274 = smul.addr %s273, 16
        %s275 = scalar_lea.vmem [#allocation8], %s274
        // Predicated region
        $region49: #{bottleneck_pallas.7} parent=35 // pred_check
          %p276 = pneg %p130
        $region50: #{bottleneck_pallas.7} parent=35 // pred_check_branch
          %278 = sbr.rel (%p276) target = $region52
        $region51: #{bottleneck_pallas.7} parent=35 // pred_region
          %279 = dma.done %s272, 256
        $region52: #{bottleneck_pallas.7} parent=35 // pred_fallthru
          _
        %s280 = sand.u32 %s47, 1
        %s281 = scalar_lea.sflag [#allocation3], %s280
        %s282 = sand.u32 %s47, 1
        %s283 = smul.addr %s282, 16
        %s284 = scalar_lea.vmem [#allocation2], %s283
        %p285 = pneg %p60
        %p286 = pneg %p57
        %p287 = pneg %p81
        %p288 = pneg %p78
        %p289 = pneg %p102
        %p290 = pneg %p99
        %s291 = sand.u32 %s117, 1
        %s292 = scalar_lea.sflag [#allocation9], %s291
        %s293 = sand.u32 %s117, 1
        %s294 = smul.addr %s293, 16
        %s295 = scalar_lea.vmem [#allocation8], %s294
        %p296 = pneg %p130
        %p297 = pneg %p127
        %p298 = pneg %p158
        %p299 = pneg %p155
        %s300 = sand.u32 %s145, 1
        %s301 = scalar_lea.sflag [#allocation4], %s300
        %s302 = sand.u32 %s145, 1
        %s303 = smul.addr %s302, 16
        %s304 = scalar_lea.vmem [#allocation10], %s303
        %v305 = vld [vmem:[%s258] sm:$0xff]
        %v306 = vld [vmem:[%s258 + $0x8] sm:$0xff]
        %v307 = vld [vmem:[#allocation5] sm:$0xff]
        %v308 = vld [vmem:[#allocation5 + $0x8] sm:$0xff]
        %310 = vset.pattern.permute.xlu0 0
        %311 = vperm.xlu0 %310, %v307
        %v312 = vpop.permute.xlu0 %311
        %315 = vset.pattern.permute.xlu0 0
        %316 = vperm.xlu0 %315, %v308
        %v317 = vpop.permute.xlu0 %316
        %v319 = vmul.f32 %v305, %v312
        %v320 = vmul.f32 %v306, %v317
        %v321 = vld [vmem:[#allocation7] sm:$0xff]
        %v322 = vld [vmem:[#allocation7 + $0x8] sm:$0xff]
        %324 = vset.pattern.permute.xlu0 0
        %325 = vperm.xlu0 %324, %v321
        %v326 = vpop.permute.xlu0 %325
        %329 = vset.pattern.permute.xlu0 0
        %330 = vperm.xlu0 %329, %v322
        %v331 = vpop.permute.xlu0 %330
        %v333 = vadd.f32 %v319, %v326
        %v334 = vadd.f32 %v320, %v331
        %v335 = vld [vmem:[%s275] sm:$0xff]
        %v336 = vld [vmem:[%s275 + $0x8] sm:$0xff]
        %v337 = vadd.f32 %v333, %v335
        %v338 = vadd.f32 %v334, %v336
        %v339 = vmax.f32 %v337, 0.0
        %v340 = vmax.f32 %v338, 0.0
        %vm341 = vcmask 523264
        %342 = vst.msk [vmem:[%s304] sm:$0xff] %vm341, %v339
        %343 = vst.msk [vmem:[%s304 + $0x8] sm:$0xff] %vm341, %v340
        %s344 = sand.u32 %s145, 1
        %s345 = scalar_lea.sflag [#allocation4], %s344
        %s346 = sand.u32 %s145, 1
        %s347 = smul.addr %s346, 16
        %s348 = scalar_lea.vmem [#allocation10], %s347
        // Predicated region
        $region53: #{bottleneck_pallas.7} parent=35 // pred_check
          %p349 = pneg %p155
        $region54: #{bottleneck_pallas.7} parent=35 // pred_check_branch
          %351 = sbr.rel (%p349) target = $region56
        $region55: #{bottleneck_pallas.7} parent=35 // pred_region
          %s353 = ssub.s32 256, 256
          %354 = vsyncadd %s345, %s353
          %s355 = smul.addr %s29, 2
          %s356 = sadd.s32 %s30, %s355
          %s357 = smul.addr %s356, 128
          %s358 = scalar_lea.hbm %s4, %s357
          %s359 = sshll.u32 %s348, 4
          %s360 = int_to_ptr.vmem [resolvable:$true] %s359
          %365 = dma.vmem_to_hbm [thread:$0]  %s360, 256, %s358, %s345, 128, 128, 8
        $region56: #{bottleneck_pallas.7} parent=35 // pred_fallthru
          _
      $region36: #{bottleneck_pallas.7} parent=5 // pred_fallthru
        _
      %p366 = scmp.le.s32.totalorder 2, %s20
      // Predicated region
      $region57: #{bottleneck_pallas.7} parent=5 // pred_check
        %p367 = pneg %p366
      $region58: #{bottleneck_pallas.7} parent=5 // pred_check_branch
        %369 = sbr.rel (%p367) target = $region60
      $region59: #{bottleneck_pallas.7} parent=5 // pred_region
        %s370 = ssub.s32 %s20, 2
        // Predicated region
        $region61: #{bottleneck_pallas.7} parent=59 // pred_check
          %p371 = pneg %p161
        $region62: #{bottleneck_pallas.7} parent=59 // pred_check_branch
          %373 = sbr.rel (%p371) target = $region64
        $region63: #{bottleneck_pallas.7} parent=59 // pred_region
          %s374 = sand.u32 %s146, 1
          %s375 = scalar_lea.sflag [#allocation4], %s374
          %s376 = sand.u32 %s146, 1
          %s377 = smul.addr %s376, 16
          %s378 = scalar_lea.vmem [#allocation10], %s377
          %379 = dma.done %s375, 256
        $region64: #{bottleneck_pallas.7} parent=59 // pred_fallthru
          _
      $region60: #{bottleneck_pallas.7} parent=5 // pred_fallthru
        _
    $region6: #{bottleneck_pallas.7} parent=1 // loop_footer
      %s24 = sadd.s32 1, %s20
    $region7: #{bottleneck_pallas.7} parent=1 // loop_footer_branch
      %19 = sbr.rel target = $region3
    $region8: #{bottleneck_pallas.7} parent=1 // loop_exit
      _
    %380 = vsyncpa [#allocation3], 1
    %s381 = scalar_lea.sflag [#allocation3], 1
    %382 = vsyncpa %s381, 1
    %383 = vsyncpa [#allocation6], 1
    %384 = vsyncpa [#allocation9], 1
    %s385 = scalar_lea.sflag [#allocation9], 1
    %386 = vsyncpa %s385, 1
    %387 = vsyncpa [#allocation4], 1
    %s388 = scalar_lea.sflag [#allocation4], 1
    %389 = vsyncpa %s388, 1

</llo_original>
